<compile_context>
chip_gen: v7x
topology: tpu7x:2x2x1
jax: 0.10.0
libtpu: 0.0.40
codegen_flags: <defaults>
</compile_context>

<pallas_src>
import functools

import jax
import jax.numpy as jnp
from jax.experimental import pallas as pl
from jax.experimental.pallas import tpu as pltpu

COMPUTE_DTYPE = jnp.bfloat16   # HBM-bound net: bf16 activations/weights on all gens
ACC_DTYPE = jnp.float32        # MXU accumulation + all VPU math in f32
NEG_BIG = -1e30                # finite "-inf": safe in bf16, never NaN-poisons math


# ----------------------------- kernel helpers ------------------------------

def _taps_accumulate(x_ref, w_ref, co, wf, length):
    """Fused im2col + GEMM: sum_k W_k(co,ci) @ X[:, s_k : s_k+length] -> (co, length) f32.

    The nine statically shifted reads of the flat (ci, frame) activation ARE
    the im2col: shift s_k = dy*wf + dx addresses input pixel (h+dy, w+dx) for
    output pixel (h, w) laid out flat as h*wf + w.
    """
    acc = jnp.zeros((co, length), ACC_DTYPE)
    for k in range(9):
        dy, dx = divmod(k, 3)
        xs = x_ref[:, pl.ds(dy * wf + dx, length)]            # (ci, length), lane-dense
        acc = acc + jnp.dot(w_ref[k], xs, preferred_element_type=ACC_DTYPE)
    return acc


def _prelu(y, slope):
    return jnp.where(y > 0, y, y * slope)                     # per-channel, f32


# ------------------------------ Pallas kernels -----------------------------

def _conv1_prelu_poolmax_kernel(x_ref, w_ref, b_ref, s_ref, mb_ref, o_ref, *,
                                wf, lin, la):
    # x: (3, lin+3*wf+3)  w: (9,10,3)  b,s: (10,1) f32  mb: (1,la) f32
    # o: (10, lin) = per-pixel max of the 2x2 pool window (not yet decimated)
    y = _taps_accumulate(x_ref, w_ref, 10, wf, la) + b_ref[...]
    y = _prelu(y, s_ref[...]) + mb_ref[...]        # -1e30 outside valid conv1 frame
    m = jnp.maximum(jnp.maximum(y[:, 0:lin], y[:, 1:lin + 1]),
                    jnp.maximum(y[:, wf:wf + lin], y[:, wf + 1:wf + 1 + lin]))
    o_ref[...] = m.astype(o_ref.dtype)


def _conv_prelu_kernel(x_ref, w_ref, b_ref, s_ref, o_ref, *, co, wf, length, pad):
    # Generic fused 3x3 conv + PReLU; output carries a zeroed halo tail so the
    # next conv can take its nine shifted slices without any extra glue copy.
    y = _taps_accumulate(x_ref, w_ref, co, wf, length) + b_ref[...]
    y = _prelu(y, s_ref[...]).astype(o_ref.dtype)
    o_ref[...] = jnp.concatenate([y, jnp.zeros((co, pad), o_ref.dtype)], axis=1)


def _conv3_heads_kernel(x_ref, w_ref, b_ref, s_ref, wh_ref, bh_ref, o_ref, *,
                        wf, length):
    # conv3 + PReLU3, then both 1x1 heads in ONE (6,32) MXU push
    # (bf16-in / f32-accumulate), softmax over the first two rows.
    h = _prelu(_taps_accumulate(x_ref, w_ref, 32, wf, length) + b_ref[...],
               s_ref[...])
    z = jnp.dot(wh_ref[...], h.astype(wh_ref.dtype),
                preferred_element_type=ACC_DTYPE) + bh_ref[...]
    z0, z1 = z[0:1, :], z[1:2, :]
    m = jnp.maximum(z0, z1)
    e0, e1 = jnp.exp(z0 - m), jnp.exp(z1 - m)
    inv = 1.0 / (e0 + e1)                          # exact: probs sum to 1
    o_ref[...] = jnp.concatenate([e0 * inv, e1 * inv, z[2:6, :]],
                                 axis=0).astype(o_ref.dtype)


# ------------------------------ pallas_call wrappers -----------------------

def _conv1_prelu_poolmax(x, w_t, b, s, mask_bias, hf, wf):
    n = x.shape[0]
    lin = hf * wf
    la = lin + wf + 1
    lx = x.shape[2]
    kernel = functools.partial(_conv1_prelu_poolmax_kernel, wf=wf, lin=lin, la=la)
    return pl.pallas_call(
        kernel,
        out_shape=jax.ShapeDtypeStruct((n, 10, lin), x.dtype),
        grid=(n,),
        in_specs=[
            pl.BlockSpec((None, 3, lx), lambda i: (i, 0, 0)),
            pl.BlockSpec((9, 10, 3), lambda i: (0, 0, 0)),
            pl.BlockSpec((10, 1), lambda i: (0, 0)),
            pl.BlockSpec((10, 1), lambda i: (0, 0)),
            pl.BlockSpec((1, la), lambda i: (0, 0)),
        ],
        out_specs=pl.BlockSpec((None, 10, lin), lambda i: (i, 0, 0)),
        compiler_params=pltpu.CompilerParams(dimension_semantics=("parallel",)),
    )(x, w_t, b, s, mask_bias)


def _conv2_prelu(x, w_t, b, s, wf, length, pad):
    n, ci, lx = x.shape
    co = w_t.shape[1]
    kernel = functools.partial(_conv_prelu_kernel, co=co, wf=wf, length=length, pad=pad)
    return pl.pallas_call(
        kernel,
        out_shape=jax.ShapeDtypeStruct((n, co, length + pad), x.dtype),
        grid=(n,),
        in_specs=[
            pl.BlockSpec((None, ci, lx), lambda i: (i, 0, 0)),
            pl.BlockSpec((9, co, ci), lambda i: (0, 0, 0)),
            pl.BlockSpec((co, 1), lambda i: (0, 0)),
            pl.BlockSpec((co, 1), lambda i: (0, 0)),
        ],
        out_specs=pl.BlockSpec((None, co, length + pad), lambda i: (i, 0, 0)),
        compiler_params=pltpu.CompilerParams(dimension_semantics=("parallel",)),
    )(x, w_t, b, s)


def _conv3_heads(x, w_t, b, s, wh, bh, wf, length):
    n, ci, lx = x.shape
    kernel = functools.partial(_conv3_heads_kernel, wf=wf, length=length)
    return pl.pallas_call(
        kernel,
        out_shape=jax.ShapeDtypeStruct((n, 6, length), jnp.float32),
        grid=(n,),
        in_specs=[
            pl.BlockSpec((None, ci, lx), lambda i: (i, 0, 0)),
            pl.BlockSpec((9, 32, 16), lambda i: (0, 0, 0)),
            pl.BlockSpec((32, 1), lambda i: (0, 0)),
            pl.BlockSpec((32, 1), lambda i: (0, 0)),
            pl.BlockSpec((6, 32), lambda i: (0, 0)),
            pl.BlockSpec((6, 1), lambda i: (0, 0)),
        ],
        out_specs=pl.BlockSpec((None, 6, length), lambda i: (i, 0, 0)),
        compiler_params=pltpu.CompilerParams(dimension_semantics=("parallel",)),
    )(x, w_t, b, s, wh, bh)


# ------------------------------ PNet forward -------------------------------

def _taps_weight(w):
    # PyTorch (Co, Ci, 3, 3) -> (9, Co, Ci), tap index k = dy*3 + dx.
    co, ci = w.shape[0], w.shape[1]
    return jnp.transpose(w, (2, 3, 0, 1)).reshape(9, co, ci)


def init_params(key):
    ks = jax.random.split(key, 10)

    def rnd(k, shape):
        return jax.random.normal(k, shape, jnp.float32) * 0.1

    # PReLU slopes = 0.25 (PyTorch default init); conv weights in PyTorch layout.
    return {
        "conv1_w": rnd(ks[0], (10, 3, 3, 3)), "conv1_b": rnd(ks[1], (10,)),
        "prelu1_w": jnp.full((10,), 0.25, jnp.float32),
        "conv2_w": rnd(ks[2], (16, 10, 3, 3)), "conv2_b": rnd(ks[3], (16,)),
        "prelu2_w": jnp.full((16,), 0.25, jnp.float32),
        "conv3_w": rnd(ks[4], (32, 16, 3, 3)), "conv3_b": rnd(ks[5], (32,)),
        "prelu3_w": jnp.full((32,), 0.25, jnp.float32),
        "conv4_1_w": rnd(ks[6], (2, 32, 1, 1)), "conv4_1_b": rnd(ks[7], (2,)),
        "conv4_2_w": rnd(ks[8], (4, 32, 1, 1)), "conv4_2_b": rnd(ks[9], (4,)),
    }


@jax.jit
def pnet_forward(x_nchw, params):
    cdt = COMPUTE_DTYPE
    n, _, h, w = x_nchw.shape
    h1, w1 = h - 2, w - 2                     # conv1 valid
    hp, wp = (h1 + 1) // 2, (w1 + 1) // 2     # pool1 output (ceil mode)
    ho, wo = hp - 4, wp - 4                   # after conv2 (-2) and conv3 (-2)
    lin = h * w
    la = lin + w + 1                          # conv1 positions needed by the pool max

    # ---- stage 1: conv1 + prelu1 + pool window-max (fused Pallas kernel) ----
    x = jnp.pad(x_nchw.reshape(n, 3, lin).astype(cdt),
                ((0, 0), (0, 0), (0, 3 * w + 3)))
    q = jnp.arange(la, dtype=jnp.int32)
    valid = ((q // w) < h1) & ((q % w) < w1)
    mask_bias = jnp.where(valid, 0.0, NEG_BIG).astype(jnp.float32).reshape(1, la)
    m = _conv1_prelu_poolmax(
        x, _taps_weight(params["conv1_w"]).astype(cdt),
        params["conv1_b"].reshape(10, 1).astype(jnp.float32),
        params["prelu1_w"].reshape(10, 1).astype(jnp.float32),
        mask_bias, h, w)                                        # (n, 10, h*w)

    # Factor-2 decimation = the actual pool output (pure selection in glue;
    # the max itself already ran inside the kernel).
    pooled = m.reshape(n, 10, h, w)[:, :, ::2, ::2][:, :, :hp, :wp]
    l1 = hp * wp
    pad1 = 2 * wp + 2                                           # halo for next 3x3 convs
    pooled = jnp.pad(pooled.reshape(n, 10, l1), ((0, 0), (0, 0), (0, pad1)))

    # ---- stage 2: conv2 + prelu2 (fused Pallas kernel) -----------------------
    act2 = _conv2_prelu(
        pooled, _taps_weight(params["conv2_w"]).astype(cdt),
        params["conv2_b"].reshape(16, 1).astype(jnp.float32),
        params["prelu2_w"].reshape(16, 1).astype(jnp.float32),
        wp, l1, pad1)                                           # (n, 16, l1+pad1)

    # ---- stage 3: conv3 + prelu3 + 1x1 heads + softmax (fused Pallas kernel) -
    wh = jnp.concatenate([params["conv4_1_w"].reshape(2, 32),
                          params["conv4_2_w"].reshape(4, 32)], axis=0).astype(cdt)
    bh = jnp.concatenate([params["conv4_1_b"],
                          params["conv4_2_b"]]).reshape(6, 1).astype(jnp.float32)
    out6 = _conv3_heads(
        act2, _taps_weight(params["conv3_w"]).astype(cdt),
        params["conv3_b"].reshape(32, 1).astype(jnp.float32),
        params["prelu3_w"].reshape(32, 1).astype(jnp.float32),
        wh, bh, wp, l1)                                         # (n, 6, l1) f32

    out6 = out6.reshape(n, 6, hp, wp)[:, :, :ho, :wo]
    a = out6[:, 0:2]                                            # face prob (softmaxed)
    b = out6[:, 2:6]                                            # bbox regression
    return b, a                                                 # same order as PyTorch


if __name__ == "__main__":
    key = jax.random.PRNGKey(0)
    kp, kx = jax.random.split(key)
    params = init_params(kp)
    # Small input consistent with the module: N=2, C=3 (required by conv1), 16x16.
    x = jax.random.normal(kx, (2, 3, 16, 16), jnp.float32)      # NCHW, like PyTorch
    b_out, a_out = pnet_forward(x, params)
    jax.block_until_ready((b_out, a_out))
    assert b_out.shape == (2, 4, 3, 3), b_out.shape
    assert a_out.shape == (2, 2, 3, 3), a_out.shape
    assert bool(jnp.allclose(a_out.sum(axis=1), 1.0, atol=1e-2))
    print("KERNEL_OK")
</pallas_src>

<mosaic_0001>
module attributes {stable_mosaic.version = 11 : i64} {
  func.func @_conv1_prelu_poolmax_kernel(%arg0: i32, %arg1: memref<1x3x307xbf16, #tpu.memory_space<vmem>>, %arg2: memref<9x10x3xbf16, #tpu.memory_space<vmem>>, %arg3: memref<10x1xf32, #tpu.memory_space<vmem>>, %arg4: memref<10x1xf32, #tpu.memory_space<vmem>>, %arg5: memref<1x273xf32, #tpu.memory_space<vmem>>, %arg6: memref<1x10x256xbf16, #tpu.memory_space<vmem>>) attributes {dimension_semantics = [#tpu.dimension_semantics<parallel>], iteration_bounds = array<i64: 2>, scalar_prefetch = 0 : i64, scratch_operands = 0 : i64, tpu.core_type = #tpu.core_type<tc>, window_params = [{transform_indices = @transform_0, window_bounds = array<i64: 1, 3, 307>}, {pipeline_mode = #tpu.pipeline_mode<synchronous>, transform_indices = @transform_1, window_bounds = array<i64: 9, 10, 3>}, {pipeline_mode = #tpu.pipeline_mode<synchronous>, transform_indices = @transform_2, window_bounds = array<i64: 10, 1>}, {pipeline_mode = #tpu.pipeline_mode<synchronous>, transform_indices = @transform_3, window_bounds = array<i64: 10, 1>}, {pipeline_mode = #tpu.pipeline_mode<synchronous>, transform_indices = @transform_4, window_bounds = array<i64: 1, 273>}, {transform_indices = @transform_5, window_bounds = array<i64: 1, 10, 256>}]} {
    %cst = arith.constant 0.000000e+00 : f32
    %0 = vector.broadcast %cst : f32 to vector<10x273xf32>
    %c0 = arith.constant 0 : index
    %c0_0 = arith.constant 0 : index
    %c0_1 = arith.constant 0 : index
    %1 = vector.load %arg1[%c0, %c0_0, %c0_1] : memref<1x3x307xbf16, #tpu.memory_space<vmem>>, vector<1x3x273xbf16>
    %2 = vector.shape_cast %1 : vector<1x3x273xbf16> to vector<3x273xbf16>
    %c0_2 = arith.constant 0 : index
    %c0_3 = arith.constant 0 : index
    %c0_4 = arith.constant 0 : index
    %3 = vector.load %arg2[%c0_2, %c0_3, %c0_4] : memref<9x10x3xbf16, #tpu.memory_space<vmem>>, vector<1x10x3xbf16>
    %4 = vector.shape_cast %3 : vector<1x10x3xbf16> to vector<10x3xbf16>
    %cst_5 = arith.constant dense<0.000000e+00> : vector<10x273xf32>
    %5 = tpu.matmul %4, %2, %cst_5 {dimension_numbers = #tpu.dot_dimension_numbers<[1], [0], [0], [1], [0, 0, 1, 1], [], []>} : vector<10x3xbf16>, vector<3x273xbf16>, vector<10x273xf32> -> vector<10x273xf32>
    %6 = arith.addf %0, %5 : vector<10x273xf32>
    %c0_6 = arith.constant 0 : index
    %c0_7 = arith.constant 0 : index
    %c1 = arith.constant 1 : index
    %7 = vector.load %arg1[%c0_6, %c0_7, %c1] : memref<1x3x307xbf16, #tpu.memory_space<vmem>>, vector<1x3x273xbf16>
    %8 = vector.shape_cast %7 : vector<1x3x273xbf16> to vector<3x273xbf16>
    %c1_8 = arith.constant 1 : index
    %c0_9 = arith.constant 0 : index
    %c0_10 = arith.constant 0 : index
    %9 = vector.load %arg2[%c1_8, %c0_9, %c0_10] : memref<9x10x3xbf16, #tpu.memory_space<vmem>>, vector<1x10x3xbf16>
    %10 = vector.shape_cast %9 : vector<1x10x3xbf16> to vector<10x3xbf16>
    %cst_11 = arith.constant dense<0.000000e+00> : vector<10x273xf32>
    %11 = tpu.matmul %10, %8, %cst_11 {dimension_numbers = #tpu.dot_dimension_numbers<[1], [0], [0], [1], [0, 0, 1, 1], [], []>} : vector<10x3xbf16>, vector<3x273xbf16>, vector<10x273xf32> -> vector<10x273xf32>
    %12 = arith.addf %6, %11 : vector<10x273xf32>
    %c0_12 = arith.constant 0 : index
    %c0_13 = arith.constant 0 : index
    %c2 = arith.constant 2 : index
    %13 = vector.load %arg1[%c0_12, %c0_13, %c2] : memref<1x3x307xbf16, #tpu.memory_space<vmem>>, vector<1x3x273xbf16>
    %14 = vector.shape_cast %13 : vector<1x3x273xbf16> to vector<3x273xbf16>
    %c2_14 = arith.constant 2 : index
    %c0_15 = arith.constant 0 : index
    %c0_16 = arith.constant 0 : index
    %15 = vector.load %arg2[%c2_14, %c0_15, %c0_16] : memref<9x10x3xbf16, #tpu.memory_space<vmem>>, vector<1x10x3xbf16>
    %16 = vector.shape_cast %15 : vector<1x10x3xbf16> to vector<10x3xbf16>
    %cst_17 = arith.constant dense<0.000000e+00> : vector<10x273xf32>
    %17 = tpu.matmul %16, %14, %cst_17 {dimension_numbers = #tpu.dot_dimension_numbers<[1], [0], [0], [1], [0, 0, 1, 1], [], []>} : vector<10x3xbf16>, vector<3x273xbf16>, vector<10x273xf32> -> vector<10x273xf32>
    %18 = arith.addf %12, %17 : vector<10x273xf32>
    %c0_18 = arith.constant 0 : index
    %c0_19 = arith.constant 0 : index
    %c16 = arith.constant 16 : index
    %19 = vector.load %arg1[%c0_18, %c0_19, %c16] : memref<1x3x307xbf16, #tpu.memory_space<vmem>>, vector<1x3x273xbf16>
    %20 = vector.shape_cast %19 : vector<1x3x273xbf16> to vector<3x273xbf16>
    %c3 = arith.constant 3 : index
    %c0_20 = arith.constant 0 : index
    %c0_21 = arith.constant 0 : index
    %21 = vector.load %arg2[%c3, %c0_20, %c0_21] : memref<9x10x3xbf16, #tpu.memory_space<vmem>>, vector<1x10x3xbf16>
    %22 = vector.shape_cast %21 : vector<1x10x3xbf16> to vector<10x3xbf16>
    %cst_22 = arith.constant dense<0.000000e+00> : vector<10x273xf32>
    %23 = tpu.matmul %22, %20, %cst_22 {dimension_numbers = #tpu.dot_dimension_numbers<[1], [0], [0], [1], [0, 0, 1, 1], [], []>} : vector<10x3xbf16>, vector<3x273xbf16>, vector<10x273xf32> -> vector<10x273xf32>
    %24 = arith.addf %18, %23 : vector<10x273xf32>
    %c0_23 = arith.constant 0 : index
    %c0_24 = arith.constant 0 : index
    %c17 = arith.constant 17 : index
    %25 = vector.load %arg1[%c0_23, %c0_24, %c17] : memref<1x3x307xbf16, #tpu.memory_space<vmem>>, vector<1x3x273xbf16>
    %26 = vector.shape_cast %25 : vector<1x3x273xbf16> to vector<3x273xbf16>
    %c4 = arith.constant 4 : index
    %c0_25 = arith.constant 0 : index
    %c0_26 = arith.constant 0 : index
    %27 = vector.load %arg2[%c4, %c0_25, %c0_26] : memref<9x10x3xbf16, #tpu.memory_space<vmem>>, vector<1x10x3xbf16>
    %28 = vector.shape_cast %27 : vector<1x10x3xbf16> to vector<10x3xbf16>
    %cst_27 = arith.constant dense<0.000000e+00> : vector<10x273xf32>
    %29 = tpu.matmul %28, %26, %cst_27 {dimension_numbers = #tpu.dot_dimension_numbers<[1], [0], [0], [1], [0, 0, 1, 1], [], []>} : vector<10x3xbf16>, vector<3x273xbf16>, vector<10x273xf32> -> vector<10x273xf32>
    %30 = arith.addf %24, %29 : vector<10x273xf32>
    %c0_28 = arith.constant 0 : index
    %c0_29 = arith.constant 0 : index
    %c18 = arith.constant 18 : index
    %31 = vector.load %arg1[%c0_28, %c0_29, %c18] : memref<1x3x307xbf16, #tpu.memory_space<vmem>>, vector<1x3x273xbf16>
    %32 = vector.shape_cast %31 : vector<1x3x273xbf16> to vector<3x273xbf16>
    %c5 = arith.constant 5 : index
    %c0_30 = arith.constant 0 : index
    %c0_31 = arith.constant 0 : index
    %33 = vector.load %arg2[%c5, %c0_30, %c0_31] : memref<9x10x3xbf16, #tpu.memory_space<vmem>>, vector<1x10x3xbf16>
    %34 = vector.shape_cast %33 : vector<1x10x3xbf16> to vector<10x3xbf16>
    %cst_32 = arith.constant dense<0.000000e+00> : vector<10x273xf32>
    %35 = tpu.matmul %34, %32, %cst_32 {dimension_numbers = #tpu.dot_dimension_numbers<[1], [0], [0], [1], [0, 0, 1, 1], [], []>} : vector<10x3xbf16>, vector<3x273xbf16>, vector<10x273xf32> -> vector<10x273xf32>
    %36 = arith.addf %30, %35 : vector<10x273xf32>
    %c0_33 = arith.constant 0 : index
    %c0_34 = arith.constant 0 : index
    %c32 = arith.constant 32 : index
    %37 = vector.load %arg1[%c0_33, %c0_34, %c32] : memref<1x3x307xbf16, #tpu.memory_space<vmem>>, vector<1x3x273xbf16>
    %38 = vector.shape_cast %37 : vector<1x3x273xbf16> to vector<3x273xbf16>
    %c6 = arith.constant 6 : index
    %c0_35 = arith.constant 0 : index
    %c0_36 = arith.constant 0 : index
    %39 = vector.load %arg2[%c6, %c0_35, %c0_36] : memref<9x10x3xbf16, #tpu.memory_space<vmem>>, vector<1x10x3xbf16>
    %40 = vector.shape_cast %39 : vector<1x10x3xbf16> to vector<10x3xbf16>
    %cst_37 = arith.constant dense<0.000000e+00> : vector<10x273xf32>
    %41 = tpu.matmul %40, %38, %cst_37 {dimension_numbers = #tpu.dot_dimension_numbers<[1], [0], [0], [1], [0, 0, 1, 1], [], []>} : vector<10x3xbf16>, vector<3x273xbf16>, vector<10x273xf32> -> vector<10x273xf32>
    %42 = arith.addf %36, %41 : vector<10x273xf32>
    %c0_38 = arith.constant 0 : index
    %c0_39 = arith.constant 0 : index
    %c33 = arith.constant 33 : index
    %43 = vector.load %arg1[%c0_38, %c0_39, %c33] : memref<1x3x307xbf16, #tpu.memory_space<vmem>>, vector<1x3x273xbf16>
    %44 = vector.shape_cast %43 : vector<1x3x273xbf16> to vector<3x273xbf16>
    %c7 = arith.constant 7 : index
    %c0_40 = arith.constant 0 : index
    %c0_41 = arith.constant 0 : index
    %45 = vector.load %arg2[%c7, %c0_40, %c0_41] : memref<9x10x3xbf16, #tpu.memory_space<vmem>>, vector<1x10x3xbf16>
    %46 = vector.shape_cast %45 : vector<1x10x3xbf16> to vector<10x3xbf16>
    %cst_42 = arith.constant dense<0.000000e+00> : vector<10x273xf32>
    %47 = tpu.matmul %46, %44, %cst_42 {dimension_numbers = #tpu.dot_dimension_numbers<[1], [0], [0], [1], [0, 0, 1, 1], [], []>} : vector<10x3xbf16>, vector<3x273xbf16>, vector<10x273xf32> -> vector<10x273xf32>
    %48 = arith.addf %42, %47 : vector<10x273xf32>
    %c0_43 = arith.constant 0 : index
    %c0_44 = arith.constant 0 : index
    %c34 = arith.constant 34 : index
    %49 = vector.load %arg1[%c0_43, %c0_44, %c34] : memref<1x3x307xbf16, #tpu.memory_space<vmem>>, vector<1x3x273xbf16>
    %50 = vector.shape_cast %49 : vector<1x3x273xbf16> to vector<3x273xbf16>
    %c8 = arith.constant 8 : index
    %c0_45 = arith.constant 0 : index
    %c0_46 = arith.constant 0 : index
    %51 = vector.load %arg2[%c8, %c0_45, %c0_46] : memref<9x10x3xbf16, #tpu.memory_space<vmem>>, vector<1x10x3xbf16>
    %52 = vector.shape_cast %51 : vector<1x10x3xbf16> to vector<10x3xbf16>
    %cst_47 = arith.constant dense<0.000000e+00> : vector<10x273xf32>
    %53 = tpu.matmul %52, %50, %cst_47 {dimension_numbers = #tpu.dot_dimension_numbers<[1], [0], [0], [1], [0, 0, 1, 1], [], []>} : vector<10x3xbf16>, vector<3x273xbf16>, vector<10x273xf32> -> vector<10x273xf32>
    %54 = arith.addf %48, %53 : vector<10x273xf32>
    %c0_48 = arith.constant 0 : index
    %c0_49 = arith.constant 0 : index
    %55 = vector.load %arg3[%c0_48, %c0_49] : memref<10x1xf32, #tpu.memory_space<vmem>>, vector<10x1xf32>
    %56 = vector.broadcast %55 : vector<10x1xf32> to vector<10x273xf32>
    %57 = arith.addf %54, %56 : vector<10x273xf32>
    %c0_50 = arith.constant 0 : index
    %c0_51 = arith.constant 0 : index
    %58 = vector.load %arg4[%c0_50, %c0_51] : memref<10x1xf32, #tpu.memory_space<vmem>>, vector<10x1xf32>
    %cst_52 = arith.constant 0.000000e+00 : f32
    %59 = vector.broadcast %cst_52 : f32 to vector<10x273xf32>
    %60 = arith.cmpf ogt, %57, %59 : vector<10x273xf32>
    %61 = vector.broadcast %58 : vector<10x1xf32> to vector<10x273xf32>
    %62 = arith.mulf %57, %61 : vector<10x273xf32>
    %63 = arith.select %60, %57, %62 : vector<10x273xi1>, vector<10x273xf32>
    %c0_53 = arith.constant 0 : index
    %c0_54 = arith.constant 0 : index
    %64 = vector.load %arg5[%c0_53, %c0_54] : memref<1x273xf32, #tpu.memory_space<vmem>>, vector<1x273xf32>
    %65 = vector.broadcast %64 : vector<1x273xf32> to vector<10x273xf32>
    %66 = arith.addf %63, %65 : vector<10x273xf32>
    %67 = vector.extract_strided_slice %66 {offsets = [0, 0], sizes = [10, 256], strides = [1, 1]} : vector<10x273xf32> to vector<10x256xf32>
    %68 = vector.extract_strided_slice %66 {offsets = [0, 1], sizes = [10, 256], strides = [1, 1]} : vector<10x273xf32> to vector<10x256xf32>
    %69 = arith.maximumf %67, %68 : vector<10x256xf32>
    %70 = vector.extract_strided_slice %66 {offsets = [0, 16], sizes = [10, 256], strides = [1, 1]} : vector<10x273xf32> to vector<10x256xf32>
    %71 = vector.extract_strided_slice %66 {offsets = [0, 17], sizes = [10, 256], strides = [1, 1]} : vector<10x273xf32> to vector<10x256xf32>
    %72 = arith.maximumf %70, %71 : vector<10x256xf32>
    %73 = arith.maximumf %69, %72 : vector<10x256xf32>
    %74 = arith.truncf %73 : vector<10x256xf32> to vector<10x256xbf16>
    %c0_55 = arith.constant 0 : index
    %c0_56 = arith.constant 0 : index
    %c0_57 = arith.constant 0 : index
    %75 = vector.load %arg6[%c0_55, %c0_56, %c0_57] : memref<1x10x256xbf16, #tpu.memory_space<vmem>>, vector<1x10x256xbf16>
    %76 = vector.shape_cast %75 : vector<1x10x256xbf16> to vector<10x256xbf16>
    %77 = vector.shape_cast %74 : vector<10x256xbf16> to vector<1x10x256xbf16>
    tpu.vector_store %arg6[%c0_55, %c0_56, %c0_57], %77 {strides = array<i32>} : memref<1x10x256xbf16, #tpu.memory_space<vmem>>, vector<1x10x256xbf16>,
    return
  }
  func.func @transform_0(%arg0: i32) -> (i32, i32, i32) {
    %c0_i32 = arith.constant 0 : i32
    %c0_i32_0 = arith.constant 0 : i32
    %c0_i32_1 = arith.constant 0 : i32
    return %arg0, %c0_i32, %c0_i32_0 : i32, i32, i32
  }
  func.func @transform_1(%arg0: i32) -> (i32, i32, i32) {
    %c0_i32 = arith.constant 0 : i32
    %c0_i32_0 = arith.constant 0 : i32
    %c0_i32_1 = arith.constant 0 : i32
    %c0_i32_2 = arith.constant 0 : i32
    return %c0_i32, %c0_i32_0, %c0_i32_1 : i32, i32, i32
  }
  func.func @transform_2(%arg0: i32) -> (i32, i32) {
    %c0_i32 = arith.constant 0 : i32
    %c0_i32_0 = arith.constant 0 : i32
    %c0_i32_1 = arith.constant 0 : i32
    return %c0_i32, %c0_i32_0 : i32, i32
  }
  func.func @transform_3(%arg0: i32) -> (i32, i32) {
    %c0_i32 = arith.constant 0 : i32
    %c0_i32_0 = arith.constant 0 : i32
    %c0_i32_1 = arith.constant 0 : i32
    return %c0_i32, %c0_i32_0 : i32, i32
  }
  func.func @transform_4(%arg0: i32) -> (i32, i32) {
    %c0_i32 = arith.constant 0 : i32
    %c0_i32_0 = arith.constant 0 : i32
    %c0_i32_1 = arith.constant 0 : i32
    return %c0_i32, %c0_i32_0 : i32, i32
  }
  func.func @transform_5(%arg0: i32) -> (i32, i32, i32) {
    %c0_i32 = arith.constant 0 : i32
    %c0_i32_0 = arith.constant 0 : i32
    %c0_i32_1 = arith.constant 0 : i32
    return %arg0, %c0_i32, %c0_i32_0 : i32, i32, i32
  }
}

module attributes {stable_mosaic.version = 11 : i64} {
  func.func @_conv_prelu_kernel(%arg0: i32, %arg1: memref<1x10x65xbf16, #tpu.memory_space<vmem>>, %arg2: memref<9x16x10xbf16, #tpu.memory_space<vmem>>, %arg3: memref<16x1xf32, #tpu.memory_space<vmem>>, %arg4: memref<16x1xf32, #tpu.memory_space<vmem>>, %arg5: memref<1x16x65xbf16, #tpu.memory_space<vmem>>) attributes {dimension_semantics = [#tpu.dimension_semantics<parallel>], iteration_bounds = array<i64: 2>, scalar_prefetch = 0 : i64, scratch_operands = 0 : i64, tpu.core_type = #tpu.core_type<tc>, window_params = [{transform_indices = @transform_0, window_bounds = array<i64: 1, 10, 65>}, {pipeline_mode = #tpu.pipeline_mode<synchronous>, transform_indices = @transform_1, window_bounds = array<i64: 9, 16, 10>}, {pipeline_mode = #tpu.pipeline_mode<synchronous>, transform_indices = @transform_2, window_bounds = array<i64: 16, 1>}, {pipeline_mode = #tpu.pipeline_mode<synchronous>, transform_indices = @transform_3, window_bounds = array<i64: 16, 1>}, {transform_indices = @transform_4, window_bounds = array<i64: 1, 16, 65>}]} {
    %cst = arith.constant 0.000000e+00 : f32
    %0 = vector.broadcast %cst : f32 to vector<16x49xf32>
    %c0 = arith.constant 0 : index
    %c0_0 = arith.constant 0 : index
    %c0_1 = arith.constant 0 : index
    %1 = vector.load %arg1[%c0, %c0_0, %c0_1] : memref<1x10x65xbf16, #tpu.memory_space<vmem>>, vector<1x10x49xbf16>
    %2 = vector.shape_cast %1 : vector<1x10x49xbf16> to vector<10x49xbf16>
    %c0_2 = arith.constant 0 : index
    %c0_3 = arith.constant 0 : index
    %c0_4 = arith.constant 0 : index
    %3 = vector.load %arg2[%c0_2, %c0_3, %c0_4] : memref<9x16x10xbf16, #tpu.memory_space<vmem>>, vector<1x16x10xbf16>
    %4 = vector.shape_cast %3 : vector<1x16x10xbf16> to vector<16x10xbf16>
    %cst_5 = arith.constant dense<0.000000e+00> : vector<16x49xf32>
    %5 = tpu.matmul %4, %2, %cst_5 {dimension_numbers = #tpu.dot_dimension_numbers<[1], [0], [0], [1], [0, 0, 1, 1], [], []>} : vector<16x10xbf16>, vector<10x49xbf16>, vector<16x49xf32> -> vector<16x49xf32>
    %6 = arith.addf %0, %5 : vector<16x49xf32>
    %c0_6 = arith.constant 0 : index
    %c0_7 = arith.constant 0 : index
    %c1 = arith.constant 1 : index
    %7 = vector.load %arg1[%c0_6, %c0_7, %c1] : memref<1x10x65xbf16, #tpu.memory_space<vmem>>, vector<1x10x49xbf16>
    %8 = vector.shape_cast %7 : vector<1x10x49xbf16> to vector<10x49xbf16>
    %c1_8 = arith.constant 1 : index
    %c0_9 = arith.constant 0 : index
    %c0_10 = arith.constant 0 : index
    %9 = vector.load %arg2[%c1_8, %c0_9, %c0_10] : memref<9x16x10xbf16, #tpu.memory_space<vmem>>, vector<1x16x10xbf16>
    %10 = vector.shape_cast %9 : vector<1x16x10xbf16> to vector<16x10xbf16>
    %cst_11 = arith.constant dense<0.000000e+00> : vector<16x49xf32>
    %11 = tpu.matmul %10, %8, %cst_11 {dimension_numbers = #tpu.dot_dimension_numbers<[1], [0], [0], [1], [0, 0, 1, 1], [], []>} : vector<16x10xbf16>, vector<10x49xbf16>, vector<16x49xf32> -> vector<16x49xf32>
    %12 = arith.addf %6, %11 : vector<16x49xf32>
    %c0_12 = arith.constant 0 : index
    %c0_13 = arith.constant 0 : index
    %c2 = arith.constant 2 : index
    %13 = vector.load %arg1[%c0_12, %c0_13, %c2] : memref<1x10x65xbf16, #tpu.memory_space<vmem>>, vector<1x10x49xbf16>
    %14 = vector.shape_cast %13 : vector<1x10x49xbf16> to vector<10x49xbf16>
    %c2_14 = arith.constant 2 : index
    %c0_15 = arith.constant 0 : index
    %c0_16 = arith.constant 0 : index
    %15 = vector.load %arg2[%c2_14, %c0_15, %c0_16] : memref<9x16x10xbf16, #tpu.memory_space<vmem>>, vector<1x16x10xbf16>
    %16 = vector.shape_cast %15 : vector<1x16x10xbf16> to vector<16x10xbf16>
    %cst_17 = arith.constant dense<0.000000e+00> : vector<16x49xf32>
    %17 = tpu.matmul %16, %14, %cst_17 {dimension_numbers = #tpu.dot_dimension_numbers<[1], [0], [0], [1], [0, 0, 1, 1], [], []>} : vector<16x10xbf16>, vector<10x49xbf16>, vector<16x49xf32> -> vector<16x49xf32>
    %18 = arith.addf %12, %17 : vector<16x49xf32>
    %c0_18 = arith.constant 0 : index
    %c0_19 = arith.constant 0 : index
    %c7 = arith.constant 7 : index
    %19 = vector.load %arg1[%c0_18, %c0_19, %c7] : memref<1x10x65xbf16, #tpu.memory_space<vmem>>, vector<1x10x49xbf16>
    %20 = vector.shape_cast %19 : vector<1x10x49xbf16> to vector<10x49xbf16>
    %c3 = arith.constant 3 : index
    %c0_20 = arith.constant 0 : index
    %c0_21 = arith.constant 0 : index
    %21 = vector.load %arg2[%c3, %c0_20, %c0_21] : memref<9x16x10xbf16, #tpu.memory_space<vmem>>, vector<1x16x10xbf16>
    %22 = vector.shape_cast %21 : vector<1x16x10xbf16> to vector<16x10xbf16>
    %cst_22 = arith.constant dense<0.000000e+00> : vector<16x49xf32>
    %23 = tpu.matmul %22, %20, %cst_22 {dimension_numbers = #tpu.dot_dimension_numbers<[1], [0], [0], [1], [0, 0, 1, 1], [], []>} : vector<16x10xbf16>, vector<10x49xbf16>, vector<16x49xf32> -> vector<16x49xf32>
    %24 = arith.addf %18, %23 : vector<16x49xf32>
    %c0_23 = arith.constant 0 : index
    %c0_24 = arith.constant 0 : index
    %c8 = arith.constant 8 : index
    %25 = vector.load %arg1[%c0_23, %c0_24, %c8] : memref<1x10x65xbf16, #tpu.memory_space<vmem>>, vector<1x10x49xbf16>
    %26 = vector.shape_cast %25 : vector<1x10x49xbf16> to vector<10x49xbf16>
    %c4 = arith.constant 4 : index
    %c0_25 = arith.constant 0 : index
    %c0_26 = arith.constant 0 : index
    %27 = vector.load %arg2[%c4, %c0_25, %c0_26] : memref<9x16x10xbf16, #tpu.memory_space<vmem>>, vector<1x16x10xbf16>
    %28 = vector.shape_cast %27 : vector<1x16x10xbf16> to vector<16x10xbf16>
    %cst_27 = arith.constant dense<0.000000e+00> : vector<16x49xf32>
    %29 = tpu.matmul %28, %26, %cst_27 {dimension_numbers = #tpu.dot_dimension_numbers<[1], [0], [0], [1], [0, 0, 1, 1], [], []>} : vector<16x10xbf16>, vector<10x49xbf16>, vector<16x49xf32> -> vector<16x49xf32>
    %30 = arith.addf %24, %29 : vector<16x49xf32>
    %c0_28 = arith.constant 0 : index
    %c0_29 = arith.constant 0 : index
    %c9 = arith.constant 9 : index
    %31 = vector.load %arg1[%c0_28, %c0_29, %c9] : memref<1x10x65xbf16, #tpu.memory_space<vmem>>, vector<1x10x49xbf16>
    %32 = vector.shape_cast %31 : vector<1x10x49xbf16> to vector<10x49xbf16>
    %c5 = arith.constant 5 : index
    %c0_30 = arith.constant 0 : index
    %c0_31 = arith.constant 0 : index
    %33 = vector.load %arg2[%c5, %c0_30, %c0_31] : memref<9x16x10xbf16, #tpu.memory_space<vmem>>, vector<1x16x10xbf16>
    %34 = vector.shape_cast %33 : vector<1x16x10xbf16> to vector<16x10xbf16>
    %cst_32 = arith.constant dense<0.000000e+00> : vector<16x49xf32>
    %35 = tpu.matmul %34, %32, %cst_32 {dimension_numbers = #tpu.dot_dimension_numbers<[1], [0], [0], [1], [0, 0, 1, 1], [], []>} : vector<16x10xbf16>, vector<10x49xbf16>, vector<16x49xf32> -> vector<16x49xf32>
    %36 = arith.addf %30, %35 : vector<16x49xf32>
    %c0_33 = arith.constant 0 : index
    %c0_34 = arith.constant 0 : index
    %c14 = arith.constant 14 : index
    %37 = vector.load %arg1[%c0_33, %c0_34, %c14] : memref<1x10x65xbf16, #tpu.memory_space<vmem>>, vector<1x10x49xbf16>
    %38 = vector.shape_cast %37 : vector<1x10x49xbf16> to vector<10x49xbf16>
    %c6 = arith.constant 6 : index
    %c0_35 = arith.constant 0 : index
    %c0_36 = arith.constant 0 : index
    %39 = vector.load %arg2[%c6, %c0_35, %c0_36] : memref<9x16x10xbf16, #tpu.memory_space<vmem>>, vector<1x16x10xbf16>
    %40 = vector.shape_cast %39 : vector<1x16x10xbf16> to vector<16x10xbf16>
    %cst_37 = arith.constant dense<0.000000e+00> : vector<16x49xf32>
    %41 = tpu.matmul %40, %38, %cst_37 {dimension_numbers = #tpu.dot_dimension_numbers<[1], [0], [0], [1], [0, 0, 1, 1], [], []>} : vector<16x10xbf16>, vector<10x49xbf16>, vector<16x49xf32> -> vector<16x49xf32>
    %42 = arith.addf %36, %41 : vector<16x49xf32>
    %c0_38 = arith.constant 0 : index
    %c0_39 = arith.constant 0 : index
    %c15 = arith.constant 15 : index
    %43 = vector.load %arg1[%c0_38, %c0_39, %c15] : memref<1x10x65xbf16, #tpu.memory_space<vmem>>, vector<1x10x49xbf16>
    %44 = vector.shape_cast %43 : vector<1x10x49xbf16> to vector<10x49xbf16>
    %c7_40 = arith.constant 7 : index
    %c0_41 = arith.constant 0 : index
    %c0_42 = arith.constant 0 : index
    %45 = vector.load %arg2[%c7_40, %c0_41, %c0_42] : memref<9x16x10xbf16, #tpu.memory_space<vmem>>, vector<1x16x10xbf16>
    %46 = vector.shape_cast %45 : vector<1x16x10xbf16> to vector<16x10xbf16>
    %cst_43 = arith.constant dense<0.000000e+00> : vector<16x49xf32>
    %47 = tpu.matmul %46, %44, %cst_43 {dimension_numbers = #tpu.dot_dimension_numbers<[1], [0], [0], [1], [0, 0, 1, 1], [], []>} : vector<16x10xbf16>, vector<10x49xbf16>, vector<16x49xf32> -> vector<16x49xf32>
    %48 = arith.addf %42, %47 : vector<16x49xf32>
    %c0_44 = arith.constant 0 : index
    %c0_45 = arith.constant 0 : index
    %c16 = arith.constant 16 : index
    %49 = vector.load %arg1[%c0_44, %c0_45, %c16] : memref<1x10x65xbf16, #tpu.memory_space<vmem>>, vector<1x10x49xbf16>
    %50 = vector.shape_cast %49 : vector<1x10x49xbf16> to vector<10x49xbf16>
    %c8_46 = arith.constant 8 : index
    %c0_47 = arith.constant 0 : index
    %c0_48 = arith.constant 0 : index
    %51 = vector.load %arg2[%c8_46, %c0_47, %c0_48] : memref<9x16x10xbf16, #tpu.memory_space<vmem>>, vector<1x16x10xbf16>
    %52 = vector.shape_cast %51 : vector<1x16x10xbf16> to vector<16x10xbf16>
    %cst_49 = arith.constant dense<0.000000e+00> : vector<16x49xf32>
    %53 = tpu.matmul %52, %50, %cst_49 {dimension_numbers = #tpu.dot_dimension_numbers<[1], [0], [0], [1], [0, 0, 1, 1], [], []>} : vector<16x10xbf16>, vector<10x49xbf16>, vector<16x49xf32> -> vector<16x49xf32>
    %54 = arith.addf %48, %53 : vector<16x49xf32>
    %c0_50 = arith.constant 0 : index
    %c0_51 = arith.constant 0 : index
    %55 = vector.load %arg3[%c0_50, %c0_51] : memref<16x1xf32, #tpu.memory_space<vmem>>, vector<16x1xf32>
    %56 = vector.broadcast %55 : vector<16x1xf32> to vector<16x49xf32>
    %57 = arith.addf %54, %56 : vector<16x49xf32>
    %c0_52 = arith.constant 0 : index
    %c0_53 = arith.constant 0 : index
    %58 = vector.load %arg4[%c0_52, %c0_53] : memref<16x1xf32, #tpu.memory_space<vmem>>, vector<16x1xf32>
    %cst_54 = arith.constant 0.000000e+00 : f32
    %59 = vector.broadcast %cst_54 : f32 to vector<16x49xf32>
    %60 = arith.cmpf ogt, %57, %59 : vector<16x49xf32>
    %61 = vector.broadcast %58 : vector<16x1xf32> to vector<16x49xf32>
    %62 = arith.mulf %57, %61 : vector<16x49xf32>
    %63 = arith.select %60, %57, %62 : vector<16x49xi1>, vector<16x49xf32>
    %64 = arith.truncf %63 : vector<16x49xf32> to vector<16x49xbf16>
    %cst_55 = arith.constant 0.000000e+00 : bf16
    %65 = vector.broadcast %cst_55 : bf16 to vector<16x16xbf16>
    %66 = tpu.concatenate %64, %65 in 1 : vector<16x49xbf16>, vector<16x16xbf16> -> vector<16x65xbf16>
    %c0_56 = arith.constant 0 : index
    %c0_57 = arith.constant 0 : index
    %c0_58 = arith.constant 0 : index
    %67 = vector.load %arg5[%c0_56, %c0_57, %c0_58] : memref<1x16x65xbf16, #tpu.memory_space<vmem>>, vector<1x16x65xbf16>
    %68 = vector.shape_cast %67 : vector<1x16x65xbf16> to vector<16x65xbf16>
    %69 = vector.shape_cast %66 : vector<16x65xbf16> to vector<1x16x65xbf16>
    tpu.vector_store %arg5[%c0_56, %c0_57, %c0_58], %69 {strides = array<i32>} : memref<1x16x65xbf16, #tpu.memory_space<vmem>>, vector<1x16x65xbf16>,
    return
  }
  func.func @transform_0(%arg0: i32) -> (i32, i32, i32) {
    %c0_i32 = arith.constant 0 : i32
    %c0_i32_0 = arith.constant 0 : i32
    %c0_i32_1 = arith.constant 0 : i32
    return %arg0, %c0_i32, %c0_i32_0 : i32, i32, i32
  }
  func.func @transform_1(%arg0: i32) -> (i32, i32, i32) {
    %c0_i32 = arith.constant 0 : i32
    %c0_i32_0 = arith.constant 0 : i32
    %c0_i32_1 = arith.constant 0 : i32
    %c0_i32_2 = arith.constant 0 : i32
    return %c0_i32, %c0_i32_0, %c0_i32_1 : i32, i32, i32
  }
  func.func @transform_2(%arg0: i32) -> (i32, i32) {
    %c0_i32 = arith.constant 0 : i32
    %c0_i32_0 = arith.constant 0 : i32
    %c0_i32_1 = arith.constant 0 : i32
    return %c0_i32, %c0_i32_0 : i32, i32
  }
  func.func @transform_3(%arg0: i32) -> (i32, i32) {
    %c0_i32 = arith.constant 0 : i32
    %c0_i32_0 = arith.constant 0 : i32
    %c0_i32_1 = arith.constant 0 : i32
    return %c0_i32, %c0_i32_0 : i32, i32
  }
  func.func @transform_4(%arg0: i32) -> (i32, i32, i32) {
    %c0_i32 = arith.constant 0 : i32
    %c0_i32_0 = arith.constant 0 : i32
    %c0_i32_1 = arith.constant 0 : i32
    return %arg0, %c0_i32, %c0_i32_0 : i32, i32, i32
  }
}

module attributes {stable_mosaic.version = 11 : i64} {
  func.func @_conv3_heads_kernel(%arg0: i32, %arg1: memref<1x16x65xbf16, #tpu.memory_space<vmem>>, %arg2: memref<9x32x16xbf16, #tpu.memory_space<vmem>>, %arg3: memref<32x1xf32, #tpu.memory_space<vmem>>, %arg4: memref<32x1xf32, #tpu.memory_space<vmem>>, %arg5: memref<6x32xbf16, #tpu.memory_space<vmem>>, %arg6: memref<6x1xf32, #tpu.memory_space<vmem>>, %arg7: memref<1x6x49xf32, #tpu.memory_space<vmem>>) attributes {dimension_semantics = [#tpu.dimension_semantics<parallel>], iteration_bounds = array<i64: 2>, scalar_prefetch = 0 : i64, scratch_operands = 0 : i64, tpu.core_type = #tpu.core_type<tc>, window_params = [{transform_indices = @transform_0, window_bounds = array<i64: 1, 16, 65>}, {pipeline_mode = #tpu.pipeline_mode<synchronous>, transform_indices = @transform_1, window_bounds = array<i64: 9, 32, 16>}, {pipeline_mode = #tpu.pipeline_mode<synchronous>, transform_indices = @transform_2, window_bounds = array<i64: 32, 1>}, {pipeline_mode = #tpu.pipeline_mode<synchronous>, transform_indices = @transform_3, window_bounds = array<i64: 32, 1>}, {pipeline_mode = #tpu.pipeline_mode<synchronous>, transform_indices = @transform_4, window_bounds = array<i64: 6, 32>}, {pipeline_mode = #tpu.pipeline_mode<synchronous>, transform_indices = @transform_5, window_bounds = array<i64: 6, 1>}, {transform_indices = @transform_6, window_bounds = array<i64: 1, 6, 49>}]} {
    %cst = arith.constant 0.000000e+00 : f32
    %0 = vector.broadcast %cst : f32 to vector<32x49xf32>
    %c0 = arith.constant 0 : index
    %c0_0 = arith.constant 0 : index
    %c0_1 = arith.constant 0 : index
    %1 = vector.load %arg1[%c0, %c0_0, %c0_1] : memref<1x16x65xbf16, #tpu.memory_space<vmem>>, vector<1x16x49xbf16>
    %2 = vector.shape_cast %1 : vector<1x16x49xbf16> to vector<16x49xbf16>
    %c0_2 = arith.constant 0 : index
    %c0_3 = arith.constant 0 : index
    %c0_4 = arith.constant 0 : index
    %3 = vector.load %arg2[%c0_2, %c0_3, %c0_4] : memref<9x32x16xbf16, #tpu.memory_space<vmem>>, vector<1x32x16xbf16>
    %4 = vector.shape_cast %3 : vector<1x32x16xbf16> to vector<32x16xbf16>
    %cst_5 = arith.constant dense<0.000000e+00> : vector<32x49xf32>
    %5 = tpu.matmul %4, %2, %cst_5 {dimension_numbers = #tpu.dot_dimension_numbers<[1], [0], [0], [1], [0, 0, 1, 1], [], []>} : vector<32x16xbf16>, vector<16x49xbf16>, vector<32x49xf32> -> vector<32x49xf32>
    %6 = arith.addf %0, %5 : vector<32x49xf32>
    %c0_6 = arith.constant 0 : index
    %c0_7 = arith.constant 0 : index
    %c1 = arith.constant 1 : index
    %7 = vector.load %arg1[%c0_6, %c0_7, %c1] : memref<1x16x65xbf16, #tpu.memory_space<vmem>>, vector<1x16x49xbf16>
    %8 = vector.shape_cast %7 : vector<1x16x49xbf16> to vector<16x49xbf16>
    %c1_8 = arith.constant 1 : index
    %c0_9 = arith.constant 0 : index
    %c0_10 = arith.constant 0 : index
    %9 = vector.load %arg2[%c1_8, %c0_9, %c0_10] : memref<9x32x16xbf16, #tpu.memory_space<vmem>>, vector<1x32x16xbf16>
    %10 = vector.shape_cast %9 : vector<1x32x16xbf16> to vector<32x16xbf16>
    %cst_11 = arith.constant dense<0.000000e+00> : vector<32x49xf32>
    %11 = tpu.matmul %10, %8, %cst_11 {dimension_numbers = #tpu.dot_dimension_numbers<[1], [0], [0], [1], [0, 0, 1, 1], [], []>} : vector<32x16xbf16>, vector<16x49xbf16>, vector<32x49xf32> -> vector<32x49xf32>
    %12 = arith.addf %6, %11 : vector<32x49xf32>
    %c0_12 = arith.constant 0 : index
    %c0_13 = arith.constant 0 : index
    %c2 = arith.constant 2 : index
    %13 = vector.load %arg1[%c0_12, %c0_13, %c2] : memref<1x16x65xbf16, #tpu.memory_space<vmem>>, vector<1x16x49xbf16>
    %14 = vector.shape_cast %13 : vector<1x16x49xbf16> to vector<16x49xbf16>
    %c2_14 = arith.constant 2 : index
    %c0_15 = arith.constant 0 : index
    %c0_16 = arith.constant 0 : index
    %15 = vector.load %arg2[%c2_14, %c0_15, %c0_16] : memref<9x32x16xbf16, #tpu.memory_space<vmem>>, vector<1x32x16xbf16>
    %16 = vector.shape_cast %15 : vector<1x32x16xbf16> to vector<32x16xbf16>
    %cst_17 = arith.constant dense<0.000000e+00> : vector<32x49xf32>
    %17 = tpu.matmul %16, %14, %cst_17 {dimension_numbers = #tpu.dot_dimension_numbers<[1], [0], [0], [1], [0, 0, 1, 1], [], []>} : vector<32x16xbf16>, vector<16x49xbf16>, vector<32x49xf32> -> vector<32x49xf32>
    %18 = arith.addf %12, %17 : vector<32x49xf32>
    %c0_18 = arith.constant 0 : index
    %c0_19 = arith.constant 0 : index
    %c7 = arith.constant 7 : index
    %19 = vector.load %arg1[%c0_18, %c0_19, %c7] : memref<1x16x65xbf16, #tpu.memory_space<vmem>>, vector<1x16x49xbf16>
    %20 = vector.shape_cast %19 : vector<1x16x49xbf16> to vector<16x49xbf16>
    %c3 = arith.constant 3 : index
    %c0_20 = arith.constant 0 : index
    %c0_21 = arith.constant 0 : index
    %21 = vector.load %arg2[%c3, %c0_20, %c0_21] : memref<9x32x16xbf16, #tpu.memory_space<vmem>>, vector<1x32x16xbf16>
    %22 = vector.shape_cast %21 : vector<1x32x16xbf16> to vector<32x16xbf16>
    %cst_22 = arith.constant dense<0.000000e+00> : vector<32x49xf32>
    %23 = tpu.matmul %22, %20, %cst_22 {dimension_numbers = #tpu.dot_dimension_numbers<[1], [0], [0], [1], [0, 0, 1, 1], [], []>} : vector<32x16xbf16>, vector<16x49xbf16>, vector<32x49xf32> -> vector<32x49xf32>
    %24 = arith.addf %18, %23 : vector<32x49xf32>
    %c0_23 = arith.constant 0 : index
    %c0_24 = arith.constant 0 : index
    %c8 = arith.constant 8 : index
    %25 = vector.load %arg1[%c0_23, %c0_24, %c8] : memref<1x16x65xbf16, #tpu.memory_space<vmem>>, vector<1x16x49xbf16>
    %26 = vector.shape_cast %25 : vector<1x16x49xbf16> to vector<16x49xbf16>
    %c4 = arith.constant 4 : index
    %c0_25 = arith.constant 0 : index
    %c0_26 = arith.constant 0 : index
    %27 = vector.load %arg2[%c4, %c0_25, %c0_26] : memref<9x32x16xbf16, #tpu.memory_space<vmem>>, vector<1x32x16xbf16>
    %28 = vector.shape_cast %27 : vector<1x32x16xbf16> to vector<32x16xbf16>
    %cst_27 = arith.constant dense<0.000000e+00> : vector<32x49xf32>
    %29 = tpu.matmul %28, %26, %cst_27 {dimension_numbers = #tpu.dot_dimension_numbers<[1], [0], [0], [1], [0, 0, 1, 1], [], []>} : vector<32x16xbf16>, vector<16x49xbf16>, vector<32x49xf32> -> vector<32x49xf32>
    %30 = arith.addf %24, %29 : vector<32x49xf32>
    %c0_28 = arith.constant 0 : index
    %c0_29 = arith.constant 0 : index
    %c9 = arith.constant 9 : index
    %31 = vector.load %arg1[%c0_28, %c0_29, %c9] : memref<1x16x65xbf16, #tpu.memory_space<vmem>>, vector<1x16x49xbf16>
    %32 = vector.shape_cast %31 : vector<1x16x49xbf16> to vector<16x49xbf16>
    %c5 = arith.constant 5 : index
    %c0_30 = arith.constant 0 : index
    %c0_31 = arith.constant 0 : index
    %33 = vector.load %arg2[%c5, %c0_30, %c0_31] : memref<9x32x16xbf16, #tpu.memory_space<vmem>>, vector<1x32x16xbf16>
    %34 = vector.shape_cast %33 : vector<1x32x16xbf16> to vector<32x16xbf16>
    %cst_32 = arith.constant dense<0.000000e+00> : vector<32x49xf32>
    %35 = tpu.matmul %34, %32, %cst_32 {dimension_numbers = #tpu.dot_dimension_numbers<[1], [0], [0], [1], [0, 0, 1, 1], [], []>} : vector<32x16xbf16>, vector<16x49xbf16>, vector<32x49xf32> -> vector<32x49xf32>
    %36 = arith.addf %30, %35 : vector<32x49xf32>
    %c0_33 = arith.constant 0 : index
    %c0_34 = arith.constant 0 : index
    %c14 = arith.constant 14 : index
    %37 = vector.load %arg1[%c0_33, %c0_34, %c14] : memref<1x16x65xbf16, #tpu.memory_space<vmem>>, vector<1x16x49xbf16>
    %38 = vector.shape_cast %37 : vector<1x16x49xbf16> to vector<16x49xbf16>
    %c6 = arith.constant 6 : index
    %c0_35 = arith.constant 0 : index
    %c0_36 = arith.constant 0 : index
    %39 = vector.load %arg2[%c6, %c0_35, %c0_36] : memref<9x32x16xbf16, #tpu.memory_space<vmem>>, vector<1x32x16xbf16>
    %40 = vector.shape_cast %39 : vector<1x32x16xbf16> to vector<32x16xbf16>
    %cst_37 = arith.constant dense<0.000000e+00> : vector<32x49xf32>
    %41 = tpu.matmul %40, %38, %cst_37 {dimension_numbers = #tpu.dot_dimension_numbers<[1], [0], [0], [1], [0, 0, 1, 1], [], []>} : vector<32x16xbf16>, vector<16x49xbf16>, vector<32x49xf32> -> vector<32x49xf32>
    %42 = arith.addf %36, %41 : vector<32x49xf32>
    %c0_38 = arith.constant 0 : index
    %c0_39 = arith.constant 0 : index
    %c15 = arith.constant 15 : index
    %43 = vector.load %arg1[%c0_38, %c0_39, %c15] : memref<1x16x65xbf16, #tpu.memory_space<vmem>>, vector<1x16x49xbf16>
    %44 = vector.shape_cast %43 : vector<1x16x49xbf16> to vector<16x49xbf16>
    %c7_40 = arith.constant 7 : index
    %c0_41 = arith.constant 0 : index
    %c0_42 = arith.constant 0 : index
    %45 = vector.load %arg2[%c7_40, %c0_41, %c0_42] : memref<9x32x16xbf16, #tpu.memory_space<vmem>>, vector<1x32x16xbf16>
    %46 = vector.shape_cast %45 : vector<1x32x16xbf16> to vector<32x16xbf16>
    %cst_43 = arith.constant dense<0.000000e+00> : vector<32x49xf32>
    %47 = tpu.matmul %46, %44, %cst_43 {dimension_numbers = #tpu.dot_dimension_numbers<[1], [0], [0], [1], [0, 0, 1, 1], [], []>} : vector<32x16xbf16>, vector<16x49xbf16>, vector<32x49xf32> -> vector<32x49xf32>
    %48 = arith.addf %42, %47 : vector<32x49xf32>
    %c0_44 = arith.constant 0 : index
    %c0_45 = arith.constant 0 : index
    %c16 = arith.constant 16 : index
    %49 = vector.load %arg1[%c0_44, %c0_45, %c16] : memref<1x16x65xbf16, #tpu.memory_space<vmem>>, vector<1x16x49xbf16>
    %50 = vector.shape_cast %49 : vector<1x16x49xbf16> to vector<16x49xbf16>
    %c8_46 = arith.constant 8 : index
    %c0_47 = arith.constant 0 : index
    %c0_48 = arith.constant 0 : index
    %51 = vector.load %arg2[%c8_46, %c0_47, %c0_48] : memref<9x32x16xbf16, #tpu.memory_space<vmem>>, vector<1x32x16xbf16>
    %52 = vector.shape_cast %51 : vector<1x32x16xbf16> to vector<32x16xbf16>
    %cst_49 = arith.constant dense<0.000000e+00> : vector<32x49xf32>
    %53 = tpu.matmul %52, %50, %cst_49 {dimension_numbers = #tpu.dot_dimension_numbers<[1], [0], [0], [1], [0, 0, 1, 1], [], []>} : vector<32x16xbf16>, vector<16x49xbf16>, vector<32x49xf32> -> vector<32x49xf32>
    %54 = arith.addf %48, %53 : vector<32x49xf32>
    %c0_50 = arith.constant 0 : index
    %c0_51 = arith.constant 0 : index
    %55 = vector.load %arg3[%c0_50, %c0_51] : memref<32x1xf32, #tpu.memory_space<vmem>>, vector<32x1xf32>
    %56 = vector.broadcast %55 : vector<32x1xf32> to vector<32x49xf32>
    %57 = arith.addf %54, %56 : vector<32x49xf32>
    %c0_52 = arith.constant 0 : index
    %c0_53 = arith.constant 0 : index
    %58 = vector.load %arg4[%c0_52, %c0_53] : memref<32x1xf32, #tpu.memory_space<vmem>>, vector<32x1xf32>
    %cst_54 = arith.constant 0.000000e+00 : f32
    %59 = vector.broadcast %cst_54 : f32 to vector<32x49xf32>
    %60 = arith.cmpf ogt, %57, %59 : vector<32x49xf32>
    %61 = vector.broadcast %58 : vector<32x1xf32> to vector<32x49xf32>
    %62 = arith.mulf %57, %61 : vector<32x49xf32>
    %63 = arith.select %60, %57, %62 : vector<32x49xi1>, vector<32x49xf32>
    %c0_55 = arith.constant 0 : index
    %c0_56 = arith.constant 0 : index
    %64 = vector.load %arg5[%c0_55, %c0_56] : memref<6x32xbf16, #tpu.memory_space<vmem>>, vector<6x32xbf16>
    %65 = arith.truncf %63 : vector<32x49xf32> to vector<32x49xbf16>
    %cst_57 = arith.constant dense<0.000000e+00> : vector<6x49xf32>
    %66 = tpu.matmul %64, %65, %cst_57 {dimension_numbers = #tpu.dot_dimension_numbers<[1], [0], [0], [1], [0, 0, 1, 1], [], []>} : vector<6x32xbf16>, vector<32x49xbf16>, vector<6x49xf32> -> vector<6x49xf32>
    %c0_58 = arith.constant 0 : index
    %c0_59 = arith.constant 0 : index
    %67 = vector.load %arg6[%c0_58, %c0_59] : memref<6x1xf32, #tpu.memory_space<vmem>>, vector<6x1xf32>
    %68 = vector.broadcast %67 : vector<6x1xf32> to vector<6x49xf32>
    %69 = arith.addf %66, %68 : vector<6x49xf32>
    %70 = vector.extract_strided_slice %69 {offsets = [0, 0], sizes = [1, 49], strides = [1, 1]} : vector<6x49xf32> to vector<1x49xf32>
    %71 = vector.extract_strided_slice %69 {offsets = [1, 0], sizes = [1, 49], strides = [1, 1]} : vector<6x49xf32> to vector<1x49xf32>
    %72 = arith.maximumf %70, %71 : vector<1x49xf32>
    %73 = arith.subf %70, %72 : vector<1x49xf32>
    %74 = math.exp %73 : vector<1x49xf32>
    %75 = arith.subf %71, %72 : vector<1x49xf32>
    %76 = math.exp %75 : vector<1x49xf32>
    %77 = arith.addf %74, %76 : vector<1x49xf32>
    %cst_60 = arith.constant 1.000000e+00 : f32
    %78 = vector.broadcast %cst_60 : f32 to vector<1x49xf32>
    %79 = arith.divf %78, %77 : vector<1x49xf32>
    %80 = arith.mulf %74, %79 : vector<1x49xf32>
    %81 = arith.mulf %76, %79 : vector<1x49xf32>
    %82 = vector.extract_strided_slice %69 {offsets = [2, 0], sizes = [4, 49], strides = [1, 1]} : vector<6x49xf32> to vector<4x49xf32>
    %83 = tpu.concatenate %80, %81, %82 in 0 : vector<1x49xf32>, vector<1x49xf32>, vector<4x49xf32> -> vector<6x49xf32>
    %c0_61 = arith.constant 0 : index
    %c0_62 = arith.constant 0 : index
    %c0_63 = arith.constant 0 : index
    %84 = vector.load %arg7[%c0_61, %c0_62, %c0_63] : memref<1x6x49xf32, #tpu.memory_space<vmem>>, vector<1x6x49xf32>
    %85 = vector.shape_cast %84 : vector<1x6x49xf32> to vector<6x49xf32>
    %86 = vector.shape_cast %83 : vector<6x49xf32> to vector<1x6x49xf32>
    tpu.vector_store %arg7[%c0_61, %c0_62, %c0_63], %86 {strides = array<i32>} : memref<1x6x49xf32, #tpu.memory_space<vmem>>, vector<1x6x49xf32>,
    return
  }
  func.func @transform_0(%arg0: i32) -> (i32, i32, i32) {
    %c0_i32 = arith.constant 0 : i32
    %c0_i32_0 = arith.constant 0 : i32
    %c0_i32_1 = arith.constant 0 : i32
    return %arg0, %c0_i32, %c0_i32_0 : i32, i32, i32
  }
  func.func @transform_1(%arg0: i32) -> (i32, i32, i32) {
    %c0_i32 = arith.constant 0 : i32
    %c0_i32_0 = arith.constant 0 : i32
    %c0_i32_1 = arith.constant 0 : i32
    %c0_i32_2 = arith.constant 0 : i32
    return %c0_i32, %c0_i32_0, %c0_i32_1 : i32, i32, i32
  }
  func.func @transform_2(%arg0: i32) -> (i32, i32) {
    %c0_i32 = arith.constant 0 : i32
    %c0_i32_0 = arith.constant 0 : i32
    %c0_i32_1 = arith.constant 0 : i32
    return %c0_i32, %c0_i32_0 : i32, i32
  }
  func.func @transform_3(%arg0: i32) -> (i32, i32) {
    %c0_i32 = arith.constant 0 : i32
    %c0_i32_0 = arith.constant 0 : i32
    %c0_i32_1 = arith.constant 0 : i32
    return %c0_i32, %c0_i32_0 : i32, i32
  }
  func.func @transform_4(%arg0: i32) -> (i32, i32) {
    %c0_i32 = arith.constant 0 : i32
    %c0_i32_0 = arith.constant 0 : i32
    %c0_i32_1 = arith.constant 0 : i32
    return %c0_i32, %c0_i32_0 : i32, i32
  }
  func.func @transform_5(%arg0: i32) -> (i32, i32) {
    %c0_i32 = arith.constant 0 : i32
    %c0_i32_0 = arith.constant 0 : i32
    %c0_i32_1 = arith.constant 0 : i32
    return %c0_i32, %c0_i32_0 : i32, i32
  }
  func.func @transform_6(%arg0: i32) -> (i32, i32, i32) {
    %c0_i32 = arith.constant 0 : i32
    %c0_i32_0 = arith.constant 0 : i32
    %c0_i32_1 = arith.constant 0 : i32
    return %arg0, %c0_i32, %c0_i32_0 : i32, i32, i32
  }
}

</mosaic_0001>

<llo_original>
// kernel: pnet_forward.3
$region0: #{pnet_forward.3}
  #allocation0 [shape = 'u32[]', space=smem, size = 0x4, offset = 0x4, fixed_abs, tag = 'smem constant byte address 0x4 - core index']
  #allocation1 [shape = 'u32[144,128]{1,0:T(1,128)}', space=vmem, size = 0x12000, scoped, tag = 'internal scratch']
  %s0 = inlined_call_operand.vmem [shape: bf16[2,3,307], index: 0, kind: input, shape index: {}]
  %s1 = inlined_call_operand.vmem [shape: bf16[9,10,3], index: 1, kind: input, shape index: {}]
  %s2 = inlined_call_operand.vmem [shape: f32[10,1], index: 2, kind: input, shape index: {}]
  %s3 = inlined_call_operand.vmem [shape: f32[10,1], index: 3, kind: input, shape index: {}]
  %s4 = inlined_call_operand.vmem [shape: f32[1,273], index: 4, kind: input, shape index: {}]
  %s5 = inlined_call_operand.vmem [shape: bf16[2,10,256], index: 5, kind: output, shape index: {}]
  %s6 = sld [smem:[#allocation0]]
  $region53: #{pnet_forward.3} parent=0
    _
  %s8 = ssub.s32 1, %s6
  %s9 = scalar_select 0, %s8, %s6
  loop: start=0, step=1, limit=4
  $region2: #{pnet_forward.3} parent=0 // loop_pre_header
    _
  $region3: #{pnet_forward.3} parent=0 // loop_header
    %s11 = sphi 0, %s15
    %p12 = scmp.ge.s32.totalorder %s11, 4
    %s21 = sphi 0, %s23
    %s24 = sphi 0, %s21
    %s25 = sphi 0, %s24
    %s41 = sphi 0, %s25
    %s45 = sphi 0, %s45
    %s47 = sphi 0, %s45
    %s48 = sphi 0, %s47
    %s62 = sphi 0, %s48
    %s66 = sphi 0, %s66
    %s68 = sphi 0, %s66
    %s69 = sphi 0, %s68
    %s83 = sphi 0, %s69
    %s87 = sphi 0, %s87
    %s89 = sphi 0, %s87
    %s90 = sphi 0, %s89
    %s104 = sphi 0, %s90
    %s108 = sphi 0, %s108
    %s110 = sphi 0, %s108
    %s111 = sphi 0, %s110
    %s125 = sphi 0, %s111
    %s131 = sphi 0, %s133
    %s134 = sphi 0, %s131
    %s135 = sphi 0, %s134
    %s151 = sphi 0, %s135
  $region4: #{pnet_forward.3} parent=0 // loop_header_branch
    %14 = sbr.rel (%p12) target = $region8
  $region5: #{pnet_forward.3} parent=0 // loop_body
    %s16 = ssub.s32 %s11, 1
    %s17 = ssub.s32 %s11, 2
    %s18 = sadd.s32 %s11, 1
    %s19 = ssub.s32 %s11, %s18
    %p20 = scmp.eq.s32.totalorder %s19, 0
    %s22 = sadd.s32 %s21, 1
    %s23 = scalar_select %p20, %s21, %s22
    %p26 = pneg %p20
    %p27 = scmp.eq.s32.totalorder %s11, 1
    %p28 = por %p26, %p27
    %p29 = scmp.ne.s32.totalorder %s21, %s24
    %p30 = scmp.eq.s32.totalorder %s11, 0
    %p31 = por %p29, %p30
    %p32 = scmp.ne.s32.totalorder %s21, %s24
    %p33 = scmp.eq.s32.totalorder %s16, 1
    %p34 = por %p32, %p33
    %p35 = scmp.ne.s32.totalorder %s24, %s25
    %p36 = scmp.eq.s32.totalorder %s16, 0
    %p37 = por %p35, %p36
    %p38 = scmp.ne.s32.totalorder %s24, %s25
    %p39 = scmp.eq.s32.totalorder %s17, 1
    %p40 = por %p38, %p39
    %p42 = scmp.ne.s32.totalorder %s25, %s41
    %p43 = scmp.eq.s32.totalorder %s17, 0
    %p44 = por %p42, %p43
    %s46 = sadd.s32 %s45, 1
    %p49 = scmp.eq.s32.totalorder %s11, 1
    %p50 = scmp.ne.s32.totalorder %s45, %s47
    %p51 = scmp.eq.s32.totalorder %s11, 0
    %p52 = por %p50, %p51
    %p53 = scmp.ne.s32.totalorder %s45, %s47
    %p54 = scmp.eq.s32.totalorder %s16, 1
    %p55 = por %p53, %p54
    %p56 = scmp.ne.s32.totalorder %s47, %s48
    %p57 = scmp.eq.s32.totalorder %s16, 0
    %p58 = por %p56, %p57
    %p59 = scmp.ne.s32.totalorder %s47, %s48
    %p60 = scmp.eq.s32.totalorder %s17, 1
    %p61 = por %p59, %p60
    %p63 = scmp.ne.s32.totalorder %s48, %s62
    %p64 = scmp.eq.s32.totalorder %s17, 0
    %p65 = por %p63, %p64
    %s67 = sadd.s32 %s66, 1
    %p70 = scmp.eq.s32.totalorder %s11, 1
    %p71 = scmp.ne.s32.totalorder %s66, %s68
    %p72 = scmp.eq.s32.totalorder %s11, 0
    %p73 = por %p71, %p72
    %p74 = scmp.ne.s32.totalorder %s66, %s68
    %p75 = scmp.eq.s32.totalorder %s16, 1
    %p76 = por %p74, %p75
    %p77 = scmp.ne.s32.totalorder %s68, %s69
    %p78 = scmp.eq.s32.totalorder %s16, 0
    %p79 = por %p77, %p78
    %p80 = scmp.ne.s32.totalorder %s68, %s69
    %p81 = scmp.eq.s32.totalorder %s17, 1
    %p82 = por %p80, %p81
    %p84 = scmp.ne.s32.totalorder %s69, %s83
    %p85 = scmp.eq.s32.totalorder %s17, 0
    %p86 = por %p84, %p85
    %s88 = sadd.s32 %s87, 1
    %p91 = scmp.eq.s32.totalorder %s11, 1
    %p92 = scmp.ne.s32.totalorder %s87, %s89
    %p93 = scmp.eq.s32.totalorder %s11, 0
    %p94 = por %p92, %p93
    %p95 = scmp.ne.s32.totalorder %s87, %s89
    %p96 = scmp.eq.s32.totalorder %s16, 1
    %p97 = por %p95, %p96
    %p98 = scmp.ne.s32.totalorder %s89, %s90
    %p99 = scmp.eq.s32.totalorder %s16, 0
    %p100 = por %p98, %p99
    %p101 = scmp.ne.s32.totalorder %s89, %s90
    %p102 = scmp.eq.s32.totalorder %s17, 1
    %p103 = por %p101, %p102
    %p105 = scmp.ne.s32.totalorder %s90, %s104
    %p106 = scmp.eq.s32.totalorder %s17, 0
    %p107 = por %p105, %p106
    %s109 = sadd.s32 %s108, 1
    %p112 = scmp.eq.s32.totalorder %s11, 1
    %p113 = scmp.ne.s32.totalorder %s108, %s110
    %p114 = scmp.eq.s32.totalorder %s11, 0
    %p115 = por %p113, %p114
    %p116 = scmp.ne.s32.totalorder %s108, %s110
    %p117 = scmp.eq.s32.totalorder %s16, 1
    %p118 = por %p116, %p117
    %p119 = scmp.ne.s32.totalorder %s110, %s111
    %p120 = scmp.eq.s32.totalorder %s16, 0
    %p121 = por %p119, %p120
    %p122 = scmp.ne.s32.totalorder %s110, %s111
    %p123 = scmp.eq.s32.totalorder %s17, 1
    %p124 = por %p122, %p123
    %p126 = scmp.ne.s32.totalorder %s111, %s125
    %p127 = scmp.eq.s32.totalorder %s17, 0
    %p128 = por %p126, %p127
    %s129 = ssub.s32 %s11, %s18
    %p130 = scmp.eq.s32.totalorder %s129, 0
    %s132 = sadd.s32 %s131, 1
    %s133 = scalar_select %p130, %s131, %s132
    %p136 = pneg %p130
    %p137 = scmp.eq.s32.totalorder %s11, 1
    %p138 = por %p136, %p137
    %p139 = scmp.ne.s32.totalorder %s131, %s134
    %p140 = scmp.eq.s32.totalorder %s11, 0
    %p141 = por %p139, %p140
    %p142 = scmp.ne.s32.totalorder %s131, %s134
    %p143 = scmp.eq.s32.totalorder %s16, 1
    %p144 = por %p142, %p143
    %p145 = scmp.ne.s32.totalorder %s134, %s135
    %p146 = scmp.eq.s32.totalorder %s16, 0
    %p147 = por %p145, %p146
    %p148 = scmp.ne.s32.totalorder %s134, %s135
    %p149 = scmp.eq.s32.totalorder %s17, 1
    %p150 = por %p148, %p149
    %p152 = scmp.ne.s32.totalorder %s135, %s151
    %p153 = scmp.eq.s32.totalorder %s17, 0
    %p154 = por %p152, %p153
    %p155 = scmp.le.s32.totalorder 1, %s11
    %p156 = scmp.lt.s32.totalorder %s11, 3
    %p157 = pnand %p155, %p156
    %p158 = pneg %p157
    // Predicated region
    $region9: #{pnet_forward.3} parent=5 // pred_check
      _
    $region10: #{pnet_forward.3} parent=5 // pred_check_branch
      %160 = sbr.rel (%p157) target = $region12
    $region11: #{pnet_forward.3} parent=5 // pred_region
      %s161 = ssub.s32 %s11, 1
      // Predicated region
      $region13: #{pnet_forward.3} parent=11 // pred_check
        %p162 = pneg %p58
      $region14: #{pnet_forward.3} parent=11 // pred_check_branch
        %164 = sbr.rel (%p162) target = $region16
      $region15: #{pnet_forward.3} parent=11 // pred_region
        _
      $region16: #{pnet_forward.3} parent=11 // pred_fallthru
        _
      // Predicated region
      $region17: #{pnet_forward.3} parent=11 // pred_check
        %p165 = pneg %p79
      $region18: #{pnet_forward.3} parent=11 // pred_check_branch
        %167 = sbr.rel (%p165) target = $region20
      $region19: #{pnet_forward.3} parent=11 // pred_region
        _
      $region20: #{pnet_forward.3} parent=11 // pred_fallthru
        _
      // Predicated region
      $region21: #{pnet_forward.3} parent=11 // pred_check
        %p168 = pneg %p100
      $region22: #{pnet_forward.3} parent=11 // pred_check_branch
        %170 = sbr.rel (%p168) target = $region24
      $region23: #{pnet_forward.3} parent=11 // pred_region
        _
      $region24: #{pnet_forward.3} parent=11 // pred_fallthru
        _
      // Predicated region
      $region25: #{pnet_forward.3} parent=11 // pred_check
        %p171 = pneg %p121
      $region26: #{pnet_forward.3} parent=11 // pred_check_branch
        %173 = sbr.rel (%p171) target = $region28
      $region27: #{pnet_forward.3} parent=11 // pred_region
        _
      $region28: #{pnet_forward.3} parent=11 // pred_fallthru
        _
    $region12: #{pnet_forward.3} parent=5 // pred_fallthru
      _
    %p174 = scmp.lt.s32.totalorder %s11, 2
    // Predicated region
    $region29: #{pnet_forward.3} parent=5 // pred_check
      %p175 = pneg %p174
    $region30: #{pnet_forward.3} parent=5 // pred_check_branch
      %177 = sbr.rel (%p175) target = $region32
    $region31: #{pnet_forward.3} parent=5 // pred_region
      // Predicated region
      $region33: #{pnet_forward.3} parent=31 // pred_check
        %p178 = pneg %p31
      $region34: #{pnet_forward.3} parent=31 // pred_check_branch
        %180 = sbr.rel (%p178) target = $region36
      $region35: #{pnet_forward.3} parent=31 // pred_region
        %p181 = scmp.lt.s32.totalorder %s11, 1
        %s182 = scalar_select %p181, %s11, 1
        %s183 = smul.addr %s182, 3
        %s184 = smul.addr %s183, 2
        %s185 = scalar_lea.vmem %s0, %s184
      $region36: #{pnet_forward.3} parent=31 // pred_fallthru
        _
    $region32: #{pnet_forward.3} parent=5 // pred_fallthru
      _
    %p186 = scmp.le.s32.totalorder 1, %s11
    %p187 = scmp.lt.s32.totalorder %s11, 3
    %p188 = pnand %p186, %p187
    %p189 = pneg %p188
    // Predicated region
    $region37: #{pnet_forward.3} parent=5 // pred_check
      _
    $region38: #{pnet_forward.3} parent=5 // pred_check_branch
      %191 = sbr.rel (%p188) target = $region40
    $region39: #{pnet_forward.3} parent=5 // pred_region
      %s192 = ssub.s32 %s11, 1
      %p193 = scmp.lt.s32.totalorder %s16, 1
      %s194 = scalar_select %p193, %s16, 1
      %s195 = smul.addr %s194, 3
      %s196 = smul.addr %s195, 2
      %s197 = scalar_lea.vmem %s0, %s196
      %p198 = pneg %p37
      %p199 = pneg %p34
      %p200 = pneg %p58
      %p201 = pneg %p55
      %p202 = pneg %p79
      %p203 = pneg %p76
      %p204 = pneg %p100
      %p205 = pneg %p97
      %p206 = pneg %p121
      %p207 = pneg %p118
      %p208 = pneg %p147
      %p209 = pneg %p144
      %p210 = scmp.lt.s32.totalorder %s16, 1
      %s211 = scalar_select %p210, %s16, 1
      %s212 = smul.addr %s211, 4
      %s213 = smul.addr %s212, 4
      %s214 = scalar_lea.vmem %s5, %s213
      %p215 = scmp.lt.s32.totalorder %s16, 1
      %s216 = scalar_select %p215, %s16, 1
      %s217 = smul.addr %s216, 3
      %s218 = smul.addr %s217, 2
      %s219 = scalar_lea.vmem %s0, %s218
      %p220 = scmp.lt.s32.totalorder %s16, 1
      %s221 = scalar_select %p220, %s16, 1
      %s222 = smul.addr %s221, 4
      %s223 = smul.addr %s222, 4
      %s224 = scalar_lea.vmem %s5, %s223
      %v226 = vld [vmem:[%s219] sm:$0x3f]
      %v227 = vld [vmem:[%s1] sm:$0xf]
      %v228 = vld [vmem:[%s1 + $0x4] sm:$0x1]
      %s229 = scalar_lea.vmem %s1, 8
      %v230 = vld [vmem:[%s229] sm:$0xf]
      %v231 = vld [vmem:[%s229 + $0x4] sm:$0x1]
      %v234 = vunpack.c.l.b16 %v230
      %v235 = vunpack.c.l.b16 %v231
      %v236 = vpack.c.b16 %v235, %v234
      %v238 = vcombine.high %v226, %v226
      %v240 = vunpack.c.l.s4 1983009808
      %v241 = vunpack.c.0.s8 %v240
      %v242 = vlaneseq
      %v243 = vshrl.u32 %v242, 7
      %v244 = vsub.s32 %v241, %v243
      %v245 = vrot.slane %v226, %v244
      %v247 = vunpack.c.l.s4 1983009808
      %v248 = vunpack.c.0.s8 %v247
      %v249 = vlaneseq
      %v250 = vshrl.u32 %v249, 7
      %v251 = vsub.s32 %v248, %v250
      %v252 = vrot.slane %v238, %v251
      %v253 = vcombine.high %v245, %v245
      %254 = vrot.lane.b32.xlu0 %v245, 127
      %v255 = vpop.permute.xlu0 %254
      %256 = vrot.lane.b32.xlu0 %v253, 127
      %v257 = vpop.permute.xlu0 %256
      %258 = vrot.lane.b32.xlu0 %v252, 127
      %v259 = vpop.permute.xlu0 %258
      %vm260 = vcmask 1039360
      %v261 = vsel %vm260, %v255, %v257
      %v262 = vsel %vm260, %v257, %v259
      %vm263 = vcmask 23552
      %v265 = vsel %vm263, %v236, 0
      %vm267 = vcmask 1040384
      %vm268 = vcmask 1041408
      %v269 = vsel %vm267, 4294967295, 65535
      %v270 = vsel %vm268, %v269, 0
      %v272 = vand.u32 %v261, %v270
      %v275 = vand.u32 %v262, %v270
      %v278 = vand.u32 %v259, %v270
      %280 = vmatprep.subr.bf16.mxu0 %v275
      %281 = vmatpush1.bf16.msra.mxu0 %v272
      %282 = vmatprep.subr.bf16.mxu0 0
      %283 = vmatpush1.bf16.msra.mxu0 0
      %284 = vmatprep.subr.bf16.mxu0 0
      %285 = vmatpush1.bf16.msra.mxu0 0
      %286 = vmatprep.subr.bf16.mxu0 0
      %287 = vmatpush1.bf16.msra.mxu0 0
      %288 = vmatprep.subr.bf16.mxu0 0
      %289 = vmatpush1.bf16.msra.mxu0 0
      %290 = vmatprep.subr.bf16.mxu0 0
      %291 = vmatpush1.bf16.msra.mxu0 0
      %292 = vmatprep.subr.bf16.mxu0 0
      %293 = vmatpush1.bf16.msra.mxu0 0
      %294 = vmatprep.subr.bf16.mxu0 0
      %295 = vmatpush1.bf16.msra.mxu0 0
      %296 = vmatprep.subr.bf16.mxu0 0
      %297 = vmatpush1.bf16.msra.mxu0 0
      %298 = vmatprep.subr.bf16.mxu0 0
      %299 = vmatpush1.bf16.msra.mxu0 0
      %300 = vmatprep.subr.bf16.mxu0 0
      %301 = vmatpush1.bf16.msra.mxu0 0
      %302 = vmatprep.subr.bf16.mxu0 0
      %303 = vmatpush1.bf16.msra.mxu0 0
      %304 = vmatprep.subr.bf16.mxu0 0
      %305 = vmatpush1.bf16.msra.mxu0 0
      %306 = vmatprep.subr.bf16.mxu0 0
      %307 = vmatpush1.bf16.msra.mxu0 0
      %308 = vmatprep.subr.bf16.mxu0 0
      %309 = vmatpush1.bf16.msra.mxu0 0
      %310 = vmatprep.subr.bf16.mxu0 0
      %311 = vmatpush1.bf16.msra.mxu0 0
      %312 = vmatprep.mubr.bf16.mxu0 0
      %313 = vmatmul.mubr.bf16.gmra.mrb[0].mxu0 %v265
      %v314 = vpop.f32.mrb[0].mxu0
      %v315 = vadd.f32 0.0, %v314
      %v316 = vpop.f32.mrb[0].mxu0
      %v317 = vadd.f32 0.0, %v316
      %v318 = vpop.f32.mrb[0].mxu0
      %v319 = vadd.f32 0.0, %v318
      %v320 = vpop.f32.mrb[0].mxu0
      %v321 = vadd.f32 0.0, %v320
      %322 = vdwg.mxu0
      %323 = vmatprep.subr.bf16.mxu0 0
      %324 = vmatpush1.bf16.msra.mxu0 %v278
      %325 = vmatprep.subr.bf16.mxu0 0
      %326 = vmatpush1.bf16.msra.mxu0 0
      %327 = vmatprep.subr.bf16.mxu0 0
      %328 = vmatpush1.bf16.msra.mxu0 0
      %329 = vmatprep.subr.bf16.mxu0 0
      %330 = vmatpush1.bf16.msra.mxu0 0
      %331 = vmatprep.subr.bf16.mxu0 0
      %332 = vmatpush1.bf16.msra.mxu0 0
      %333 = vmatprep.subr.bf16.mxu0 0
      %334 = vmatpush1.bf16.msra.mxu0 0
      %335 = vmatprep.subr.bf16.mxu0 0
      %336 = vmatpush1.bf16.msra.mxu0 0
      %337 = vmatprep.subr.bf16.mxu0 0
      %338 = vmatpush1.bf16.msra.mxu0 0
      %339 = vmatprep.subr.bf16.mxu0 0
      %340 = vmatpush1.bf16.msra.mxu0 0
      %341 = vmatprep.subr.bf16.mxu0 0
      %342 = vmatpush1.bf16.msra.mxu0 0
      %343 = vmatprep.subr.bf16.mxu0 0
      %344 = vmatpush1.bf16.msra.mxu0 0
      %345 = vmatprep.subr.bf16.mxu0 0
      %346 = vmatpush1.bf16.msra.mxu0 0
      %347 = vmatprep.subr.bf16.mxu0 0
      %348 = vmatpush1.bf16.msra.mxu0 0
      %349 = vmatprep.subr.bf16.mxu0 0
      %350 = vmatpush1.bf16.msra.mxu0 0
      %351 = vmatprep.subr.bf16.mxu0 0
      %352 = vmatpush1.bf16.msra.mxu0 0
      %353 = vmatprep.subr.bf16.mxu0 0
      %354 = vmatpush1.bf16.msra.mxu0 0
      %355 = vmatprep.mubr.bf16.mxu0 0
      %356 = vmatmul.mubr.bf16.gmra.mrb[0].mxu0 %v265
      %v357 = vpop.f32.mrb[0].mxu0
      %v358 = vadd.f32 0.0, %v357
      %v359 = vpop.f32.mrb[0].mxu0
      %v360 = vpop.f32.mrb[0].mxu0
      %v361 = vadd.f32 0.0, %v360
      %v362 = vpop.f32.mrb[0].mxu0
      %363 = vdwg.mxu0
      %v366 = vunpack.c.l.b16 %v227
      %v367 = vunpack.c.l.b16 %v228
      %v368 = vpack.c.b16 %v367, %v366
      %v370 = vsel %vm263, %v368, 0
      %v373 = vand.u32 %v245, %v270
      %v376 = vand.u32 %v253, %v270
      %v379 = vand.u32 %v252, %v270
      %381 = vmatprep.subr.bf16.mxu0 %v376
      %382 = vmatpush1.bf16.msra.mxu0 %v373
      %383 = vmatprep.subr.bf16.mxu0 0
      %384 = vmatpush1.bf16.msra.mxu0 0
      %385 = vmatprep.subr.bf16.mxu0 0
      %386 = vmatpush1.bf16.msra.mxu0 0
      %387 = vmatprep.subr.bf16.mxu0 0
      %388 = vmatpush1.bf16.msra.mxu0 0
      %389 = vmatprep.subr.bf16.mxu0 0
      %390 = vmatpush1.bf16.msra.mxu0 0
      %391 = vmatprep.subr.bf16.mxu0 0
      %392 = vmatpush1.bf16.msra.mxu0 0
      %393 = vmatprep.subr.bf16.mxu0 0
      %394 = vmatpush1.bf16.msra.mxu0 0
      %395 = vmatprep.subr.bf16.mxu0 0
      %396 = vmatpush1.bf16.msra.mxu0 0
      %397 = vmatprep.subr.bf16.mxu0 0
      %398 = vmatpush1.bf16.msra.mxu0 0
      %399 = vmatprep.subr.bf16.mxu0 0
      %400 = vmatpush1.bf16.msra.mxu0 0
      %401 = vmatprep.subr.bf16.mxu0 0
      %402 = vmatpush1.bf16.msra.mxu0 0
      %403 = vmatprep.subr.bf16.mxu0 0
      %404 = vmatpush1.bf16.msra.mxu0 0
      %405 = vmatprep.subr.bf16.mxu0 0
      %406 = vmatpush1.bf16.msra.mxu0 0
      %407 = vmatprep.subr.bf16.mxu0 0
      %408 = vmatpush1.bf16.msra.mxu0 0
      %409 = vmatprep.subr.bf16.mxu0 0
      %410 = vmatpush1.bf16.msra.mxu0 0
      %411 = vmatprep.subr.bf16.mxu0 0
      %412 = vmatpush1.bf16.msra.mxu0 0
      %413 = vmatprep.mubr.bf16.mxu0 0
      %414 = vmatmul.mubr.bf16.gmra.mrb[0].mxu0 %v370
      %v415 = vpop.f32.mrb[0].mxu0
      %v416 = vadd.f32 %v315, %v415
      %v417 = vpop.f32.mrb[0].mxu0
      %v418 = vadd.f32 %v317, %v417
      %v419 = vpop.f32.mrb[0].mxu0
      %v420 = vadd.f32 %v319, %v419
      %v421 = vpop.f32.mrb[0].mxu0
      %v422 = vadd.f32 %v321, %v421
      %423 = vdwg.mxu0
      %424 = vmatprep.subr.bf16.mxu0 0
      %425 = vmatpush1.bf16.msra.mxu0 %v379
      %426 = vmatprep.subr.bf16.mxu0 0
      %427 = vmatpush1.bf16.msra.mxu0 0
      %428 = vmatprep.subr.bf16.mxu0 0
      %429 = vmatpush1.bf16.msra.mxu0 0
      %430 = vmatprep.subr.bf16.mxu0 0
      %431 = vmatpush1.bf16.msra.mxu0 0
      %432 = vmatprep.subr.bf16.mxu0 0
      %433 = vmatpush1.bf16.msra.mxu0 0
      %434 = vmatprep.subr.bf16.mxu0 0
      %435 = vmatpush1.bf16.msra.mxu0 0
      %436 = vmatprep.subr.bf16.mxu0 0
      %437 = vmatpush1.bf16.msra.mxu0 0
      %438 = vmatprep.subr.bf16.mxu0 0
      %439 = vmatpush1.bf16.msra.mxu0 0
      %440 = vmatprep.subr.bf16.mxu0 0
      %441 = vmatpush1.bf16.msra.mxu0 0
      %442 = vmatprep.subr.bf16.mxu0 0
      %443 = vmatpush1.bf16.msra.mxu0 0
      %444 = vmatprep.subr.bf16.mxu0 0
      %445 = vmatpush1.bf16.msra.mxu0 0
      %446 = vmatprep.subr.bf16.mxu0 0
      %447 = vmatpush1.bf16.msra.mxu0 0
      %448 = vmatprep.subr.bf16.mxu0 0
      %449 = vmatpush1.bf16.msra.mxu0 0
      %450 = vmatprep.subr.bf16.mxu0 0
      %451 = vmatpush1.bf16.msra.mxu0 0
      %452 = vmatprep.subr.bf16.mxu0 0
      %453 = vmatpush1.bf16.msra.mxu0 0
      %454 = vmatprep.subr.bf16.mxu0 0
      %455 = vmatpush1.bf16.msra.mxu0 0
      %456 = vmatprep.mubr.bf16.mxu0 0
      %457 = vmatmul.mubr.bf16.gmra.mrb[0].mxu0 %v370
      %v458 = vpop.f32.mrb[0].mxu0
      %v459 = vadd.f32 %v358, %v458
      %v460 = vpop.f32.mrb[0].mxu0
      %v461 = vpop.f32.mrb[0].mxu0
      %v462 = vadd.f32 %v361, %v461
      %v463 = vpop.f32.mrb[0].mxu0
      %464 = vdwg.mxu0
      %v465 = vld [vmem:[%s219] sm:$0x3f]
      %s466 = scalar_lea.vmem %s1, 16
      %v467 = vld [vmem:[%s466] sm:$0xf]
      %v468 = vld [vmem:[%s466 + $0x4] sm:$0x1]
      %v471 = vunpack.c.l.b16 %v467
      %v472 = vunpack.c.l.b16 %v468
      %v473 = vpack.c.b16 %v472, %v471
      %v475 = vcombine.high %v465, %v465
      %v477 = vunpack.c.l.s4 1983009808
      %v478 = vunpack.c.0.s8 %v477
      %v479 = vlaneseq
      %v480 = vshrl.u32 %v479, 7
      %v481 = vsub.s32 %v478, %v480
      %v482 = vrot.slane %v465, %v481
      %v484 = vunpack.c.l.s4 1983009808
      %v485 = vunpack.c.0.s8 %v484
      %v486 = vlaneseq
      %v487 = vshrl.u32 %v486, 7
      %v488 = vsub.s32 %v485, %v487
      %v489 = vrot.slane %v475, %v488
      %v490 = vcombine.high %v482, %v482
      %491 = vrot.lane.b32.xlu0 %v482, 126
      %v492 = vpop.permute.xlu0 %491
      %493 = vrot.lane.b32.xlu0 %v490, 126
      %v494 = vpop.permute.xlu0 %493
      %495 = vrot.lane.b32.xlu0 %v489, 126
      %v496 = vpop.permute.xlu0 %495
      %vm497 = vcmask 1031168
      %v498 = vsel %vm497, %v492, %v494
      %v499 = vsel %vm497, %v494, %v496
      %v501 = vsel %vm263, %v473, 0
      %v504 = vand.u32 %v498, %v270
      %v507 = vand.u32 %v499, %v270
      %v510 = vand.u32 %v496, %v270
      %512 = vmatprep.subr.bf16.mxu0 %v507
      %513 = vmatpush1.bf16.msra.mxu0 %v504
      %514 = vmatprep.subr.bf16.mxu0 0
      %515 = vmatpush1.bf16.msra.mxu0 0
      %516 = vmatprep.subr.bf16.mxu0 0
      %517 = vmatpush1.bf16.msra.mxu0 0
      %518 = vmatprep.subr.bf16.mxu0 0
      %519 = vmatpush1.bf16.msra.mxu0 0
      %520 = vmatprep.subr.bf16.mxu0 0
      %521 = vmatpush1.bf16.msra.mxu0 0
      %522 = vmatprep.subr.bf16.mxu0 0
      %523 = vmatpush1.bf16.msra.mxu0 0
      %524 = vmatprep.subr.bf16.mxu0 0
      %525 = vmatpush1.bf16.msra.mxu0 0
      %526 = vmatprep.subr.bf16.mxu0 0
      %527 = vmatpush1.bf16.msra.mxu0 0
      %528 = vmatprep.subr.bf16.mxu0 0
      %529 = vmatpush1.bf16.msra.mxu0 0
      %530 = vmatprep.subr.bf16.mxu0 0
      %531 = vmatpush1.bf16.msra.mxu0 0
      %532 = vmatprep.subr.bf16.mxu0 0
      %533 = vmatpush1.bf16.msra.mxu0 0
      %534 = vmatprep.subr.bf16.mxu0 0
      %535 = vmatpush1.bf16.msra.mxu0 0
      %536 = vmatprep.subr.bf16.mxu0 0
      %537 = vmatpush1.bf16.msra.mxu0 0
      %538 = vmatprep.subr.bf16.mxu0 0
      %539 = vmatpush1.bf16.msra.mxu0 0
      %540 = vmatprep.subr.bf16.mxu0 0
      %541 = vmatpush1.bf16.msra.mxu0 0
      %542 = vmatprep.subr.bf16.mxu0 0
      %543 = vmatpush1.bf16.msra.mxu0 0
      %544 = vmatprep.mubr.bf16.mxu0 0
      %545 = vmatmul.mubr.bf16.gmra.mrb[0].mxu0 %v501
      %v546 = vpop.f32.mrb[0].mxu0
      %v547 = vadd.f32 0.0, %v546
      %v548 = vpop.f32.mrb[0].mxu0
      %v549 = vadd.f32 0.0, %v548
      %v550 = vpop.f32.mrb[0].mxu0
      %v551 = vadd.f32 0.0, %v550
      %v552 = vpop.f32.mrb[0].mxu0
      %v553 = vadd.f32 0.0, %v552
      %554 = vdwg.mxu0
      %555 = vmatprep.subr.bf16.mxu0 0
      %556 = vmatpush1.bf16.msra.mxu0 %v510
      %557 = vmatprep.subr.bf16.mxu0 0
      %558 = vmatpush1.bf16.msra.mxu0 0
      %559 = vmatprep.subr.bf16.mxu0 0
      %560 = vmatpush1.bf16.msra.mxu0 0
      %561 = vmatprep.subr.bf16.mxu0 0
      %562 = vmatpush1.bf16.msra.mxu0 0
      %563 = vmatprep.subr.bf16.mxu0 0
      %564 = vmatpush1.bf16.msra.mxu0 0
      %565 = vmatprep.subr.bf16.mxu0 0
      %566 = vmatpush1.bf16.msra.mxu0 0
      %567 = vmatprep.subr.bf16.mxu0 0
      %568 = vmatpush1.bf16.msra.mxu0 0
      %569 = vmatprep.subr.bf16.mxu0 0
      %570 = vmatpush1.bf16.msra.mxu0 0
      %571 = vmatprep.subr.bf16.mxu0 0
      %572 = vmatpush1.bf16.msra.mxu0 0
      %573 = vmatprep.subr.bf16.mxu0 0
      %574 = vmatpush1.bf16.msra.mxu0 0
      %575 = vmatprep.subr.bf16.mxu0 0
      %576 = vmatpush1.bf16.msra.mxu0 0
      %577 = vmatprep.subr.bf16.mxu0 0
      %578 = vmatpush1.bf16.msra.mxu0 0
      %579 = vmatprep.subr.bf16.mxu0 0
      %580 = vmatpush1.bf16.msra.mxu0 0
      %581 = vmatprep.subr.bf16.mxu0 0
      %582 = vmatpush1.bf16.msra.mxu0 0
      %583 = vmatprep.subr.bf16.mxu0 0
      %584 = vmatpush1.bf16.msra.mxu0 0
      %585 = vmatprep.subr.bf16.mxu0 0
      %586 = vmatpush1.bf16.msra.mxu0 0
      %587 = vmatprep.mubr.bf16.mxu0 0
      %588 = vmatmul.mubr.bf16.gmra.mrb[0].mxu0 %v501
      %v589 = vpop.f32.mrb[0].mxu0
      %v590 = vadd.f32 0.0, %v589
      %v591 = vpop.f32.mrb[0].mxu0
      %v592 = vpop.f32.mrb[0].mxu0
      %v593 = vadd.f32 0.0, %v592
      %v594 = vpop.f32.mrb[0].mxu0
      %595 = vdwg.mxu0
      %v596 = vadd.f32 %v416, %v547
      %v597 = vadd.f32 %v418, %v549
      %v598 = vadd.f32 %v459, %v590
      %v599 = vadd.f32 %v420, %v551
      %v600 = vadd.f32 %v422, %v553
      %v601 = vadd.f32 %v462, %v593
      %v602 = vld [vmem:[%s219] sm:$0x3f]
      %s603 = scalar_lea.vmem %s1, 24
      %v604 = vld [vmem:[%s603] sm:$0xf]
      %v605 = vld [vmem:[%s603 + $0x4] sm:$0x1]
      %v608 = vunpack.c.l.b16 %v604
      %v609 = vunpack.c.l.b16 %v605
      %v610 = vpack.c.b16 %v609, %v608
      %v612 = vcombine.high %v602, %v602
      %v614 = vunpack.c.l.s4 1983009808
      %v615 = vunpack.c.0.s8 %v614
      %v616 = vlaneseq
      %v617 = vshrl.u32 %v616, 7
      %v618 = vsub.s32 %v615, %v617
      %v619 = vrot.slane %v602, %v618
      %v621 = vunpack.c.l.s4 1983009808
      %v622 = vunpack.c.0.s8 %v621
      %v623 = vlaneseq
      %v624 = vshrl.u32 %v623, 7
      %v625 = vsub.s32 %v622, %v624
      %v626 = vrot.slane %v612, %v625
      %v627 = vcombine.high %v619, %v619
      %628 = vrot.lane.b32.xlu0 %v619, 112
      %v629 = vpop.permute.xlu0 %628
      %630 = vrot.lane.b32.xlu0 %v627, 112
      %v631 = vpop.permute.xlu0 %630
      %632 = vrot.lane.b32.xlu0 %v626, 112
      %v633 = vpop.permute.xlu0 %632
      %vm634 = vcmask 916480
      %v635 = vsel %vm634, %v629, %v631
      %v636 = vsel %vm634, %v631, %v633
      %v638 = vsel %vm263, %v610, 0
      %v641 = vand.u32 %v635, %v270
      %v644 = vand.u32 %v636, %v270
      %v647 = vand.u32 %v633, %v270
      %649 = vmatprep.subr.bf16.mxu0 %v644
      %650 = vmatpush1.bf16.msra.mxu0 %v641
      %651 = vmatprep.subr.bf16.mxu0 0
      %652 = vmatpush1.bf16.msra.mxu0 0
      %653 = vmatprep.subr.bf16.mxu0 0
      %654 = vmatpush1.bf16.msra.mxu0 0
      %655 = vmatprep.subr.bf16.mxu0 0
      %656 = vmatpush1.bf16.msra.mxu0 0
      %657 = vmatprep.subr.bf16.mxu0 0
      %658 = vmatpush1.bf16.msra.mxu0 0
      %659 = vmatprep.subr.bf16.mxu0 0
      %660 = vmatpush1.bf16.msra.mxu0 0
      %661 = vmatprep.subr.bf16.mxu0 0
      %662 = vmatpush1.bf16.msra.mxu0 0
      %663 = vmatprep.subr.bf16.mxu0 0
      %664 = vmatpush1.bf16.msra.mxu0 0
      %665 = vmatprep.subr.bf16.mxu0 0
      %666 = vmatpush1.bf16.msra.mxu0 0
      %667 = vmatprep.subr.bf16.mxu0 0
      %668 = vmatpush1.bf16.msra.mxu0 0
      %669 = vmatprep.subr.bf16.mxu0 0
      %670 = vmatpush1.bf16.msra.mxu0 0
      %671 = vmatprep.subr.bf16.mxu0 0
      %672 = vmatpush1.bf16.msra.mxu0 0
      %673 = vmatprep.subr.bf16.mxu0 0
      %674 = vmatpush1.bf16.msra.mxu0 0
      %675 = vmatprep.subr.bf16.mxu0 0
      %676 = vmatpush1.bf16.msra.mxu0 0
      %677 = vmatprep.subr.bf16.mxu0 0
      %678 = vmatpush1.bf16.msra.mxu0 0
      %679 = vmatprep.subr.bf16.mxu0 0
      %680 = vmatpush1.bf16.msra.mxu0 0
      %681 = vmatprep.mubr.bf16.mxu0 0
      %682 = vmatmul.mubr.bf16.gmra.mrb[0].mxu0 %v638
      %v683 = vpop.f32.mrb[0].mxu0
      %v684 = vadd.f32 0.0, %v683
      %v685 = vpop.f32.mrb[0].mxu0
      %v686 = vadd.f32 0.0, %v685
      %v687 = vpop.f32.mrb[0].mxu0
      %v688 = vadd.f32 0.0, %v687
      %v689 = vpop.f32.mrb[0].mxu0
      %v690 = vadd.f32 0.0, %v689
      %691 = vdwg.mxu0
      %692 = vmatprep.subr.bf16.mxu0 0
      %693 = vmatpush1.bf16.msra.mxu0 %v647
      %694 = vmatprep.subr.bf16.mxu0 0
      %695 = vmatpush1.bf16.msra.mxu0 0
      %696 = vmatprep.subr.bf16.mxu0 0
      %697 = vmatpush1.bf16.msra.mxu0 0
      %698 = vmatprep.subr.bf16.mxu0 0
      %699 = vmatpush1.bf16.msra.mxu0 0
      %700 = vmatprep.subr.bf16.mxu0 0
      %701 = vmatpush1.bf16.msra.mxu0 0
      %702 = vmatprep.subr.bf16.mxu0 0
      %703 = vmatpush1.bf16.msra.mxu0 0
      %704 = vmatprep.subr.bf16.mxu0 0
      %705 = vmatpush1.bf16.msra.mxu0 0
      %706 = vmatprep.subr.bf16.mxu0 0
      %707 = vmatpush1.bf16.msra.mxu0 0
      %708 = vmatprep.subr.bf16.mxu0 0
      %709 = vmatpush1.bf16.msra.mxu0 0
      %710 = vmatprep.subr.bf16.mxu0 0
      %711 = vmatpush1.bf16.msra.mxu0 0
      %712 = vmatprep.subr.bf16.mxu0 0
      %713 = vmatpush1.bf16.msra.mxu0 0
      %714 = vmatprep.subr.bf16.mxu0 0
      %715 = vmatpush1.bf16.msra.mxu0 0
      %716 = vmatprep.subr.bf16.mxu0 0
      %717 = vmatpush1.bf16.msra.mxu0 0
      %718 = vmatprep.subr.bf16.mxu0 0
      %719 = vmatpush1.bf16.msra.mxu0 0
      %720 = vmatprep.subr.bf16.mxu0 0
      %721 = vmatpush1.bf16.msra.mxu0 0
      %722 = vmatprep.subr.bf16.mxu0 0
      %723 = vmatpush1.bf16.msra.mxu0 0
      %724 = vmatprep.mubr.bf16.mxu0 0
      %725 = vmatmul.mubr.bf16.gmra.mrb[0].mxu0 %v638
      %v726 = vpop.f32.mrb[0].mxu0
      %v727 = vadd.f32 0.0, %v726
      %v728 = vpop.f32.mrb[0].mxu0
      %v729 = vpop.f32.mrb[0].mxu0
      %v730 = vadd.f32 0.0, %v729
      %v731 = vpop.f32.mrb[0].mxu0
      %732 = vdwg.mxu0
      %v733 = vadd.f32 %v596, %v684
      %v734 = vadd.f32 %v597, %v686
      %v735 = vadd.f32 %v598, %v727
      %v736 = vadd.f32 %v599, %v688
      %v737 = vadd.f32 %v600, %v690
      %v738 = vadd.f32 %v601, %v730
      %v739 = vld [vmem:[%s219] sm:$0x3f]
      %s740 = scalar_lea.vmem %s1, 32
      %v741 = vld [vmem:[%s740] sm:$0xf]
      %v742 = vld [vmem:[%s740 + $0x4] sm:$0x1]
      %v745 = vunpack.c.l.b16 %v741
      %v746 = vunpack.c.l.b16 %v742
      %v747 = vpack.c.b16 %v746, %v745
      %v749 = vcombine.high %v739, %v739
      %v751 = vunpack.c.l.s4 1983009808
      %v752 = vunpack.c.0.s8 %v751
      %v753 = vlaneseq
      %v754 = vshrl.u32 %v753, 7
      %v755 = vsub.s32 %v752, %v754
      %v756 = vrot.slane %v739, %v755
      %v758 = vunpack.c.l.s4 1983009808
      %v759 = vunpack.c.0.s8 %v758
      %v760 = vlaneseq
      %v761 = vshrl.u32 %v760, 7
      %v762 = vsub.s32 %v759, %v761
      %v763 = vrot.slane %v749, %v762
      %v764 = vcombine.high %v756, %v756
      %765 = vrot.lane.b32.xlu0 %v756, 111
      %v766 = vpop.permute.xlu0 %765
      %767 = vrot.lane.b32.xlu0 %v764, 111
      %v768 = vpop.permute.xlu0 %767
      %769 = vrot.lane.b32.xlu0 %v763, 111
      %v770 = vpop.permute.xlu0 %769
      %vm771 = vcmask 908288
      %v772 = vsel %vm771, %v766, %v768
      %v773 = vsel %vm771, %v768, %v770
      %v775 = vsel %vm263, %v747, 0
      %v778 = vand.u32 %v772, %v270
      %v781 = vand.u32 %v773, %v270
      %v784 = vand.u32 %v770, %v270
      %786 = vmatprep.subr.bf16.mxu0 %v781
      %787 = vmatpush1.bf16.msra.mxu0 %v778
      %788 = vmatprep.subr.bf16.mxu0 0
      %789 = vmatpush1.bf16.msra.mxu0 0
      %790 = vmatprep.subr.bf16.mxu0 0
      %791 = vmatpush1.bf16.msra.mxu0 0
      %792 = vmatprep.subr.bf16.mxu0 0
      %793 = vmatpush1.bf16.msra.mxu0 0
      %794 = vmatprep.subr.bf16.mxu0 0
      %795 = vmatpush1.bf16.msra.mxu0 0
      %796 = vmatprep.subr.bf16.mxu0 0
      %797 = vmatpush1.bf16.msra.mxu0 0
      %798 = vmatprep.subr.bf16.mxu0 0
      %799 = vmatpush1.bf16.msra.mxu0 0
      %800 = vmatprep.subr.bf16.mxu0 0
      %801 = vmatpush1.bf16.msra.mxu0 0
      %802 = vmatprep.subr.bf16.mxu0 0
      %803 = vmatpush1.bf16.msra.mxu0 0
      %804 = vmatprep.subr.bf16.mxu0 0
      %805 = vmatpush1.bf16.msra.mxu0 0
      %806 = vmatprep.subr.bf16.mxu0 0
      %807 = vmatpush1.bf16.msra.mxu0 0
      %808 = vmatprep.subr.bf16.mxu0 0
      %809 = vmatpush1.bf16.msra.mxu0 0
      %810 = vmatprep.subr.bf16.mxu0 0
      %811 = vmatpush1.bf16.msra.mxu0 0
      %812 = vmatprep.subr.bf16.mxu0 0
      %813 = vmatpush1.bf16.msra.mxu0 0
      %814 = vmatprep.subr.bf16.mxu0 0
      %815 = vmatpush1.bf16.msra.mxu0 0
      %816 = vmatprep.subr.bf16.mxu0 0
      %817 = vmatpush1.bf16.msra.mxu0 0
      %818 = vmatprep.mubr.bf16.mxu0 0
      %819 = vmatmul.mubr.bf16.gmra.mrb[0].mxu0 %v775
      %v820 = vpop.f32.mrb[0].mxu0
      %v821 = vadd.f32 0.0, %v820
      %v822 = vpop.f32.mrb[0].mxu0
      %v823 = vadd.f32 0.0, %v822
      %v824 = vpop.f32.mrb[0].mxu0
      %v825 = vadd.f32 0.0, %v824
      %v826 = vpop.f32.mrb[0].mxu0
      %v827 = vadd.f32 0.0, %v826
      %828 = vdwg.mxu0
      %829 = vmatprep.subr.bf16.mxu0 0
      %830 = vmatpush1.bf16.msra.mxu0 %v784
      %831 = vmatprep.subr.bf16.mxu0 0
      %832 = vmatpush1.bf16.msra.mxu0 0
      %833 = vmatprep.subr.bf16.mxu0 0
      %834 = vmatpush1.bf16.msra.mxu0 0
      %835 = vmatprep.subr.bf16.mxu0 0
      %836 = vmatpush1.bf16.msra.mxu0 0
      %837 = vmatprep.subr.bf16.mxu0 0
      %838 = vmatpush1.bf16.msra.mxu0 0
      %839 = vmatprep.subr.bf16.mxu0 0
      %840 = vmatpush1.bf16.msra.mxu0 0
      %841 = vmatprep.subr.bf16.mxu0 0
      %842 = vmatpush1.bf16.msra.mxu0 0
      %843 = vmatprep.subr.bf16.mxu0 0
      %844 = vmatpush1.bf16.msra.mxu0 0
      %845 = vmatprep.subr.bf16.mxu0 0
      %846 = vmatpush1.bf16.msra.mxu0 0
      %847 = vmatprep.subr.bf16.mxu0 0
      %848 = vmatpush1.bf16.msra.mxu0 0
      %849 = vmatprep.subr.bf16.mxu0 0
      %850 = vmatpush1.bf16.msra.mxu0 0
      %851 = vmatprep.subr.bf16.mxu0 0
      %852 = vmatpush1.bf16.msra.mxu0 0
      %853 = vmatprep.subr.bf16.mxu0 0
      %854 = vmatpush1.bf16.msra.mxu0 0
      %855 = vmatprep.subr.bf16.mxu0 0
      %856 = vmatpush1.bf16.msra.mxu0 0
      %857 = vmatprep.subr.bf16.mxu0 0
      %858 = vmatpush1.bf16.msra.mxu0 0
      %859 = vmatprep.subr.bf16.mxu0 0
      %860 = vmatpush1.bf16.msra.mxu0 0
      %861 = vmatprep.mubr.bf16.mxu0 0
      %862 = vmatmul.mubr.bf16.gmra.mrb[0].mxu0 %v775
      %v863 = vpop.f32.mrb[0].mxu0
      %v864 = vadd.f32 0.0, %v863
      %v865 = vpop.f32.mrb[0].mxu0
      %v866 = vpop.f32.mrb[0].mxu0
      %v867 = vadd.f32 0.0, %v866
      %v868 = vpop.f32.mrb[0].mxu0
      %869 = vdwg.mxu0
      %v870 = vadd.f32 %v733, %v821
      %v871 = vadd.f32 %v734, %v823
      %v872 = vadd.f32 %v735, %v864
      %v873 = vadd.f32 %v736, %v825
      %v874 = vadd.f32 %v737, %v827
      %v875 = vadd.f32 %v738, %v867
      %v876 = vld [vmem:[%s219] sm:$0x3f]
      %s877 = scalar_lea.vmem %s1, 40
      %v878 = vld [vmem:[%s877] sm:$0xf]
      %v879 = vld [vmem:[%s877 + $0x4] sm:$0x1]
      %v882 = vunpack.c.l.b16 %v878
      %v883 = vunpack.c.l.b16 %v879
      %v884 = vpack.c.b16 %v883, %v882
      %v886 = vcombine.high %v876, %v876
      %v888 = vunpack.c.l.s4 1983009808
      %v889 = vunpack.c.0.s8 %v888
      %v890 = vlaneseq
      %v891 = vshrl.u32 %v890, 7
      %v892 = vsub.s32 %v889, %v891
      %v893 = vrot.slane %v876, %v892
      %v895 = vunpack.c.l.s4 1983009808
      %v896 = vunpack.c.0.s8 %v895
      %v897 = vlaneseq
      %v898 = vshrl.u32 %v897, 7
      %v899 = vsub.s32 %v896, %v898
      %v900 = vrot.slane %v886, %v899
      %v901 = vcombine.high %v893, %v893
      %902 = vrot.lane.b32.xlu0 %v893, 110
      %v903 = vpop.permute.xlu0 %902
      %904 = vrot.lane.b32.xlu0 %v901, 110
      %v905 = vpop.permute.xlu0 %904
      %906 = vrot.lane.b32.xlu0 %v900, 110
      %v907 = vpop.permute.xlu0 %906
      %vm908 = vcmask 900096
      %v909 = vsel %vm908, %v903, %v905
      %v910 = vsel %vm908, %v905, %v907
      %v912 = vsel %vm263, %v884, 0
      %v915 = vand.u32 %v909, %v270
      %v918 = vand.u32 %v910, %v270
      %v921 = vand.u32 %v907, %v270
      %923 = vmatprep.subr.bf16.mxu0 %v918
      %924 = vmatpush1.bf16.msra.mxu0 %v915
      %925 = vmatprep.subr.bf16.mxu0 0
      %926 = vmatpush1.bf16.msra.mxu0 0
      %927 = vmatprep.subr.bf16.mxu0 0
      %928 = vmatpush1.bf16.msra.mxu0 0
      %929 = vmatprep.subr.bf16.mxu0 0
      %930 = vmatpush1.bf16.msra.mxu0 0
      %931 = vmatprep.subr.bf16.mxu0 0
      %932 = vmatpush1.bf16.msra.mxu0 0
      %933 = vmatprep.subr.bf16.mxu0 0
      %934 = vmatpush1.bf16.msra.mxu0 0
      %935 = vmatprep.subr.bf16.mxu0 0
      %936 = vmatpush1.bf16.msra.mxu0 0
      %937 = vmatprep.subr.bf16.mxu0 0
      %938 = vmatpush1.bf16.msra.mxu0 0
      %939 = vmatprep.subr.bf16.mxu0 0
      %940 = vmatpush1.bf16.msra.mxu0 0
      %941 = vmatprep.subr.bf16.mxu0 0
      %942 = vmatpush1.bf16.msra.mxu0 0
      %943 = vmatprep.subr.bf16.mxu0 0
      %944 = vmatpush1.bf16.msra.mxu0 0
      %945 = vmatprep.subr.bf16.mxu0 0
      %946 = vmatpush1.bf16.msra.mxu0 0
      %947 = vmatprep.subr.bf16.mxu0 0
      %948 = vmatpush1.bf16.msra.mxu0 0
      %949 = vmatprep.subr.bf16.mxu0 0
      %950 = vmatpush1.bf16.msra.mxu0 0
      %951 = vmatprep.subr.bf16.mxu0 0
      %952 = vmatpush1.bf16.msra.mxu0 0
      %953 = vmatprep.subr.bf16.mxu0 0
      %954 = vmatpush1.bf16.msra.mxu0 0
      %955 = vmatprep.mubr.bf16.mxu0 0
      %956 = vmatmul.mubr.bf16.gmra.mrb[0].mxu0 %v912
      %v957 = vpop.f32.mrb[0].mxu0
      %v958 = vadd.f32 0.0, %v957
      %v959 = vpop.f32.mrb[0].mxu0
      %v960 = vadd.f32 0.0, %v959
      %v961 = vpop.f32.mrb[0].mxu0
      %v962 = vadd.f32 0.0, %v961
      %v963 = vpop.f32.mrb[0].mxu0
      %v964 = vadd.f32 0.0, %v963
      %965 = vdwg.mxu0
      %966 = vmatprep.subr.bf16.mxu0 0
      %967 = vmatpush1.bf16.msra.mxu0 %v921
      %968 = vmatprep.subr.bf16.mxu0 0
      %969 = vmatpush1.bf16.msra.mxu0 0
      %970 = vmatprep.subr.bf16.mxu0 0
      %971 = vmatpush1.bf16.msra.mxu0 0
      %972 = vmatprep.subr.bf16.mxu0 0
      %973 = vmatpush1.bf16.msra.mxu0 0
      %974 = vmatprep.subr.bf16.mxu0 0
      %975 = vmatpush1.bf16.msra.mxu0 0
      %976 = vmatprep.subr.bf16.mxu0 0
      %977 = vmatpush1.bf16.msra.mxu0 0
      %978 = vmatprep.subr.bf16.mxu0 0
      %979 = vmatpush1.bf16.msra.mxu0 0
      %980 = vmatprep.subr.bf16.mxu0 0
      %981 = vmatpush1.bf16.msra.mxu0 0
      %982 = vmatprep.subr.bf16.mxu0 0
      %983 = vmatpush1.bf16.msra.mxu0 0
      %984 = vmatprep.subr.bf16.mxu0 0
      %985 = vmatpush1.bf16.msra.mxu0 0
      %986 = vmatprep.subr.bf16.mxu0 0
      %987 = vmatpush1.bf16.msra.mxu0 0
      %988 = vmatprep.subr.bf16.mxu0 0
      %989 = vmatpush1.bf16.msra.mxu0 0
      %990 = vmatprep.subr.bf16.mxu0 0
      %991 = vmatpush1.bf16.msra.mxu0 0
      %992 = vmatprep.subr.bf16.mxu0 0
      %993 = vmatpush1.bf16.msra.mxu0 0
      %994 = vmatprep.subr.bf16.mxu0 0
      %995 = vmatpush1.bf16.msra.mxu0 0
      %996 = vmatprep.subr.bf16.mxu0 0
      %997 = vmatpush1.bf16.msra.mxu0 0
      %998 = vmatprep.mubr.bf16.mxu0 0
      %999 = vmatmul.mubr.bf16.gmra.mrb[0].mxu0 %v912
      %v1000 = vpop.f32.mrb[0].mxu0
      %v1001 = vadd.f32 0.0, %v1000
      %v1002 = vpop.f32.mrb[0].mxu0
      %v1003 = vpop.f32.mrb[0].mxu0
      %v1004 = vadd.f32 0.0, %v1003
      %v1005 = vpop.f32.mrb[0].mxu0
      %1006 = vdwg.mxu0
      %v1007 = vadd.f32 %v870, %v958
      %v1008 = vadd.f32 %v871, %v960
      %v1009 = vadd.f32 %v872, %v1001
      %v1010 = vadd.f32 %v873, %v962
      %v1011 = vadd.f32 %v874, %v964
      %v1012 = vadd.f32 %v875, %v1004
      %v1013 = vld [vmem:[%s219] sm:$0x3f]
      %s1014 = scalar_lea.vmem %s1, 48
      %v1015 = vld [vmem:[%s1014] sm:$0xf]
      %v1016 = vld [vmem:[%s1014 + $0x4] sm:$0x1]
      %v1019 = vunpack.c.l.b16 %v1015
      %v1020 = vunpack.c.l.b16 %v1016
      %v1021 = vpack.c.b16 %v1020, %v1019
      %v1023 = vcombine.high %v1013, %v1013
      %v1025 = vunpack.c.l.s4 1983009808
      %v1026 = vunpack.c.0.s8 %v1025
      %v1027 = vlaneseq
      %v1028 = vshrl.u32 %v1027, 7
      %v1029 = vsub.s32 %v1026, %v1028
      %v1030 = vrot.slane %v1013, %v1029
      %v1032 = vunpack.c.l.s4 1983009808
      %v1033 = vunpack.c.0.s8 %v1032
      %v1034 = vlaneseq
      %v1035 = vshrl.u32 %v1034, 7
      %v1036 = vsub.s32 %v1033, %v1035
      %v1037 = vrot.slane %v1023, %v1036
      %v1038 = vcombine.high %v1030, %v1030
      %1039 = vrot.lane.b32.xlu0 %v1030, 96
      %v1040 = vpop.permute.xlu0 %1039
      %1041 = vrot.lane.b32.xlu0 %v1038, 96
      %v1042 = vpop.permute.xlu0 %1041
      %1043 = vrot.lane.b32.xlu0 %v1037, 96
      %v1044 = vpop.permute.xlu0 %1043
      %vm1045 = vcmask 785408
      %v1046 = vsel %vm1045, %v1040, %v1042
      %v1047 = vsel %vm1045, %v1042, %v1044
      %v1049 = vsel %vm263, %v1021, 0
      %v1052 = vand.u32 %v1046, %v270
      %v1055 = vand.u32 %v1047, %v270
      %v1058 = vand.u32 %v1044, %v270
      %1060 = vmatprep.subr.bf16.mxu0 %v1055
      %1061 = vmatpush1.bf16.msra.mxu0 %v1052
      %1062 = vmatprep.subr.bf16.mxu0 0
      %1063 = vmatpush1.bf16.msra.mxu0 0
      %1064 = vmatprep.subr.bf16.mxu0 0
      %1065 = vmatpush1.bf16.msra.mxu0 0
      %1066 = vmatprep.subr.bf16.mxu0 0
      %1067 = vmatpush1.bf16.msra.mxu0 0
      %1068 = vmatprep.subr.bf16.mxu0 0
      %1069 = vmatpush1.bf16.msra.mxu0 0
      %1070 = vmatprep.subr.bf16.mxu0 0
      %1071 = vmatpush1.bf16.msra.mxu0 0
      %1072 = vmatprep.subr.bf16.mxu0 0
      %1073 = vmatpush1.bf16.msra.mxu0 0
      %1074 = vmatprep.subr.bf16.mxu0 0
      %1075 = vmatpush1.bf16.msra.mxu0 0
      %1076 = vmatprep.subr.bf16.mxu0 0
      %1077 = vmatpush1.bf16.msra.mxu0 0
      %1078 = vmatprep.subr.bf16.mxu0 0
      %1079 = vmatpush1.bf16.msra.mxu0 0
      %1080 = vmatprep.subr.bf16.mxu0 0
      %1081 = vmatpush1.bf16.msra.mxu0 0
      %1082 = vmatprep.subr.bf16.mxu0 0
      %1083 = vmatpush1.bf16.msra.mxu0 0
      %1084 = vmatprep.subr.bf16.mxu0 0
      %1085 = vmatpush1.bf16.msra.mxu0 0
      %1086 = vmatprep.subr.bf16.mxu0 0
      %1087 = vmatpush1.bf16.msra.mxu0 0
      %1088 = vmatprep.subr.bf16.mxu0 0
      %1089 = vmatpush1.bf16.msra.mxu0 0
      %1090 = vmatprep.subr.bf16.mxu0 0
      %1091 = vmatpush1.bf16.msra.mxu0 0
      %1092 = vmatprep.mubr.bf16.mxu0 0
      %1093 = vmatmul.mubr.bf16.gmra.mrb[0].mxu0 %v1049
      %v1094 = vpop.f32.mrb[0].mxu0
      %v1095 = vadd.f32 0.0, %v1094
      %v1096 = vpop.f32.mrb[0].mxu0
      %v1097 = vadd.f32 0.0, %v1096
      %v1098 = vpop.f32.mrb[0].mxu0
      %v1099 = vadd.f32 0.0, %v1098
      %v1100 = vpop.f32.mrb[0].mxu0
      %v1101 = vadd.f32 0.0, %v1100
      %1102 = vdwg.mxu0
      %1103 = vmatprep.subr.bf16.mxu0 0
      %1104 = vmatpush1.bf16.msra.mxu0 %v1058
      %1105 = vmatprep.subr.bf16.mxu0 0
      %1106 = vmatpush1.bf16.msra.mxu0 0
      %1107 = vmatprep.subr.bf16.mxu0 0
      %1108 = vmatpush1.bf16.msra.mxu0 0
      %1109 = vmatprep.subr.bf16.mxu0 0
      %1110 = vmatpush1.bf16.msra.mxu0 0
      %1111 = vmatprep.subr.bf16.mxu0 0
      %1112 = vmatpush1.bf16.msra.mxu0 0
      %1113 = vmatprep.subr.bf16.mxu0 0
      %1114 = vmatpush1.bf16.msra.mxu0 0
      %1115 = vmatprep.subr.bf16.mxu0 0
      %1116 = vmatpush1.bf16.msra.mxu0 0
      %1117 = vmatprep.subr.bf16.mxu0 0
      %1118 = vmatpush1.bf16.msra.mxu0 0
      %1119 = vmatprep.subr.bf16.mxu0 0
      %1120 = vmatpush1.bf16.msra.mxu0 0
      %1121 = vmatprep.subr.bf16.mxu0 0
      %1122 = vmatpush1.bf16.msra.mxu0 0
      %1123 = vmatprep.subr.bf16.mxu0 0
      %1124 = vmatpush1.bf16.msra.mxu0 0
      %1125 = vmatprep.subr.bf16.mxu0 0
      %1126 = vmatpush1.bf16.msra.mxu0 0
      %1127 = vmatprep.subr.bf16.mxu0 0
      %1128 = vmatpush1.bf16.msra.mxu0 0
      %1129 = vmatprep.subr.bf16.mxu0 0
      %1130 = vmatpush1.bf16.msra.mxu0 0
      %1131 = vmatprep.subr.bf16.mxu0 0
      %1132 = vmatpush1.bf16.msra.mxu0 0
      %1133 = vmatprep.subr.bf16.mxu0 0
      %1134 = vmatpush1.bf16.msra.mxu0 0
      %1135 = vmatprep.mubr.bf16.mxu0 0
      %1136 = vmatmul.mubr.bf16.gmra.mrb[0].mxu0 %v1049
      %v1137 = vpop.f32.mrb[0].mxu0
      %v1138 = vadd.f32 0.0, %v1137
      %v1139 = vpop.f32.mrb[0].mxu0
      %v1140 = vpop.f32.mrb[0].mxu0
      %v1141 = vadd.f32 0.0, %v1140
      %v1142 = vpop.f32.mrb[0].mxu0
      %1143 = vdwg.mxu0
      %v1144 = vadd.f32 %v1007, %v1095
      %v1145 = vadd.f32 %v1008, %v1097
      %v1146 = vadd.f32 %v1009, %v1138
      %v1147 = vadd.f32 %v1010, %v1099
      %v1148 = vadd.f32 %v1011, %v1101
      %v1149 = vadd.f32 %v1012, %v1141
      %v1150 = vld [vmem:[%s219] sm:$0x3f]
      %s1151 = scalar_lea.vmem %s1, 56
      %v1152 = vld [vmem:[%s1151] sm:$0xf]
      %v1153 = vld [vmem:[%s1151 + $0x4] sm:$0x1]
      %v1156 = vunpack.c.l.b16 %v1152
      %v1157 = vunpack.c.l.b16 %v1153
      %v1158 = vpack.c.b16 %v1157, %v1156
      %v1160 = vcombine.high %v1150, %v1150
      %v1162 = vunpack.c.l.s4 1983009808
      %v1163 = vunpack.c.0.s8 %v1162
      %v1164 = vlaneseq
      %v1165 = vshrl.u32 %v1164, 7
      %v1166 = vsub.s32 %v1163, %v1165
      %v1167 = vrot.slane %v1150, %v1166
      %v1169 = vunpack.c.l.s4 1983009808
      %v1170 = vunpack.c.0.s8 %v1169
      %v1171 = vlaneseq
      %v1172 = vshrl.u32 %v1171, 7
      %v1173 = vsub.s32 %v1170, %v1172
      %v1174 = vrot.slane %v1160, %v1173
      %v1175 = vcombine.high %v1167, %v1167
      %1176 = vrot.lane.b32.xlu0 %v1167, 95
      %v1177 = vpop.permute.xlu0 %1176
      %1178 = vrot.lane.b32.xlu0 %v1175, 95
      %v1179 = vpop.permute.xlu0 %1178
      %1180 = vrot.lane.b32.xlu0 %v1174, 95
      %v1181 = vpop.permute.xlu0 %1180
      %vm1182 = vcmask 777216
      %v1183 = vsel %vm1182, %v1177, %v1179
      %v1184 = vsel %vm1182, %v1179, %v1181
      %v1186 = vsel %vm263, %v1158, 0
      %v1189 = vand.u32 %v1183, %v270
      %v1192 = vand.u32 %v1184, %v270
      %v1195 = vand.u32 %v1181, %v270
      %1197 = vmatprep.subr.bf16.mxu0 %v1192
      %1198 = vmatpush1.bf16.msra.mxu0 %v1189
      %1199 = vmatprep.subr.bf16.mxu0 0
      %1200 = vmatpush1.bf16.msra.mxu0 0
      %1201 = vmatprep.subr.bf16.mxu0 0
      %1202 = vmatpush1.bf16.msra.mxu0 0
      %1203 = vmatprep.subr.bf16.mxu0 0
      %1204 = vmatpush1.bf16.msra.mxu0 0
      %1205 = vmatprep.subr.bf16.mxu0 0
      %1206 = vmatpush1.bf16.msra.mxu0 0
      %1207 = vmatprep.subr.bf16.mxu0 0
      %1208 = vmatpush1.bf16.msra.mxu0 0
      %1209 = vmatprep.subr.bf16.mxu0 0
      %1210 = vmatpush1.bf16.msra.mxu0 0
      %1211 = vmatprep.subr.bf16.mxu0 0
      %1212 = vmatpush1.bf16.msra.mxu0 0
      %1213 = vmatprep.subr.bf16.mxu0 0
      %1214 = vmatpush1.bf16.msra.mxu0 0
      %1215 = vmatprep.subr.bf16.mxu0 0
      %1216 = vmatpush1.bf16.msra.mxu0 0
      %1217 = vmatprep.subr.bf16.mxu0 0
      %1218 = vmatpush1.bf16.msra.mxu0 0
      %1219 = vmatprep.subr.bf16.mxu0 0
      %1220 = vmatpush1.bf16.msra.mxu0 0
      %1221 = vmatprep.subr.bf16.mxu0 0
      %1222 = vmatpush1.bf16.msra.mxu0 0
      %1223 = vmatprep.subr.bf16.mxu0 0
      %1224 = vmatpush1.bf16.msra.mxu0 0
      %1225 = vmatprep.subr.bf16.mxu0 0
      %1226 = vmatpush1.bf16.msra.mxu0 0
      %1227 = vmatprep.subr.bf16.mxu0 0
      %1228 = vmatpush1.bf16.msra.mxu0 0
      %1229 = vmatprep.mubr.bf16.mxu0 0
      %1230 = vmatmul.mubr.bf16.gmra.mrb[0].mxu0 %v1186
      %v1231 = vpop.f32.mrb[0].mxu0
      %v1232 = vadd.f32 0.0, %v1231
      %v1233 = vpop.f32.mrb[0].mxu0
      %v1234 = vadd.f32 0.0, %v1233
      %v1235 = vpop.f32.mrb[0].mxu0
      %v1236 = vadd.f32 0.0, %v1235
      %v1237 = vpop.f32.mrb[0].mxu0
      %v1238 = vadd.f32 0.0, %v1237
      %1239 = vdwg.mxu0
      %1240 = vmatprep.subr.bf16.mxu0 0
      %1241 = vmatpush1.bf16.msra.mxu0 %v1195
      %1242 = vmatprep.subr.bf16.mxu0 0
      %1243 = vmatpush1.bf16.msra.mxu0 0
      %1244 = vmatprep.subr.bf16.mxu0 0
      %1245 = vmatpush1.bf16.msra.mxu0 0
      %1246 = vmatprep.subr.bf16.mxu0 0
      %1247 = vmatpush1.bf16.msra.mxu0 0
      %1248 = vmatprep.subr.bf16.mxu0 0
      %1249 = vmatpush1.bf16.msra.mxu0 0
      %1250 = vmatprep.subr.bf16.mxu0 0
      %1251 = vmatpush1.bf16.msra.mxu0 0
      %1252 = vmatprep.subr.bf16.mxu0 0
      %1253 = vmatpush1.bf16.msra.mxu0 0
      %1254 = vmatprep.subr.bf16.mxu0 0
      %1255 = vmatpush1.bf16.msra.mxu0 0
      %1256 = vmatprep.subr.bf16.mxu0 0
      %1257 = vmatpush1.bf16.msra.mxu0 0
      %1258 = vmatprep.subr.bf16.mxu0 0
      %1259 = vmatpush1.bf16.msra.mxu0 0
      %1260 = vmatprep.subr.bf16.mxu0 0
      %1261 = vmatpush1.bf16.msra.mxu0 0
      %1262 = vmatprep.subr.bf16.mxu0 0
      %1263 = vmatpush1.bf16.msra.mxu0 0
      %1264 = vmatprep.subr.bf16.mxu0 0
      %1265 = vmatpush1.bf16.msra.mxu0 0
      %1266 = vmatprep.subr.bf16.mxu0 0
      %1267 = vmatpush1.bf16.msra.mxu0 0
      %1268 = vmatprep.subr.bf16.mxu0 0
      %1269 = vmatpush1.bf16.msra.mxu0 0
      %1270 = vmatprep.subr.bf16.mxu0 0
      %1271 = vmatpush1.bf16.msra.mxu0 0
      %1272 = vmatprep.mubr.bf16.mxu0 0
      %1273 = vmatmul.mubr.bf16.gmra.mrb[0].mxu0 %v1186
      %v1274 = vpop.f32.mrb[0].mxu0
      %v1275 = vadd.f32 0.0, %v1274
      %v1276 = vpop.f32.mrb[0].mxu0
      %v1277 = vpop.f32.mrb[0].mxu0
      %v1278 = vadd.f32 0.0, %v1277
      %v1279 = vpop.f32.mrb[0].mxu0
      %1280 = vdwg.mxu0
      %v1281 = vadd.f32 %v1144, %v1232
      %v1282 = vadd.f32 %v1145, %v1234
      %v1283 = vadd.f32 %v1146, %v1275
      %v1284 = vadd.f32 %v1147, %v1236
      %v1285 = vadd.f32 %v1148, %v1238
      %v1286 = vadd.f32 %v1149, %v1278
      %v1287 = vld [vmem:[%s219] sm:$0x3f]
      %s1288 = scalar_lea.vmem %s1, 64
      %v1289 = vld [vmem:[%s1288] sm:$0xf]
      %v1290 = vld [vmem:[%s1288 + $0x4] sm:$0x1]
      %v1293 = vunpack.c.l.b16 %v1289
      %v1294 = vunpack.c.l.b16 %v1290
      %v1295 = vpack.c.b16 %v1294, %v1293
      %v1297 = vcombine.high %v1287, %v1287
      %v1299 = vunpack.c.l.s4 1983009808
      %v1300 = vunpack.c.0.s8 %v1299
      %v1301 = vlaneseq
      %v1302 = vshrl.u32 %v1301, 7
      %v1303 = vsub.s32 %v1300, %v1302
      %v1304 = vrot.slane %v1287, %v1303
      %v1306 = vunpack.c.l.s4 1983009808
      %v1307 = vunpack.c.0.s8 %v1306
      %v1308 = vlaneseq
      %v1309 = vshrl.u32 %v1308, 7
      %v1310 = vsub.s32 %v1307, %v1309
      %v1311 = vrot.slane %v1297, %v1310
      %v1312 = vcombine.high %v1304, %v1304
      %1313 = vrot.lane.b32.xlu0 %v1304, 94
      %v1314 = vpop.permute.xlu0 %1313
      %1315 = vrot.lane.b32.xlu0 %v1312, 94
      %v1316 = vpop.permute.xlu0 %1315
      %1317 = vrot.lane.b32.xlu0 %v1311, 94
      %v1318 = vpop.permute.xlu0 %1317
      %vm1319 = vcmask 769024
      %v1320 = vsel %vm1319, %v1314, %v1316
      %v1321 = vsel %vm1319, %v1316, %v1318
      %v1323 = vsel %vm263, %v1295, 0
      %v1326 = vand.u32 %v1320, %v270
      %v1329 = vand.u32 %v1321, %v270
      %v1332 = vand.u32 %v1318, %v270
      %1334 = vmatprep.subr.bf16.mxu0 %v1329
      %1335 = vmatpush1.bf16.msra.mxu0 %v1326
      %1336 = vmatprep.subr.bf16.mxu0 0
      %1337 = vmatpush1.bf16.msra.mxu0 0
      %1338 = vmatprep.subr.bf16.mxu0 0
      %1339 = vmatpush1.bf16.msra.mxu0 0
      %1340 = vmatprep.subr.bf16.mxu0 0
      %1341 = vmatpush1.bf16.msra.mxu0 0
      %1342 = vmatprep.subr.bf16.mxu0 0
      %1343 = vmatpush1.bf16.msra.mxu0 0
      %1344 = vmatprep.subr.bf16.mxu0 0
      %1345 = vmatpush1.bf16.msra.mxu0 0
      %1346 = vmatprep.subr.bf16.mxu0 0
      %1347 = vmatpush1.bf16.msra.mxu0 0
      %1348 = vmatprep.subr.bf16.mxu0 0
      %1349 = vmatpush1.bf16.msra.mxu0 0
      %1350 = vmatprep.subr.bf16.mxu0 0
      %1351 = vmatpush1.bf16.msra.mxu0 0
      %1352 = vmatprep.subr.bf16.mxu0 0
      %1353 = vmatpush1.bf16.msra.mxu0 0
      %1354 = vmatprep.subr.bf16.mxu0 0
      %1355 = vmatpush1.bf16.msra.mxu0 0
      %1356 = vmatprep.subr.bf16.mxu0 0
      %1357 = vmatpush1.bf16.msra.mxu0 0
      %1358 = vmatprep.subr.bf16.mxu0 0
      %1359 = vmatpush1.bf16.msra.mxu0 0
      %1360 = vmatprep.subr.bf16.mxu0 0
      %1361 = vmatpush1.bf16.msra.mxu0 0
      %1362 = vmatprep.subr.bf16.mxu0 0
      %1363 = vmatpush1.bf16.msra.mxu0 0
      %1364 = vmatprep.subr.bf16.mxu0 0
      %1365 = vmatpush1.bf16.msra.mxu0 0
      %1366 = vmatprep.mubr.bf16.mxu0 0
      %1367 = vmatmul.mubr.bf16.gmra.mrb[0].mxu0 %v1323
      %v1368 = vpop.f32.mrb[0].mxu0
      %v1369 = vadd.f32 0.0, %v1368
      %v1370 = vpop.f32.mrb[0].mxu0
      %v1371 = vadd.f32 0.0, %v1370
      %v1372 = vpop.f32.mrb[0].mxu0
      %v1373 = vadd.f32 0.0, %v1372
      %v1374 = vpop.f32.mrb[0].mxu0
      %v1375 = vadd.f32 0.0, %v1374
      %1376 = vdwg.mxu0
      %1377 = vmatprep.subr.bf16.mxu0 0
      %1378 = vmatpush1.bf16.msra.mxu0 %v1332
      %1379 = vmatprep.subr.bf16.mxu0 0
      %1380 = vmatpush1.bf16.msra.mxu0 0
      %1381 = vmatprep.subr.bf16.mxu0 0
      %1382 = vmatpush1.bf16.msra.mxu0 0
      %1383 = vmatprep.subr.bf16.mxu0 0
      %1384 = vmatpush1.bf16.msra.mxu0 0
      %1385 = vmatprep.subr.bf16.mxu0 0
      %1386 = vmatpush1.bf16.msra.mxu0 0
      %1387 = vmatprep.subr.bf16.mxu0 0
      %1388 = vmatpush1.bf16.msra.mxu0 0
      %1389 = vmatprep.subr.bf16.mxu0 0
      %1390 = vmatpush1.bf16.msra.mxu0 0
      %1391 = vmatprep.subr.bf16.mxu0 0
      %1392 = vmatpush1.bf16.msra.mxu0 0
      %1393 = vmatprep.subr.bf16.mxu0 0
      %1394 = vmatpush1.bf16.msra.mxu0 0
      %1395 = vmatprep.subr.bf16.mxu0 0
      %1396 = vmatpush1.bf16.msra.mxu0 0
      %1397 = vmatprep.subr.bf16.mxu0 0
      %1398 = vmatpush1.bf16.msra.mxu0 0
      %1399 = vmatprep.subr.bf16.mxu0 0
      %1400 = vmatpush1.bf16.msra.mxu0 0
      %1401 = vmatprep.subr.bf16.mxu0 0
      %1402 = vmatpush1.bf16.msra.mxu0 0
      %1403 = vmatprep.subr.bf16.mxu0 0
      %1404 = vmatpush1.bf16.msra.mxu0 0
      %1405 = vmatprep.subr.bf16.mxu0 0
      %1406 = vmatpush1.bf16.msra.mxu0 0
      %1407 = vmatprep.subr.bf16.mxu0 0
      %1408 = vmatpush1.bf16.msra.mxu0 0
      %1409 = vmatprep.mubr.bf16.mxu0 0
      %1410 = vmatmul.mubr.bf16.gmra.mrb[0].mxu0 %v1323
      %v1411 = vpop.f32.mrb[0].mxu0
      %v1412 = vadd.f32 0.0, %v1411
      %v1413 = vpop.f32.mrb[0].mxu0
      %v1414 = vpop.f32.mrb[0].mxu0
      %v1415 = vadd.f32 0.0, %v1414
      %v1416 = vpop.f32.mrb[0].mxu0
      %1417 = vdwg.mxu0
      %v1418 = vadd.f32 %v1281, %v1369
      %v1419 = vadd.f32 %v1282, %v1371
      %v1420 = vadd.f32 %v1283, %v1412
      %v1421 = vadd.f32 %v1284, %v1373
      %v1422 = vadd.f32 %v1285, %v1375
      %v1423 = vadd.f32 %v1286, %v1415
      %v1424 = vld [vmem:[%s2] sm:$0xff]
      %v1425 = vld [vmem:[%s2 + $0x8] sm:$0x3]
      %1427 = vset.pattern.permute.xlu0 0
      %1428 = vperm.xlu0 %1427, %v1424
      %v1429 = vpop.permute.xlu0 %1428
      %1432 = vset.pattern.permute.xlu0 0
      %1433 = vperm.xlu0 %1432, %v1425
      %v1434 = vpop.permute.xlu0 %1433
      %v1436 = vadd.f32 %v1418, %v1429
      %v1437 = vadd.f32 %v1419, %v1429
      %v1438 = vadd.f32 %v1420, %v1429
      %v1439 = vadd.f32 %v1421, %v1434
      %v1440 = vadd.f32 %v1422, %v1434
      %v1441 = vadd.f32 %v1423, %v1434
      %v1442 = vld [vmem:[%s3] sm:$0xff]
      %v1443 = vld [vmem:[%s3 + $0x8] sm:$0x3]
      %vm1444 = vcmp.gt.f32.partialorder %v1436, 0.0
      %vm1445 = vcmp.gt.f32.partialorder %v1437, 0.0
      %vm1446 = vcmp.gt.f32.partialorder %v1438, 0.0
      %vm1447 = vcmp.gt.f32.partialorder %v1439, 0.0
      %vm1448 = vcmp.gt.f32.partialorder %v1440, 0.0
      %vm1449 = vcmp.gt.f32.partialorder %v1441, 0.0
      %1451 = vset.pattern.permute.xlu0 0
      %1452 = vperm.xlu0 %1451, %v1442
      %v1453 = vpop.permute.xlu0 %1452
      %1456 = vset.pattern.permute.xlu0 0
      %1457 = vperm.xlu0 %1456, %v1443
      %v1458 = vpop.permute.xlu0 %1457
      %v1460 = vmul.f32 %v1436, %v1453
      %v1461 = vmul.f32 %v1437, %v1453
      %v1462 = vmul.f32 %v1438, %v1453
      %v1463 = vmul.f32 %v1439, %v1458
      %v1464 = vmul.f32 %v1440, %v1458
      %v1465 = vmul.f32 %v1441, %v1458
      %v1466 = vsel %vm1444, %v1436, %v1460
      %v1467 = vsel %vm1445, %v1437, %v1461
      %v1468 = vsel %vm1446, %v1438, %v1462
      %v1469 = vsel %vm1447, %v1439, %v1463
      %v1470 = vsel %vm1448, %v1440, %v1464
      %v1471 = vsel %vm1449, %v1441, %v1465
      %v1472 = vld [vmem:[%s4] sm:$0x7]
      %v1474 = vlaneseq
      %v1475 = vshrl.u32 %v1474, 7
      %v1476 = vsub.s32 0, %v1475
      %v1477 = vrot.slane %v1472, %v1476
      %v1478 = vlaneseq
      %v1479 = vshrl.u32 %v1478, 7
      %v1480 = vsub.s32 1, %v1479
      %v1481 = vrot.slane %v1472, %v1480
      %v1482 = vlaneseq
      %v1483 = vshrl.u32 %v1482, 7
      %v1484 = vsub.s32 2, %v1483
      %v1485 = vrot.slane %v1472, %v1484
      %v1489 = vadd.f32 %v1466, %v1477
      %v1490 = vadd.f32 %v1467, %v1481
      %v1491 = vadd.f32 %v1468, %v1485
      %v1492 = vadd.f32 %v1469, %v1477
      %v1493 = vadd.f32 %v1470, %v1481
      %v1494 = vadd.f32 %v1471, %v1485
      %1501 = vrot.lane.b32.xlu0 %v1489, 127
      %v1502 = vpop.permute.xlu0 %1501
      %1503 = vrot.lane.b32.xlu0 %v1490, 127
      %v1504 = vpop.permute.xlu0 %1503
      %1505 = vrot.lane.b32.xlu0 %v1491, 127
      %v1506 = vpop.permute.xlu0 %1505
      %1507 = vrot.lane.b32.xlu0 %v1492, 127
      %v1508 = vpop.permute.xlu0 %1507
      %1509 = vrot.lane.b32.xlu0 %v1493, 127
      %v1510 = vpop.permute.xlu0 %1509
      %1511 = vrot.lane.b32.xlu0 %v1494, 127
      %v1512 = vpop.permute.xlu0 %1511
      %vm1513 = vcmask 1039360
      %v1514 = vsel %vm1513, %v1502, %v1504
      %v1515 = vsel %vm1513, %v1504, %v1506
      %v1516 = vsel %vm1513, %v1508, %v1510
      %v1517 = vsel %vm1513, %v1510, %v1512
      %v1522 = vmax.f32 %v1489, %v1514
      %v1523 = vmax.f32 %v1490, %v1515
      %v1524 = vmax.f32 %v1492, %v1516
      %v1525 = vmax.f32 %v1493, %v1517
      %v1528 = vmax.f32 %v1491, %v1506
      %v1529 = vmax.f32 %v1494, %v1512
      %1536 = vrot.lane.b32.xlu0 %v1522, 112
      %v1537 = vpop.permute.xlu0 %1536
      %1538 = vrot.lane.b32.xlu0 %v1523, 112
      %v1539 = vpop.permute.xlu0 %1538
      %1540 = vrot.lane.b32.xlu0 %v1528, 112
      %v1541 = vpop.permute.xlu0 %1540
      %1542 = vrot.lane.b32.xlu0 %v1524, 112
      %v1543 = vpop.permute.xlu0 %1542
      %1544 = vrot.lane.b32.xlu0 %v1525, 112
      %v1545 = vpop.permute.xlu0 %1544
      %1546 = vrot.lane.b32.xlu0 %v1529, 112
      %v1547 = vpop.permute.xlu0 %1546
      %vm1548 = vcmask 916480
      %v1549 = vsel %vm1548, %v1537, %v1539
      %v1550 = vsel %vm1548, %v1539, %v1541
      %v1551 = vsel %vm1548, %v1543, %v1545
      %v1552 = vsel %vm1548, %v1545, %v1547
      %v1557 = vmax.f32 %v1522, %v1549
      %v1558 = vmax.f32 %v1523, %v1550
      %v1559 = vmax.f32 %v1524, %v1551
      %v1560 = vmax.f32 %v1525, %v1552
      %v1561 = vpack.c.bf16 %v1559, %v1557
      %v1562 = vpack.c.bf16 %v1560, %v1558
      %v1565 = vunpack.c.l.b16 %v1561
      %v1566 = vunpack.c.l.b16 %v1562
      %v1567 = vunpack.c.h.b16 %v1561
      %v1568 = vunpack.c.h.b16 %v1562
      %v1569 = vpack.c.b16 %v1566, %v1565
      %v1570 = vpack.c.b16 %v1568, %v1567
      %1573 = vst [vmem:[%s224] sm:$0xff] %v1569
      %1574 = vst [vmem:[%s224 + $0x8] sm:$0x11] %v1570
      %p1575 = scmp.lt.s32.totalorder %s16, 1
      %s1576 = scalar_select %p1575, %s16, 1
      %s1577 = smul.addr %s1576, 4
      %s1578 = smul.addr %s1577, 4
      %s1579 = scalar_lea.vmem %s5, %s1578
      // Predicated region
      $region41: #{pnet_forward.3} parent=39 // pred_check
        %p1580 = pneg %p144
      $region42: #{pnet_forward.3} parent=39 // pred_check_branch
        %1582 = sbr.rel (%p1580) target = $region44
      $region43: #{pnet_forward.3} parent=39 // pred_region
        _
      $region44: #{pnet_forward.3} parent=39 // pred_fallthru
        _
    $region40: #{pnet_forward.3} parent=5 // pred_fallthru
      _
    %p1583 = scmp.le.s32.totalorder 2, %s11
    // Predicated region
    $region45: #{pnet_forward.3} parent=5 // pred_check
      %p1584 = pneg %p1583
    $region46: #{pnet_forward.3} parent=5 // pred_check_branch
      %1586 = sbr.rel (%p1584) target = $region48
    $region47: #{pnet_forward.3} parent=5 // pred_region
      %s1587 = ssub.s32 %s11, 2
      // Predicated region
      $region49: #{pnet_forward.3} parent=47 // pred_check
        %p1588 = pneg %p150
      $region50: #{pnet_forward.3} parent=47 // pred_check_branch
        %1590 = sbr.rel (%p1588) target = $region52
      $region51: #{pnet_forward.3} parent=47 // pred_region
        %p1591 = scmp.lt.s32.totalorder %s17, 1
        %s1592 = scalar_select %p1591, %s17, 1
        %s1593 = smul.addr %s1592, 4
        %s1594 = smul.addr %s1593, 4
        %s1595 = scalar_lea.vmem %s5, %s1594
      $region52: #{pnet_forward.3} parent=47 // pred_fallthru
        _
    $region48: #{pnet_forward.3} parent=5 // pred_fallthru
      _
  $region6: #{pnet_forward.3} parent=0 // loop_footer
    %s15 = sadd.s32 1, %s11
  $region7: #{pnet_forward.3} parent=0 // loop_footer_branch
    %10 = sbr.rel target = $region3
  $region8: #{pnet_forward.3} parent=0 // loop_exit
    _

// kernel: pnet_forward.4
$region0: #{pnet_forward.4}
  #allocation0 [shape = 'u32[]', space=smem, size = 0x4, offset = 0x4, fixed_abs, tag = 'smem constant byte address 0x4 - core index']
  #allocation1 [shape = 'u32[144,128]{1,0:T(1,128)}', space=vmem, size = 0x12000, scoped, tag = 'internal scratch']
  %s0 = inlined_call_operand.vmem [shape: bf16[2,10,65], index: 0, kind: input, shape index: {}]
  %s1 = inlined_call_operand.vmem [shape: bf16[9,16,10], index: 1, kind: input, shape index: {}]
  %s2 = inlined_call_operand.vmem [shape: f32[16,1], index: 2, kind: input, shape index: {}]
  %s3 = inlined_call_operand.vmem [shape: f32[16,1], index: 3, kind: input, shape index: {}]
  %s4 = inlined_call_operand.vmem [shape: bf16[2,16,65], index: 4, kind: output, shape index: {}]
  %s5 = sld [smem:[#allocation0]]
  $region49: #{pnet_forward.4} parent=0
    _
  %s7 = ssub.s32 1, %s5
  %s8 = scalar_select 0, %s7, %s5
  loop: start=0, step=1, limit=4
  $region2: #{pnet_forward.4} parent=0 // loop_pre_header
    _
  $region3: #{pnet_forward.4} parent=0 // loop_header
    %s10 = sphi 0, %s14
    %p11 = scmp.ge.s32.totalorder %s10, 4
    %s20 = sphi 0, %s22
    %s23 = sphi 0, %s20
    %s24 = sphi 0, %s23
    %s40 = sphi 0, %s24
    %s44 = sphi 0, %s44
    %s46 = sphi 0, %s44
    %s47 = sphi 0, %s46
    %s61 = sphi 0, %s47
    %s65 = sphi 0, %s65
    %s67 = sphi 0, %s65
    %s68 = sphi 0, %s67
    %s82 = sphi 0, %s68
    %s86 = sphi 0, %s86
    %s88 = sphi 0, %s86
    %s89 = sphi 0, %s88
    %s103 = sphi 0, %s89
    %s109 = sphi 0, %s111
    %s112 = sphi 0, %s109
    %s113 = sphi 0, %s112
    %s129 = sphi 0, %s113
  $region4: #{pnet_forward.4} parent=0 // loop_header_branch
    %13 = sbr.rel (%p11) target = $region8
  $region5: #{pnet_forward.4} parent=0 // loop_body
    %s15 = ssub.s32 %s10, 1
    %s16 = ssub.s32 %s10, 2
    %s17 = sadd.s32 %s10, 1
    %s18 = ssub.s32 %s10, %s17
    %p19 = scmp.eq.s32.totalorder %s18, 0
    %s21 = sadd.s32 %s20, 1
    %s22 = scalar_select %p19, %s20, %s21
    %p25 = pneg %p19
    %p26 = scmp.eq.s32.totalorder %s10, 1
    %p27 = por %p25, %p26
    %p28 = scmp.ne.s32.totalorder %s20, %s23
    %p29 = scmp.eq.s32.totalorder %s10, 0
    %p30 = por %p28, %p29
    %p31 = scmp.ne.s32.totalorder %s20, %s23
    %p32 = scmp.eq.s32.totalorder %s15, 1
    %p33 = por %p31, %p32
    %p34 = scmp.ne.s32.totalorder %s23, %s24
    %p35 = scmp.eq.s32.totalorder %s15, 0
    %p36 = por %p34, %p35
    %p37 = scmp.ne.s32.totalorder %s23, %s24
    %p38 = scmp.eq.s32.totalorder %s16, 1
    %p39 = por %p37, %p38
    %p41 = scmp.ne.s32.totalorder %s24, %s40
    %p42 = scmp.eq.s32.totalorder %s16, 0
    %p43 = por %p41, %p42
    %s45 = sadd.s32 %s44, 1
    %p48 = scmp.eq.s32.totalorder %s10, 1
    %p49 = scmp.ne.s32.totalorder %s44, %s46
    %p50 = scmp.eq.s32.totalorder %s10, 0
    %p51 = por %p49, %p50
    %p52 = scmp.ne.s32.totalorder %s44, %s46
    %p53 = scmp.eq.s32.totalorder %s15, 1
    %p54 = por %p52, %p53
    %p55 = scmp.ne.s32.totalorder %s46, %s47
    %p56 = scmp.eq.s32.totalorder %s15, 0
    %p57 = por %p55, %p56
    %p58 = scmp.ne.s32.totalorder %s46, %s47
    %p59 = scmp.eq.s32.totalorder %s16, 1
    %p60 = por %p58, %p59
    %p62 = scmp.ne.s32.totalorder %s47, %s61
    %p63 = scmp.eq.s32.totalorder %s16, 0
    %p64 = por %p62, %p63
    %s66 = sadd.s32 %s65, 1
    %p69 = scmp.eq.s32.totalorder %s10, 1
    %p70 = scmp.ne.s32.totalorder %s65, %s67
    %p71 = scmp.eq.s32.totalorder %s10, 0
    %p72 = por %p70, %p71
    %p73 = scmp.ne.s32.totalorder %s65, %s67
    %p74 = scmp.eq.s32.totalorder %s15, 1
    %p75 = por %p73, %p74
    %p76 = scmp.ne.s32.totalorder %s67, %s68
    %p77 = scmp.eq.s32.totalorder %s15, 0
    %p78 = por %p76, %p77
    %p79 = scmp.ne.s32.totalorder %s67, %s68
    %p80 = scmp.eq.s32.totalorder %s16, 1
    %p81 = por %p79, %p80
    %p83 = scmp.ne.s32.totalorder %s68, %s82
    %p84 = scmp.eq.s32.totalorder %s16, 0
    %p85 = por %p83, %p84
    %s87 = sadd.s32 %s86, 1
    %p90 = scmp.eq.s32.totalorder %s10, 1
    %p91 = scmp.ne.s32.totalorder %s86, %s88
    %p92 = scmp.eq.s32.totalorder %s10, 0
    %p93 = por %p91, %p92
    %p94 = scmp.ne.s32.totalorder %s86, %s88
    %p95 = scmp.eq.s32.totalorder %s15, 1
    %p96 = por %p94, %p95
    %p97 = scmp.ne.s32.totalorder %s88, %s89
    %p98 = scmp.eq.s32.totalorder %s15, 0
    %p99 = por %p97, %p98
    %p100 = scmp.ne.s32.totalorder %s88, %s89
    %p101 = scmp.eq.s32.totalorder %s16, 1
    %p102 = por %p100, %p101
    %p104 = scmp.ne.s32.totalorder %s89, %s103
    %p105 = scmp.eq.s32.totalorder %s16, 0
    %p106 = por %p104, %p105
    %s107 = ssub.s32 %s10, %s17
    %p108 = scmp.eq.s32.totalorder %s107, 0
    %s110 = sadd.s32 %s109, 1
    %s111 = scalar_select %p108, %s109, %s110
    %p114 = pneg %p108
    %p115 = scmp.eq.s32.totalorder %s10, 1
    %p116 = por %p114, %p115
    %p117 = scmp.ne.s32.totalorder %s109, %s112
    %p118 = scmp.eq.s32.totalorder %s10, 0
    %p119 = por %p117, %p118
    %p120 = scmp.ne.s32.totalorder %s109, %s112
    %p121 = scmp.eq.s32.totalorder %s15, 1
    %p122 = por %p120, %p121
    %p123 = scmp.ne.s32.totalorder %s112, %s113
    %p124 = scmp.eq.s32.totalorder %s15, 0
    %p125 = por %p123, %p124
    %p126 = scmp.ne.s32.totalorder %s112, %s113
    %p127 = scmp.eq.s32.totalorder %s16, 1
    %p128 = por %p126, %p127
    %p130 = scmp.ne.s32.totalorder %s113, %s129
    %p131 = scmp.eq.s32.totalorder %s16, 0
    %p132 = por %p130, %p131
    %p133 = scmp.le.s32.totalorder 1, %s10
    %p134 = scmp.lt.s32.totalorder %s10, 3
    %p135 = pnand %p133, %p134
    %p136 = pneg %p135
    // Predicated region
    $region9: #{pnet_forward.4} parent=5 // pred_check
      _
    $region10: #{pnet_forward.4} parent=5 // pred_check_branch
      %138 = sbr.rel (%p135) target = $region12
    $region11: #{pnet_forward.4} parent=5 // pred_region
      %s139 = ssub.s32 %s10, 1
      // Predicated region
      $region13: #{pnet_forward.4} parent=11 // pred_check
        %p140 = pneg %p57
      $region14: #{pnet_forward.4} parent=11 // pred_check_branch
        %142 = sbr.rel (%p140) target = $region16
      $region15: #{pnet_forward.4} parent=11 // pred_region
        _
      $region16: #{pnet_forward.4} parent=11 // pred_fallthru
        _
      // Predicated region
      $region17: #{pnet_forward.4} parent=11 // pred_check
        %p143 = pneg %p78
      $region18: #{pnet_forward.4} parent=11 // pred_check_branch
        %145 = sbr.rel (%p143) target = $region20
      $region19: #{pnet_forward.4} parent=11 // pred_region
        _
      $region20: #{pnet_forward.4} parent=11 // pred_fallthru
        _
      // Predicated region
      $region21: #{pnet_forward.4} parent=11 // pred_check
        %p146 = pneg %p99
      $region22: #{pnet_forward.4} parent=11 // pred_check_branch
        %148 = sbr.rel (%p146) target = $region24
      $region23: #{pnet_forward.4} parent=11 // pred_region
        _
      $region24: #{pnet_forward.4} parent=11 // pred_fallthru
        _
    $region12: #{pnet_forward.4} parent=5 // pred_fallthru
      _
    %p149 = scmp.lt.s32.totalorder %s10, 2
    // Predicated region
    $region25: #{pnet_forward.4} parent=5 // pred_check
      %p150 = pneg %p149
    $region26: #{pnet_forward.4} parent=5 // pred_check_branch
      %152 = sbr.rel (%p150) target = $region28
    $region27: #{pnet_forward.4} parent=5 // pred_region
      // Predicated region
      $region29: #{pnet_forward.4} parent=27 // pred_check
        %p153 = pneg %p30
      $region30: #{pnet_forward.4} parent=27 // pred_check_branch
        %155 = sbr.rel (%p153) target = $region32
      $region31: #{pnet_forward.4} parent=27 // pred_region
        %p156 = scmp.lt.s32.totalorder %s10, 1
        %s157 = scalar_select %p156, %s10, 1
        %s158 = smul.addr %s157, 2
        %s159 = smul.addr %s158, 4
        %s160 = scalar_lea.vmem %s0, %s159
      $region32: #{pnet_forward.4} parent=27 // pred_fallthru
        _
    $region28: #{pnet_forward.4} parent=5 // pred_fallthru
      _
    %p161 = scmp.le.s32.totalorder 1, %s10
    %p162 = scmp.lt.s32.totalorder %s10, 3
    %p163 = pnand %p161, %p162
    %p164 = pneg %p163
    // Predicated region
    $region33: #{pnet_forward.4} parent=5 // pred_check
      _
    $region34: #{pnet_forward.4} parent=5 // pred_check_branch
      %166 = sbr.rel (%p163) target = $region36
    $region35: #{pnet_forward.4} parent=5 // pred_region
      %s167 = ssub.s32 %s10, 1
      %p168 = scmp.lt.s32.totalorder %s15, 1
      %s169 = scalar_select %p168, %s15, 1
      %s170 = smul.addr %s169, 2
      %s171 = smul.addr %s170, 4
      %s172 = scalar_lea.vmem %s0, %s171
      %p173 = pneg %p36
      %p174 = pneg %p33
      %p175 = pneg %p57
      %p176 = pneg %p54
      %p177 = pneg %p78
      %p178 = pneg %p75
      %p179 = pneg %p99
      %p180 = pneg %p96
      %p181 = pneg %p125
      %p182 = pneg %p122
      %p183 = scmp.lt.s32.totalorder %s15, 1
      %s184 = scalar_select %p183, %s15, 1
      %s185 = smul.addr %s184, 2
      %s186 = smul.addr %s185, 4
      %s187 = scalar_lea.vmem %s4, %s186
      %p188 = scmp.lt.s32.totalorder %s15, 1
      %s189 = scalar_select %p188, %s15, 1
      %s190 = smul.addr %s189, 2
      %s191 = smul.addr %s190, 4
      %s192 = scalar_lea.vmem %s0, %s191
      %p193 = scmp.lt.s32.totalorder %s15, 1
      %s194 = scalar_select %p193, %s15, 1
      %s195 = smul.addr %s194, 2
      %s196 = smul.addr %s195, 4
      %s197 = scalar_lea.vmem %s4, %s196
      %v199 = vld [vmem:[%s192] sm:$0xf]
      %v200 = vld [vmem:[%s192 + $0x4] sm:$0x1]
      %v201 = vld [vmem:[%s1] sm:$0xf]
      %v202 = vld [vmem:[%s1 + $0x4] sm:$0xf]
      %s203 = scalar_lea.vmem %s1, 8
      %v204 = vld [vmem:[%s203] sm:$0xf]
      %v205 = vld [vmem:[%s203 + $0x4] sm:$0xf]
      %v208 = vunpack.c.l.b16 %v204
      %v209 = vunpack.c.l.b16 %v205
      %v210 = vpack.c.b16 %v209, %v208
      %v213 = vunpack.c.l.b16 %v199
      %v214 = vunpack.c.l.b16 %v200
      %v215 = vpack.c.b16 %v214, %v213
      %216 = vrot.lane.b32.xlu0 %v215, 127
      %v217 = vpop.permute.xlu0 %216
      %vm218 = vcmask 80896
      %v220 = vsel %vm218, %v210, 0
      %vm222 = vcmask 1044480
      %v224 = vsel %vm222, %v217, 0
      %226 = vmatprep.subr.bf16.mxu0 0
      %227 = vmatpush1.bf16.msra.mxu0 %v224
      %228 = vmatprep.subr.bf16.mxu0 0
      %229 = vmatpush1.bf16.msra.mxu0 0
      %230 = vmatprep.subr.bf16.mxu0 0
      %231 = vmatpush1.bf16.msra.mxu0 0
      %232 = vmatprep.subr.bf16.mxu0 0
      %233 = vmatpush1.bf16.msra.mxu0 0
      %234 = vmatprep.subr.bf16.mxu0 0
      %235 = vmatpush1.bf16.msra.mxu0 0
      %236 = vmatprep.subr.bf16.mxu0 0
      %237 = vmatpush1.bf16.msra.mxu0 0
      %238 = vmatprep.subr.bf16.mxu0 0
      %239 = vmatpush1.bf16.msra.mxu0 0
      %240 = vmatprep.subr.bf16.mxu0 0
      %241 = vmatpush1.bf16.msra.mxu0 0
      %242 = vmatprep.subr.bf16.mxu0 0
      %243 = vmatpush1.bf16.msra.mxu0 0
      %244 = vmatprep.subr.bf16.mxu0 0
      %245 = vmatpush1.bf16.msra.mxu0 0
      %246 = vmatprep.subr.bf16.mxu0 0
      %247 = vmatpush1.bf16.msra.mxu0 0
      %248 = vmatprep.subr.bf16.mxu0 0
      %249 = vmatpush1.bf16.msra.mxu0 0
      %250 = vmatprep.subr.bf16.mxu0 0
      %251 = vmatpush1.bf16.msra.mxu0 0
      %252 = vmatprep.subr.bf16.mxu0 0
      %253 = vmatpush1.bf16.msra.mxu0 0
      %254 = vmatprep.subr.bf16.mxu0 0
      %255 = vmatpush1.bf16.msra.mxu0 0
      %256 = vmatprep.subr.bf16.mxu0 0
      %257 = vmatpush1.bf16.msra.mxu0 0
      %258 = vmatprep.mubr.bf16.mxu0 0
      %259 = vmatmul.mubr.bf16.gmra.mrb[0].mxu0 %v220
      %v260 = vpop.f32.mrb[0].mxu0
      %v261 = vadd.f32 0.0, %v260
      %v262 = vpop.f32.mrb[0].mxu0
      %v263 = vpop.f32.mrb[0].mxu0
      %v264 = vadd.f32 0.0, %v263
      %v265 = vpop.f32.mrb[0].mxu0
      %266 = vdwg.mxu0
      %v269 = vunpack.c.l.b16 %v201
      %v270 = vunpack.c.l.b16 %v202
      %v271 = vpack.c.b16 %v270, %v269
      %v273 = vsel %vm218, %v271, 0
      %v276 = vsel %vm222, %v215, 0
      %278 = vmatprep.subr.bf16.mxu0 0
      %279 = vmatpush1.bf16.msra.mxu0 %v276
      %280 = vmatprep.subr.bf16.mxu0 0
      %281 = vmatpush1.bf16.msra.mxu0 0
      %282 = vmatprep.subr.bf16.mxu0 0
      %283 = vmatpush1.bf16.msra.mxu0 0
      %284 = vmatprep.subr.bf16.mxu0 0
      %285 = vmatpush1.bf16.msra.mxu0 0
      %286 = vmatprep.subr.bf16.mxu0 0
      %287 = vmatpush1.bf16.msra.mxu0 0
      %288 = vmatprep.subr.bf16.mxu0 0
      %289 = vmatpush1.bf16.msra.mxu0 0
      %290 = vmatprep.subr.bf16.mxu0 0
      %291 = vmatpush1.bf16.msra.mxu0 0
      %292 = vmatprep.subr.bf16.mxu0 0
      %293 = vmatpush1.bf16.msra.mxu0 0
      %294 = vmatprep.subr.bf16.mxu0 0
      %295 = vmatpush1.bf16.msra.mxu0 0
      %296 = vmatprep.subr.bf16.mxu0 0
      %297 = vmatpush1.bf16.msra.mxu0 0
      %298 = vmatprep.subr.bf16.mxu0 0
      %299 = vmatpush1.bf16.msra.mxu0 0
      %300 = vmatprep.subr.bf16.mxu0 0
      %301 = vmatpush1.bf16.msra.mxu0 0
      %302 = vmatprep.subr.bf16.mxu0 0
      %303 = vmatpush1.bf16.msra.mxu0 0
      %304 = vmatprep.subr.bf16.mxu0 0
      %305 = vmatpush1.bf16.msra.mxu0 0
      %306 = vmatprep.subr.bf16.mxu0 0
      %307 = vmatpush1.bf16.msra.mxu0 0
      %308 = vmatprep.subr.bf16.mxu0 0
      %309 = vmatpush1.bf16.msra.mxu0 0
      %310 = vmatprep.mubr.bf16.mxu0 0
      %311 = vmatmul.mubr.bf16.gmra.mrb[0].mxu0 %v273
      %v312 = vpop.f32.mrb[0].mxu0
      %v313 = vadd.f32 %v261, %v312
      %v314 = vpop.f32.mrb[0].mxu0
      %v315 = vpop.f32.mrb[0].mxu0
      %v316 = vadd.f32 %v264, %v315
      %v317 = vpop.f32.mrb[0].mxu0
      %318 = vdwg.mxu0
      %s319 = scalar_lea.vmem %s1, 16
      %v320 = vld [vmem:[%s319] sm:$0xf]
      %v321 = vld [vmem:[%s319 + $0x4] sm:$0xf]
      %v324 = vunpack.c.l.b16 %v320
      %v325 = vunpack.c.l.b16 %v321
      %v326 = vpack.c.b16 %v325, %v324
      %327 = vrot.lane.b32.xlu0 %v215, 126
      %v328 = vpop.permute.xlu0 %327
      %v330 = vsel %vm218, %v326, 0
      %v333 = vsel %vm222, %v328, 0
      %335 = vmatprep.subr.bf16.mxu0 0
      %336 = vmatpush1.bf16.msra.mxu0 %v333
      %337 = vmatprep.subr.bf16.mxu0 0
      %338 = vmatpush1.bf16.msra.mxu0 0
      %339 = vmatprep.subr.bf16.mxu0 0
      %340 = vmatpush1.bf16.msra.mxu0 0
      %341 = vmatprep.subr.bf16.mxu0 0
      %342 = vmatpush1.bf16.msra.mxu0 0
      %343 = vmatprep.subr.bf16.mxu0 0
      %344 = vmatpush1.bf16.msra.mxu0 0
      %345 = vmatprep.subr.bf16.mxu0 0
      %346 = vmatpush1.bf16.msra.mxu0 0
      %347 = vmatprep.subr.bf16.mxu0 0
      %348 = vmatpush1.bf16.msra.mxu0 0
      %349 = vmatprep.subr.bf16.mxu0 0
      %350 = vmatpush1.bf16.msra.mxu0 0
      %351 = vmatprep.subr.bf16.mxu0 0
      %352 = vmatpush1.bf16.msra.mxu0 0
      %353 = vmatprep.subr.bf16.mxu0 0
      %354 = vmatpush1.bf16.msra.mxu0 0
      %355 = vmatprep.subr.bf16.mxu0 0
      %356 = vmatpush1.bf16.msra.mxu0 0
      %357 = vmatprep.subr.bf16.mxu0 0
      %358 = vmatpush1.bf16.msra.mxu0 0
      %359 = vmatprep.subr.bf16.mxu0 0
      %360 = vmatpush1.bf16.msra.mxu0 0
      %361 = vmatprep.subr.bf16.mxu0 0
      %362 = vmatpush1.bf16.msra.mxu0 0
      %363 = vmatprep.subr.bf16.mxu0 0
      %364 = vmatpush1.bf16.msra.mxu0 0
      %365 = vmatprep.subr.bf16.mxu0 0
      %366 = vmatpush1.bf16.msra.mxu0 0
      %367 = vmatprep.mubr.bf16.mxu0 0
      %368 = vmatmul.mubr.bf16.gmra.mrb[0].mxu0 %v330
      %v369 = vpop.f32.mrb[0].mxu0
      %v370 = vadd.f32 0.0, %v369
      %v371 = vpop.f32.mrb[0].mxu0
      %v372 = vpop.f32.mrb[0].mxu0
      %v373 = vadd.f32 0.0, %v372
      %v374 = vpop.f32.mrb[0].mxu0
      %375 = vdwg.mxu0
      %v376 = vadd.f32 %v313, %v370
      %v377 = vadd.f32 %v316, %v373
      %s378 = scalar_lea.vmem %s1, 24
      %v379 = vld [vmem:[%s378] sm:$0xf]
      %v380 = vld [vmem:[%s378 + $0x4] sm:$0xf]
      %v383 = vunpack.c.l.b16 %v379
      %v384 = vunpack.c.l.b16 %v380
      %v385 = vpack.c.b16 %v384, %v383
      %386 = vrot.lane.b32.xlu0 %v215, 121
      %v387 = vpop.permute.xlu0 %386
      %v389 = vsel %vm218, %v385, 0
      %v392 = vsel %vm222, %v387, 0
      %394 = vmatprep.subr.bf16.mxu0 0
      %395 = vmatpush1.bf16.msra.mxu0 %v392
      %396 = vmatprep.subr.bf16.mxu0 0
      %397 = vmatpush1.bf16.msra.mxu0 0
      %398 = vmatprep.subr.bf16.mxu0 0
      %399 = vmatpush1.bf16.msra.mxu0 0
      %400 = vmatprep.subr.bf16.mxu0 0
      %401 = vmatpush1.bf16.msra.mxu0 0
      %402 = vmatprep.subr.bf16.mxu0 0
      %403 = vmatpush1.bf16.msra.mxu0 0
      %404 = vmatprep.subr.bf16.mxu0 0
      %405 = vmatpush1.bf16.msra.mxu0 0
      %406 = vmatprep.subr.bf16.mxu0 0
      %407 = vmatpush1.bf16.msra.mxu0 0
      %408 = vmatprep.subr.bf16.mxu0 0
      %409 = vmatpush1.bf16.msra.mxu0 0
      %410 = vmatprep.subr.bf16.mxu0 0
      %411 = vmatpush1.bf16.msra.mxu0 0
      %412 = vmatprep.subr.bf16.mxu0 0
      %413 = vmatpush1.bf16.msra.mxu0 0
      %414 = vmatprep.subr.bf16.mxu0 0
      %415 = vmatpush1.bf16.msra.mxu0 0
      %416 = vmatprep.subr.bf16.mxu0 0
      %417 = vmatpush1.bf16.msra.mxu0 0
      %418 = vmatprep.subr.bf16.mxu0 0
      %419 = vmatpush1.bf16.msra.mxu0 0
      %420 = vmatprep.subr.bf16.mxu0 0
      %421 = vmatpush1.bf16.msra.mxu0 0
      %422 = vmatprep.subr.bf16.mxu0 0
      %423 = vmatpush1.bf16.msra.mxu0 0
      %424 = vmatprep.subr.bf16.mxu0 0
      %425 = vmatpush1.bf16.msra.mxu0 0
      %426 = vmatprep.mubr.bf16.mxu0 0
      %427 = vmatmul.mubr.bf16.gmra.mrb[0].mxu0 %v389
      %v428 = vpop.f32.mrb[0].mxu0
      %v429 = vadd.f32 0.0, %v428
      %v430 = vpop.f32.mrb[0].mxu0
      %v431 = vpop.f32.mrb[0].mxu0
      %v432 = vadd.f32 0.0, %v431
      %v433 = vpop.f32.mrb[0].mxu0
      %434 = vdwg.mxu0
      %v435 = vadd.f32 %v376, %v429
      %v436 = vadd.f32 %v377, %v432
      %s437 = scalar_lea.vmem %s1, 32
      %v438 = vld [vmem:[%s437] sm:$0xf]
      %v439 = vld [vmem:[%s437 + $0x4] sm:$0xf]
      %v442 = vunpack.c.l.b16 %v438
      %v443 = vunpack.c.l.b16 %v439
      %v444 = vpack.c.b16 %v443, %v442
      %445 = vrot.lane.b32.xlu0 %v215, 120
      %v446 = vpop.permute.xlu0 %445
      %v448 = vsel %vm218, %v444, 0
      %v451 = vsel %vm222, %v446, 0
      %453 = vmatprep.subr.bf16.mxu0 0
      %454 = vmatpush1.bf16.msra.mxu0 %v451
      %455 = vmatprep.subr.bf16.mxu0 0
      %456 = vmatpush1.bf16.msra.mxu0 0
      %457 = vmatprep.subr.bf16.mxu0 0
      %458 = vmatpush1.bf16.msra.mxu0 0
      %459 = vmatprep.subr.bf16.mxu0 0
      %460 = vmatpush1.bf16.msra.mxu0 0
      %461 = vmatprep.subr.bf16.mxu0 0
      %462 = vmatpush1.bf16.msra.mxu0 0
      %463 = vmatprep.subr.bf16.mxu0 0
      %464 = vmatpush1.bf16.msra.mxu0 0
      %465 = vmatprep.subr.bf16.mxu0 0
      %466 = vmatpush1.bf16.msra.mxu0 0
      %467 = vmatprep.subr.bf16.mxu0 0
      %468 = vmatpush1.bf16.msra.mxu0 0
      %469 = vmatprep.subr.bf16.mxu0 0
      %470 = vmatpush1.bf16.msra.mxu0 0
      %471 = vmatprep.subr.bf16.mxu0 0
      %472 = vmatpush1.bf16.msra.mxu0 0
      %473 = vmatprep.subr.bf16.mxu0 0
      %474 = vmatpush1.bf16.msra.mxu0 0
      %475 = vmatprep.subr.bf16.mxu0 0
      %476 = vmatpush1.bf16.msra.mxu0 0
      %477 = vmatprep.subr.bf16.mxu0 0
      %478 = vmatpush1.bf16.msra.mxu0 0
      %479 = vmatprep.subr.bf16.mxu0 0
      %480 = vmatpush1.bf16.msra.mxu0 0
      %481 = vmatprep.subr.bf16.mxu0 0
      %482 = vmatpush1.bf16.msra.mxu0 0
      %483 = vmatprep.subr.bf16.mxu0 0
      %484 = vmatpush1.bf16.msra.mxu0 0
      %485 = vmatprep.mubr.bf16.mxu0 0
      %486 = vmatmul.mubr.bf16.gmra.mrb[0].mxu0 %v448
      %v487 = vpop.f32.mrb[0].mxu0
      %v488 = vadd.f32 0.0, %v487
      %v489 = vpop.f32.mrb[0].mxu0
      %v490 = vpop.f32.mrb[0].mxu0
      %v491 = vadd.f32 0.0, %v490
      %v492 = vpop.f32.mrb[0].mxu0
      %493 = vdwg.mxu0
      %v494 = vadd.f32 %v435, %v488
      %v495 = vadd.f32 %v436, %v491
      %s496 = scalar_lea.vmem %s1, 40
      %v497 = vld [vmem:[%s496] sm:$0xf]
      %v498 = vld [vmem:[%s496 + $0x4] sm:$0xf]
      %v501 = vunpack.c.l.b16 %v497
      %v502 = vunpack.c.l.b16 %v498
      %v503 = vpack.c.b16 %v502, %v501
      %504 = vrot.lane.b32.xlu0 %v215, 119
      %v505 = vpop.permute.xlu0 %504
      %v507 = vsel %vm218, %v503, 0
      %v510 = vsel %vm222, %v505, 0
      %512 = vmatprep.subr.bf16.mxu0 0
      %513 = vmatpush1.bf16.msra.mxu0 %v510
      %514 = vmatprep.subr.bf16.mxu0 0
      %515 = vmatpush1.bf16.msra.mxu0 0
      %516 = vmatprep.subr.bf16.mxu0 0
      %517 = vmatpush1.bf16.msra.mxu0 0
      %518 = vmatprep.subr.bf16.mxu0 0
      %519 = vmatpush1.bf16.msra.mxu0 0
      %520 = vmatprep.subr.bf16.mxu0 0
      %521 = vmatpush1.bf16.msra.mxu0 0
      %522 = vmatprep.subr.bf16.mxu0 0
      %523 = vmatpush1.bf16.msra.mxu0 0
      %524 = vmatprep.subr.bf16.mxu0 0
      %525 = vmatpush1.bf16.msra.mxu0 0
      %526 = vmatprep.subr.bf16.mxu0 0
      %527 = vmatpush1.bf16.msra.mxu0 0
      %528 = vmatprep.subr.bf16.mxu0 0
      %529 = vmatpush1.bf16.msra.mxu0 0
      %530 = vmatprep.subr.bf16.mxu0 0
      %531 = vmatpush1.bf16.msra.mxu0 0
      %532 = vmatprep.subr.bf16.mxu0 0
      %533 = vmatpush1.bf16.msra.mxu0 0
      %534 = vmatprep.subr.bf16.mxu0 0
      %535 = vmatpush1.bf16.msra.mxu0 0
      %536 = vmatprep.subr.bf16.mxu0 0
      %537 = vmatpush1.bf16.msra.mxu0 0
      %538 = vmatprep.subr.bf16.mxu0 0
      %539 = vmatpush1.bf16.msra.mxu0 0
      %540 = vmatprep.subr.bf16.mxu0 0
      %541 = vmatpush1.bf16.msra.mxu0 0
      %542 = vmatprep.subr.bf16.mxu0 0
      %543 = vmatpush1.bf16.msra.mxu0 0
      %544 = vmatprep.mubr.bf16.mxu0 0
      %545 = vmatmul.mubr.bf16.gmra.mrb[0].mxu0 %v507
      %v546 = vpop.f32.mrb[0].mxu0
      %v547 = vadd.f32 0.0, %v546
      %v548 = vpop.f32.mrb[0].mxu0
      %v549 = vpop.f32.mrb[0].mxu0
      %v550 = vadd.f32 0.0, %v549
      %v551 = vpop.f32.mrb[0].mxu0
      %552 = vdwg.mxu0
      %v553 = vadd.f32 %v494, %v547
      %v554 = vadd.f32 %v495, %v550
      %s555 = scalar_lea.vmem %s1, 48
      %v556 = vld [vmem:[%s555] sm:$0xf]
      %v557 = vld [vmem:[%s555 + $0x4] sm:$0xf]
      %v560 = vunpack.c.l.b16 %v556
      %v561 = vunpack.c.l.b16 %v557
      %v562 = vpack.c.b16 %v561, %v560
      %563 = vrot.lane.b32.xlu0 %v215, 114
      %v564 = vpop.permute.xlu0 %563
      %v566 = vsel %vm218, %v562, 0
      %v569 = vsel %vm222, %v564, 0
      %571 = vmatprep.subr.bf16.mxu0 0
      %572 = vmatpush1.bf16.msra.mxu0 %v569
      %573 = vmatprep.subr.bf16.mxu0 0
      %574 = vmatpush1.bf16.msra.mxu0 0
      %575 = vmatprep.subr.bf16.mxu0 0
      %576 = vmatpush1.bf16.msra.mxu0 0
      %577 = vmatprep.subr.bf16.mxu0 0
      %578 = vmatpush1.bf16.msra.mxu0 0
      %579 = vmatprep.subr.bf16.mxu0 0
      %580 = vmatpush1.bf16.msra.mxu0 0
      %581 = vmatprep.subr.bf16.mxu0 0
      %582 = vmatpush1.bf16.msra.mxu0 0
      %583 = vmatprep.subr.bf16.mxu0 0
      %584 = vmatpush1.bf16.msra.mxu0 0
      %585 = vmatprep.subr.bf16.mxu0 0
      %586 = vmatpush1.bf16.msra.mxu0 0
      %587 = vmatprep.subr.bf16.mxu0 0
      %588 = vmatpush1.bf16.msra.mxu0 0
      %589 = vmatprep.subr.bf16.mxu0 0
      %590 = vmatpush1.bf16.msra.mxu0 0
      %591 = vmatprep.subr.bf16.mxu0 0
      %592 = vmatpush1.bf16.msra.mxu0 0
      %593 = vmatprep.subr.bf16.mxu0 0
      %594 = vmatpush1.bf16.msra.mxu0 0
      %595 = vmatprep.subr.bf16.mxu0 0
      %596 = vmatpush1.bf16.msra.mxu0 0
      %597 = vmatprep.subr.bf16.mxu0 0
      %598 = vmatpush1.bf16.msra.mxu0 0
      %599 = vmatprep.subr.bf16.mxu0 0
      %600 = vmatpush1.bf16.msra.mxu0 0
      %601 = vmatprep.subr.bf16.mxu0 0
      %602 = vmatpush1.bf16.msra.mxu0 0
      %603 = vmatprep.mubr.bf16.mxu0 0
      %604 = vmatmul.mubr.bf16.gmra.mrb[0].mxu0 %v566
      %v605 = vpop.f32.mrb[0].mxu0
      %v606 = vadd.f32 0.0, %v605
      %v607 = vpop.f32.mrb[0].mxu0
      %v608 = vpop.f32.mrb[0].mxu0
      %v609 = vadd.f32 0.0, %v608
      %v610 = vpop.f32.mrb[0].mxu0
      %611 = vdwg.mxu0
      %v612 = vadd.f32 %v553, %v606
      %v613 = vadd.f32 %v554, %v609
      %s614 = scalar_lea.vmem %s1, 56
      %v615 = vld [vmem:[%s614] sm:$0xf]
      %v616 = vld [vmem:[%s614 + $0x4] sm:$0xf]
      %v619 = vunpack.c.l.b16 %v615
      %v620 = vunpack.c.l.b16 %v616
      %v621 = vpack.c.b16 %v620, %v619
      %622 = vrot.lane.b32.xlu0 %v215, 113
      %v623 = vpop.permute.xlu0 %622
      %v625 = vsel %vm218, %v621, 0
      %v628 = vsel %vm222, %v623, 0
      %630 = vmatprep.subr.bf16.mxu0 0
      %631 = vmatpush1.bf16.msra.mxu0 %v628
      %632 = vmatprep.subr.bf16.mxu0 0
      %633 = vmatpush1.bf16.msra.mxu0 0
      %634 = vmatprep.subr.bf16.mxu0 0
      %635 = vmatpush1.bf16.msra.mxu0 0
      %636 = vmatprep.subr.bf16.mxu0 0
      %637 = vmatpush1.bf16.msra.mxu0 0
      %638 = vmatprep.subr.bf16.mxu0 0
      %639 = vmatpush1.bf16.msra.mxu0 0
      %640 = vmatprep.subr.bf16.mxu0 0
      %641 = vmatpush1.bf16.msra.mxu0 0
      %642 = vmatprep.subr.bf16.mxu0 0
      %643 = vmatpush1.bf16.msra.mxu0 0
      %644 = vmatprep.subr.bf16.mxu0 0
      %645 = vmatpush1.bf16.msra.mxu0 0
      %646 = vmatprep.subr.bf16.mxu0 0
      %647 = vmatpush1.bf16.msra.mxu0 0
      %648 = vmatprep.subr.bf16.mxu0 0
      %649 = vmatpush1.bf16.msra.mxu0 0
      %650 = vmatprep.subr.bf16.mxu0 0
      %651 = vmatpush1.bf16.msra.mxu0 0
      %652 = vmatprep.subr.bf16.mxu0 0
      %653 = vmatpush1.bf16.msra.mxu0 0
      %654 = vmatprep.subr.bf16.mxu0 0
      %655 = vmatpush1.bf16.msra.mxu0 0
      %656 = vmatprep.subr.bf16.mxu0 0
      %657 = vmatpush1.bf16.msra.mxu0 0
      %658 = vmatprep.subr.bf16.mxu0 0
      %659 = vmatpush1.bf16.msra.mxu0 0
      %660 = vmatprep.subr.bf16.mxu0 0
      %661 = vmatpush1.bf16.msra.mxu0 0
      %662 = vmatprep.mubr.bf16.mxu0 0
      %663 = vmatmul.mubr.bf16.gmra.mrb[0].mxu0 %v625
      %v664 = vpop.f32.mrb[0].mxu0
      %v665 = vadd.f32 0.0, %v664
      %v666 = vpop.f32.mrb[0].mxu0
      %v667 = vpop.f32.mrb[0].mxu0
      %v668 = vadd.f32 0.0, %v667
      %v669 = vpop.f32.mrb[0].mxu0
      %670 = vdwg.mxu0
      %v671 = vadd.f32 %v612, %v665
      %v672 = vadd.f32 %v613, %v668
      %s673 = scalar_lea.vmem %s1, 64
      %v674 = vld [vmem:[%s673] sm:$0xf]
      %v675 = vld [vmem:[%s673 + $0x4] sm:$0xf]
      %v678 = vunpack.c.l.b16 %v674
      %v679 = vunpack.c.l.b16 %v675
      %v680 = vpack.c.b16 %v679, %v678
      %681 = vrot.lane.b32.xlu0 %v215, 112
      %v682 = vpop.permute.xlu0 %681
      %v684 = vsel %vm218, %v680, 0
      %v687 = vsel %vm222, %v682, 0
      %689 = vmatprep.subr.bf16.mxu0 0
      %690 = vmatpush1.bf16.msra.mxu0 %v687
      %691 = vmatprep.subr.bf16.mxu0 0
      %692 = vmatpush1.bf16.msra.mxu0 0
      %693 = vmatprep.subr.bf16.mxu0 0
      %694 = vmatpush1.bf16.msra.mxu0 0
      %695 = vmatprep.subr.bf16.mxu0 0
      %696 = vmatpush1.bf16.msra.mxu0 0
      %697 = vmatprep.subr.bf16.mxu0 0
      %698 = vmatpush1.bf16.msra.mxu0 0
      %699 = vmatprep.subr.bf16.mxu0 0
      %700 = vmatpush1.bf16.msra.mxu0 0
      %701 = vmatprep.subr.bf16.mxu0 0
      %702 = vmatpush1.bf16.msra.mxu0 0
      %703 = vmatprep.subr.bf16.mxu0 0
      %704 = vmatpush1.bf16.msra.mxu0 0
      %705 = vmatprep.subr.bf16.mxu0 0
      %706 = vmatpush1.bf16.msra.mxu0 0
      %707 = vmatprep.subr.bf16.mxu0 0
      %708 = vmatpush1.bf16.msra.mxu0 0
      %709 = vmatprep.subr.bf16.mxu0 0
      %710 = vmatpush1.bf16.msra.mxu0 0
      %711 = vmatprep.subr.bf16.mxu0 0
      %712 = vmatpush1.bf16.msra.mxu0 0
      %713 = vmatprep.subr.bf16.mxu0 0
      %714 = vmatpush1.bf16.msra.mxu0 0
      %715 = vmatprep.subr.bf16.mxu0 0
      %716 = vmatpush1.bf16.msra.mxu0 0
      %717 = vmatprep.subr.bf16.mxu0 0
      %718 = vmatpush1.bf16.msra.mxu0 0
      %719 = vmatprep.subr.bf16.mxu0 0
      %720 = vmatpush1.bf16.msra.mxu0 0
      %721 = vmatprep.mubr.bf16.mxu0 0
      %722 = vmatmul.mubr.bf16.gmra.mrb[0].mxu0 %v684
      %v723 = vpop.f32.mrb[0].mxu0
      %v724 = vadd.f32 0.0, %v723
      %v725 = vpop.f32.mrb[0].mxu0
      %v726 = vpop.f32.mrb[0].mxu0
      %v727 = vadd.f32 0.0, %v726
      %v728 = vpop.f32.mrb[0].mxu0
      %729 = vdwg.mxu0
      %v730 = vadd.f32 %v671, %v724
      %v731 = vadd.f32 %v672, %v727
      %v732 = vld [vmem:[%s2] sm:$0xff]
      %v733 = vld [vmem:[%s2 + $0x8] sm:$0xff]
      %735 = vset.pattern.permute.xlu0 0
      %736 = vperm.xlu0 %735, %v732
      %v737 = vpop.permute.xlu0 %736
      %740 = vset.pattern.permute.xlu0 0
      %741 = vperm.xlu0 %740, %v733
      %v742 = vpop.permute.xlu0 %741
      %v744 = vadd.f32 %v730, %v737
      %v745 = vadd.f32 %v731, %v742
      %v746 = vld [vmem:[%s3] sm:$0xff]
      %v747 = vld [vmem:[%s3 + $0x8] sm:$0xff]
      %vm748 = vcmp.gt.f32.partialorder %v744, 0.0
      %vm749 = vcmp.gt.f32.partialorder %v745, 0.0
      %751 = vset.pattern.permute.xlu0 0
      %752 = vperm.xlu0 %751, %v746
      %v753 = vpop.permute.xlu0 %752
      %756 = vset.pattern.permute.xlu0 0
      %757 = vperm.xlu0 %756, %v747
      %v758 = vpop.permute.xlu0 %757
      %v760 = vmul.f32 %v744, %v753
      %v761 = vmul.f32 %v745, %v758
      %v762 = vsel %vm748, %v744, %v760
      %v763 = vsel %vm749, %v745, %v761
      %v764 = vpack.c.bf16 %v763, %v762
      %vm765 = vcmask 400384
      %v768 = vsel %vm765, %v764, 0
      %v770 = vunpack.c.l.b16 %v768
      %v771 = vunpack.c.h.b16 %v768
      %v772 = vpack.c.b16 %v770, %v770
      %v773 = vpack.c.b16 %v771, %v771
      %vm776 = vcmask 527360
      %777 = vst.msk [vmem:[%s197] sm:$0xf] %vm776, %v772
      %778 = vst.msk [vmem:[%s197 + $0x4] sm:$0xf] %vm776, %v773
      %p779 = scmp.lt.s32.totalorder %s15, 1
      %s780 = scalar_select %p779, %s15, 1
      %s781 = smul.addr %s780, 2
      %s782 = smul.addr %s781, 4
      %s783 = scalar_lea.vmem %s4, %s782
      // Predicated region
      $region37: #{pnet_forward.4} parent=35 // pred_check
        %p784 = pneg %p122
      $region38: #{pnet_forward.4} parent=35 // pred_check_branch
        %786 = sbr.rel (%p784) target = $region40
      $region39: #{pnet_forward.4} parent=35 // pred_region
        _
      $region40: #{pnet_forward.4} parent=35 // pred_fallthru
        _
    $region36: #{pnet_forward.4} parent=5 // pred_fallthru
      _
    %p787 = scmp.le.s32.totalorder 2, %s10
    // Predicated region
    $region41: #{pnet_forward.4} parent=5 // pred_check
      %p788 = pneg %p787
    $region42: #{pnet_forward.4} parent=5 // pred_check_branch
      %790 = sbr.rel (%p788) target = $region44
    $region43: #{pnet_forward.4} parent=5 // pred_region
      %s791 = ssub.s32 %s10, 2
      // Predicated region
      $region45: #{pnet_forward.4} parent=43 // pred_check
        %p792 = pneg %p128
      $region46: #{pnet_forward.4} parent=43 // pred_check_branch
        %794 = sbr.rel (%p792) target = $region48
      $region47: #{pnet_forward.4} parent=43 // pred_region
        %p795 = scmp.lt.s32.totalorder %s16, 1
        %s796 = scalar_select %p795, %s16, 1
        %s797 = smul.addr %s796, 2
        %s798 = smul.addr %s797, 4
        %s799 = scalar_lea.vmem %s4, %s798
      $region48: #{pnet_forward.4} parent=43 // pred_fallthru
        _
    $region44: #{pnet_forward.4} parent=5 // pred_fallthru
      _
  $region6: #{pnet_forward.4} parent=0 // loop_footer
    %s14 = sadd.s32 1, %s10
  $region7: #{pnet_forward.4} parent=0 // loop_footer_branch
    %9 = sbr.rel target = $region3
  $region8: #{pnet_forward.4} parent=0 // loop_exit
    _

// kernel: pnet_forward.5
$region0: #{pnet_forward.5}
  #allocation0 [shape = 'u32[]', space=smem, size = 0x4, offset = 0x4, fixed_abs, tag = 'smem constant byte address 0x4 - core index']
  #allocation1 [shape = 'u32[144,128]{1,0:T(1,128)}', space=vmem, size = 0x12000, scoped, tag = 'internal scratch']
  %s0 = inlined_call_operand.vmem [shape: bf16[2,16,65], index: 0, kind: input, shape index: {}]
  %s1 = inlined_call_operand.vmem [shape: bf16[9,32,16], index: 1, kind: input, shape index: {}]
  %s2 = inlined_call_operand.vmem [shape: f32[32,1], index: 2, kind: input, shape index: {}]
  %s3 = inlined_call_operand.vmem [shape: f32[32,1], index: 3, kind: input, shape index: {}]
  %s4 = inlined_call_operand.vmem [shape: bf16[6,32], index: 4, kind: input, shape index: {}]
  %s5 = inlined_call_operand.vmem [shape: f32[6,1], index: 5, kind: input, shape index: {}]
  %s6 = inlined_call_operand.vmem [shape: f32[2,6,49], index: 6, kind: output, shape index: {}]
  %s7 = sld [smem:[#allocation0]]
  $region57: #{pnet_forward.5} parent=0
    _
  %s9 = ssub.s32 1, %s7
  %s10 = scalar_select 0, %s9, %s7
  loop: start=0, step=1, limit=4
  $region2: #{pnet_forward.5} parent=0 // loop_pre_header
    _
  $region3: #{pnet_forward.5} parent=0 // loop_header
    %s12 = sphi 0, %s16
    %p13 = scmp.ge.s32.totalorder %s12, 4
    %s22 = sphi 0, %s24
    %s25 = sphi 0, %s22
    %s26 = sphi 0, %s25
    %s42 = sphi 0, %s26
    %s46 = sphi 0, %s46
    %s48 = sphi 0, %s46
    %s49 = sphi 0, %s48
    %s63 = sphi 0, %s49
    %s67 = sphi 0, %s67
    %s69 = sphi 0, %s67
    %s70 = sphi 0, %s69
    %s84 = sphi 0, %s70
    %s88 = sphi 0, %s88
    %s90 = sphi 0, %s88
    %s91 = sphi 0, %s90
    %s105 = sphi 0, %s91
    %s109 = sphi 0, %s109
    %s111 = sphi 0, %s109
    %s112 = sphi 0, %s111
    %s126 = sphi 0, %s112
    %s130 = sphi 0, %s130
    %s132 = sphi 0, %s130
    %s133 = sphi 0, %s132
    %s147 = sphi 0, %s133
    %s153 = sphi 0, %s155
    %s156 = sphi 0, %s153
    %s157 = sphi 0, %s156
    %s173 = sphi 0, %s157
  $region4: #{pnet_forward.5} parent=0 // loop_header_branch
    %15 = sbr.rel (%p13) target = $region8
  $region5: #{pnet_forward.5} parent=0 // loop_body
    %s17 = ssub.s32 %s12, 1
    %s18 = ssub.s32 %s12, 2
    %s19 = sadd.s32 %s12, 1
    %s20 = ssub.s32 %s12, %s19
    %p21 = scmp.eq.s32.totalorder %s20, 0
    %s23 = sadd.s32 %s22, 1
    %s24 = scalar_select %p21, %s22, %s23
    %p27 = pneg %p21
    %p28 = scmp.eq.s32.totalorder %s12, 1
    %p29 = por %p27, %p28
    %p30 = scmp.ne.s32.totalorder %s22, %s25
    %p31 = scmp.eq.s32.totalorder %s12, 0
    %p32 = por %p30, %p31
    %p33 = scmp.ne.s32.totalorder %s22, %s25
    %p34 = scmp.eq.s32.totalorder %s17, 1
    %p35 = por %p33, %p34
    %p36 = scmp.ne.s32.totalorder %s25, %s26
    %p37 = scmp.eq.s32.totalorder %s17, 0
    %p38 = por %p36, %p37
    %p39 = scmp.ne.s32.totalorder %s25, %s26
    %p40 = scmp.eq.s32.totalorder %s18, 1
    %p41 = por %p39, %p40
    %p43 = scmp.ne.s32.totalorder %s26, %s42
    %p44 = scmp.eq.s32.totalorder %s18, 0
    %p45 = por %p43, %p44
    %s47 = sadd.s32 %s46, 1
    %p50 = scmp.eq.s32.totalorder %s12, 1
    %p51 = scmp.ne.s32.totalorder %s46, %s48
    %p52 = scmp.eq.s32.totalorder %s12, 0
    %p53 = por %p51, %p52
    %p54 = scmp.ne.s32.totalorder %s46, %s48
    %p55 = scmp.eq.s32.totalorder %s17, 1
    %p56 = por %p54, %p55
    %p57 = scmp.ne.s32.totalorder %s48, %s49
    %p58 = scmp.eq.s32.totalorder %s17, 0
    %p59 = por %p57, %p58
    %p60 = scmp.ne.s32.totalorder %s48, %s49
    %p61 = scmp.eq.s32.totalorder %s18, 1
    %p62 = por %p60, %p61
    %p64 = scmp.ne.s32.totalorder %s49, %s63
    %p65 = scmp.eq.s32.totalorder %s18, 0
    %p66 = por %p64, %p65
    %s68 = sadd.s32 %s67, 1
    %p71 = scmp.eq.s32.totalorder %s12, 1
    %p72 = scmp.ne.s32.totalorder %s67, %s69
    %p73 = scmp.eq.s32.totalorder %s12, 0
    %p74 = por %p72, %p73
    %p75 = scmp.ne.s32.totalorder %s67, %s69
    %p76 = scmp.eq.s32.totalorder %s17, 1
    %p77 = por %p75, %p76
    %p78 = scmp.ne.s32.totalorder %s69, %s70
    %p79 = scmp.eq.s32.totalorder %s17, 0
    %p80 = por %p78, %p79
    %p81 = scmp.ne.s32.totalorder %s69, %s70
    %p82 = scmp.eq.s32.totalorder %s18, 1
    %p83 = por %p81, %p82
    %p85 = scmp.ne.s32.totalorder %s70, %s84
    %p86 = scmp.eq.s32.totalorder %s18, 0
    %p87 = por %p85, %p86
    %s89 = sadd.s32 %s88, 1
    %p92 = scmp.eq.s32.totalorder %s12, 1
    %p93 = scmp.ne.s32.totalorder %s88, %s90
    %p94 = scmp.eq.s32.totalorder %s12, 0
    %p95 = por %p93, %p94
    %p96 = scmp.ne.s32.totalorder %s88, %s90
    %p97 = scmp.eq.s32.totalorder %s17, 1
    %p98 = por %p96, %p97
    %p99 = scmp.ne.s32.totalorder %s90, %s91
    %p100 = scmp.eq.s32.totalorder %s17, 0
    %p101 = por %p99, %p100
    %p102 = scmp.ne.s32.totalorder %s90, %s91
    %p103 = scmp.eq.s32.totalorder %s18, 1
    %p104 = por %p102, %p103
    %p106 = scmp.ne.s32.totalorder %s91, %s105
    %p107 = scmp.eq.s32.totalorder %s18, 0
    %p108 = por %p106, %p107
    %s110 = sadd.s32 %s109, 1
    %p113 = scmp.eq.s32.totalorder %s12, 1
    %p114 = scmp.ne.s32.totalorder %s109, %s111
    %p115 = scmp.eq.s32.totalorder %s12, 0
    %p116 = por %p114, %p115
    %p117 = scmp.ne.s32.totalorder %s109, %s111
    %p118 = scmp.eq.s32.totalorder %s17, 1
    %p119 = por %p117, %p118
    %p120 = scmp.ne.s32.totalorder %s111, %s112
    %p121 = scmp.eq.s32.totalorder %s17, 0
    %p122 = por %p120, %p121
    %p123 = scmp.ne.s32.totalorder %s111, %s112
    %p124 = scmp.eq.s32.totalorder %s18, 1
    %p125 = por %p123, %p124
    %p127 = scmp.ne.s32.totalorder %s112, %s126
    %p128 = scmp.eq.s32.totalorder %s18, 0
    %p129 = por %p127, %p128
    %s131 = sadd.s32 %s130, 1
    %p134 = scmp.eq.s32.totalorder %s12, 1
    %p135 = scmp.ne.s32.totalorder %s130, %s132
    %p136 = scmp.eq.s32.totalorder %s12, 0
    %p137 = por %p135, %p136
    %p138 = scmp.ne.s32.totalorder %s130, %s132
    %p139 = scmp.eq.s32.totalorder %s17, 1
    %p140 = por %p138, %p139
    %p141 = scmp.ne.s32.totalorder %s132, %s133
    %p142 = scmp.eq.s32.totalorder %s17, 0
    %p143 = por %p141, %p142
    %p144 = scmp.ne.s32.totalorder %s132, %s133
    %p145 = scmp.eq.s32.totalorder %s18, 1
    %p146 = por %p144, %p145
    %p148 = scmp.ne.s32.totalorder %s133, %s147
    %p149 = scmp.eq.s32.totalorder %s18, 0
    %p150 = por %p148, %p149
    %s151 = ssub.s32 %s12, %s19
    %p152 = scmp.eq.s32.totalorder %s151, 0
    %s154 = sadd.s32 %s153, 1
    %s155 = scalar_select %p152, %s153, %s154
    %p158 = pneg %p152
    %p159 = scmp.eq.s32.totalorder %s12, 1
    %p160 = por %p158, %p159
    %p161 = scmp.ne.s32.totalorder %s153, %s156
    %p162 = scmp.eq.s32.totalorder %s12, 0
    %p163 = por %p161, %p162
    %p164 = scmp.ne.s32.totalorder %s153, %s156
    %p165 = scmp.eq.s32.totalorder %s17, 1
    %p166 = por %p164, %p165
    %p167 = scmp.ne.s32.totalorder %s156, %s157
    %p168 = scmp.eq.s32.totalorder %s17, 0
    %p169 = por %p167, %p168
    %p170 = scmp.ne.s32.totalorder %s156, %s157
    %p171 = scmp.eq.s32.totalorder %s18, 1
    %p172 = por %p170, %p171
    %p174 = scmp.ne.s32.totalorder %s157, %s173
    %p175 = scmp.eq.s32.totalorder %s18, 0
    %p176 = por %p174, %p175
    %p177 = scmp.le.s32.totalorder 1, %s12
    %p178 = scmp.lt.s32.totalorder %s12, 3
    %p179 = pnand %p177, %p178
    %p180 = pneg %p179
    // Predicated region
    $region9: #{pnet_forward.5} parent=5 // pred_check
      _
    $region10: #{pnet_forward.5} parent=5 // pred_check_branch
      %182 = sbr.rel (%p179) target = $region12
    $region11: #{pnet_forward.5} parent=5 // pred_region
      %s183 = ssub.s32 %s12, 1
      // Predicated region
      $region13: #{pnet_forward.5} parent=11 // pred_check
        %p184 = pneg %p59
      $region14: #{pnet_forward.5} parent=11 // pred_check_branch
        %186 = sbr.rel (%p184) target = $region16
      $region15: #{pnet_forward.5} parent=11 // pred_region
        _
      $region16: #{pnet_forward.5} parent=11 // pred_fallthru
        _
      // Predicated region
      $region17: #{pnet_forward.5} parent=11 // pred_check
        %p187 = pneg %p80
      $region18: #{pnet_forward.5} parent=11 // pred_check_branch
        %189 = sbr.rel (%p187) target = $region20
      $region19: #{pnet_forward.5} parent=11 // pred_region
        _
      $region20: #{pnet_forward.5} parent=11 // pred_fallthru
        _
      // Predicated region
      $region21: #{pnet_forward.5} parent=11 // pred_check
        %p190 = pneg %p101
      $region22: #{pnet_forward.5} parent=11 // pred_check_branch
        %192 = sbr.rel (%p190) target = $region24
      $region23: #{pnet_forward.5} parent=11 // pred_region
        _
      $region24: #{pnet_forward.5} parent=11 // pred_fallthru
        _
      // Predicated region
      $region25: #{pnet_forward.5} parent=11 // pred_check
        %p193 = pneg %p122
      $region26: #{pnet_forward.5} parent=11 // pred_check_branch
        %195 = sbr.rel (%p193) target = $region28
      $region27: #{pnet_forward.5} parent=11 // pred_region
        _
      $region28: #{pnet_forward.5} parent=11 // pred_fallthru
        _
      // Predicated region
      $region29: #{pnet_forward.5} parent=11 // pred_check
        %p196 = pneg %p143
      $region30: #{pnet_forward.5} parent=11 // pred_check_branch
        %198 = sbr.rel (%p196) target = $region32
      $region31: #{pnet_forward.5} parent=11 // pred_region
        _
      $region32: #{pnet_forward.5} parent=11 // pred_fallthru
        _
    $region12: #{pnet_forward.5} parent=5 // pred_fallthru
      _
    %p199 = scmp.lt.s32.totalorder %s12, 2
    // Predicated region
    $region33: #{pnet_forward.5} parent=5 // pred_check
      %p200 = pneg %p199
    $region34: #{pnet_forward.5} parent=5 // pred_check_branch
      %202 = sbr.rel (%p200) target = $region36
    $region35: #{pnet_forward.5} parent=5 // pred_region
      // Predicated region
      $region37: #{pnet_forward.5} parent=35 // pred_check
        %p203 = pneg %p32
      $region38: #{pnet_forward.5} parent=35 // pred_check_branch
        %205 = sbr.rel (%p203) target = $region40
      $region39: #{pnet_forward.5} parent=35 // pred_region
        %p206 = scmp.lt.s32.totalorder %s12, 1
        %s207 = scalar_select %p206, %s12, 1
        %s208 = smul.addr %s207, 2
        %s209 = smul.addr %s208, 4
        %s210 = scalar_lea.vmem %s0, %s209
      $region40: #{pnet_forward.5} parent=35 // pred_fallthru
        _
    $region36: #{pnet_forward.5} parent=5 // pred_fallthru
      _
    %p211 = scmp.le.s32.totalorder 1, %s12
    %p212 = scmp.lt.s32.totalorder %s12, 3
    %p213 = pnand %p211, %p212
    %p214 = pneg %p213
    // Predicated region
    $region41: #{pnet_forward.5} parent=5 // pred_check
      _
    $region42: #{pnet_forward.5} parent=5 // pred_check_branch
      %216 = sbr.rel (%p213) target = $region44
    $region43: #{pnet_forward.5} parent=5 // pred_region
      %s217 = ssub.s32 %s12, 1
      %p218 = scmp.lt.s32.totalorder %s17, 1
      %s219 = scalar_select %p218, %s17, 1
      %s220 = smul.addr %s219, 2
      %s221 = smul.addr %s220, 4
      %s222 = scalar_lea.vmem %s0, %s221
      %p223 = pneg %p38
      %p224 = pneg %p35
      %p225 = pneg %p59
      %p226 = pneg %p56
      %p227 = pneg %p80
      %p228 = pneg %p77
      %p229 = pneg %p101
      %p230 = pneg %p98
      %p231 = pneg %p122
      %p232 = pneg %p119
      %p233 = pneg %p143
      %p234 = pneg %p140
      %p235 = pneg %p169
      %p236 = pneg %p166
      %p237 = scmp.lt.s32.totalorder %s17, 1
      %s238 = scalar_select %p237, %s17, 1
      %s239 = smul.addr %s238, 8
      %s240 = scalar_lea.vmem %s6, %s239
      %p241 = scmp.lt.s32.totalorder %s17, 1
      %s242 = scalar_select %p241, %s17, 1
      %s243 = smul.addr %s242, 2
      %s244 = smul.addr %s243, 4
      %s245 = scalar_lea.vmem %s0, %s244
      %p246 = scmp.lt.s32.totalorder %s17, 1
      %s247 = scalar_select %p246, %s17, 1
      %s248 = smul.addr %s247, 8
      %s249 = scalar_lea.vmem %s6, %s248
      %v251 = vld [vmem:[%s245] sm:$0xf]
      %v252 = vld [vmem:[%s245 + $0x4] sm:$0xf]
      %v253 = vld [vmem:[%s1] sm:$0xf]
      %v254 = vld [vmem:[%s1 + $0x4] sm:$0xf]
      %v255 = vld [vmem:[%s1 + $0x8] sm:$0xf]
      %v256 = vld [vmem:[%s1 + $0xc] sm:$0xf]
      %s257 = scalar_lea.vmem %s1, 16
      %v258 = vld [vmem:[%s257] sm:$0xf]
      %v259 = vld [vmem:[%s257 + $0x4] sm:$0xf]
      %v260 = vld [vmem:[%s257 + $0x8] sm:$0xf]
      %v261 = vld [vmem:[%s257 + $0xc] sm:$0xf]
      %v266 = vunpack.c.l.b16 %v258
      %v267 = vunpack.c.l.b16 %v259
      %v268 = vunpack.c.l.b16 %v260
      %v269 = vunpack.c.l.b16 %v261
      %v270 = vpack.c.b16 %v267, %v266
      %v271 = vpack.c.b16 %v269, %v268
      %v274 = vunpack.c.l.b16 %v251
      %v275 = vunpack.c.l.b16 %v252
      %v276 = vpack.c.b16 %v275, %v274
      %277 = vrot.lane.b32.xlu0 %v276, 127
      %v278 = vpop.permute.xlu0 %277
      %vm280 = vcmask 130048
      %v282 = vsel %vm280, %v270, 0
      %v285 = vsel %vm280, %v271, 0
      %287 = vmatprep.subr.bf16.mxu0 0
      %288 = vmatpush1.bf16.msra.mxu0 %v278
      %289 = vmatprep.subr.bf16.mxu0 0
      %290 = vmatpush1.bf16.msra.mxu0 0
      %291 = vmatprep.subr.bf16.mxu0 0
      %292 = vmatpush1.bf16.msra.mxu0 0
      %293 = vmatprep.subr.bf16.mxu0 0
      %294 = vmatpush1.bf16.msra.mxu0 0
      %295 = vmatprep.subr.bf16.mxu0 0
      %296 = vmatpush1.bf16.msra.mxu0 0
      %297 = vmatprep.subr.bf16.mxu0 0
      %298 = vmatpush1.bf16.msra.mxu0 0
      %299 = vmatprep.subr.bf16.mxu0 0
      %300 = vmatpush1.bf16.msra.mxu0 0
      %301 = vmatprep.subr.bf16.mxu0 0
      %302 = vmatpush1.bf16.msra.mxu0 0
      %303 = vmatprep.subr.bf16.mxu0 0
      %304 = vmatpush1.bf16.msra.mxu0 0
      %305 = vmatprep.subr.bf16.mxu0 0
      %306 = vmatpush1.bf16.msra.mxu0 0
      %307 = vmatprep.subr.bf16.mxu0 0
      %308 = vmatpush1.bf16.msra.mxu0 0
      %309 = vmatprep.subr.bf16.mxu0 0
      %310 = vmatpush1.bf16.msra.mxu0 0
      %311 = vmatprep.subr.bf16.mxu0 0
      %312 = vmatpush1.bf16.msra.mxu0 0
      %313 = vmatprep.subr.bf16.mxu0 0
      %314 = vmatpush1.bf16.msra.mxu0 0
      %315 = vmatprep.subr.bf16.mxu0 0
      %316 = vmatpush1.bf16.msra.mxu0 0
      %317 = vmatprep.subr.bf16.mxu0 0
      %318 = vmatpush1.bf16.msra.mxu0 0
      %319 = vmatprep.mubr.bf16.mxu0 0
      %320 = vmatmul.mubr.bf16.gmra.mrb[0].mxu0 %v282
      %v321 = vpop.f32.mrb[0].mxu0
      %v322 = vadd.f32 0.0, %v321
      %v323 = vpop.f32.mrb[0].mxu0
      %v324 = vpop.f32.mrb[0].mxu0
      %v325 = vadd.f32 0.0, %v324
      %v326 = vpop.f32.mrb[0].mxu0
      %327 = vmatprep.mubr.bf16.mxu0 0
      %328 = vmatmul.mubr.bf16.gmra.mrb[0].mxu0 %v285
      %v329 = vpop.f32.mrb[0].mxu0
      %v330 = vadd.f32 0.0, %v329
      %v331 = vpop.f32.mrb[0].mxu0
      %v332 = vpop.f32.mrb[0].mxu0
      %v333 = vadd.f32 0.0, %v332
      %v334 = vpop.f32.mrb[0].mxu0
      %335 = vdwg.mxu0
      %v340 = vunpack.c.l.b16 %v253
      %v341 = vunpack.c.l.b16 %v254
      %v342 = vunpack.c.l.b16 %v255
      %v343 = vunpack.c.l.b16 %v256
      %v344 = vpack.c.b16 %v341, %v340
      %v345 = vpack.c.b16 %v343, %v342
      %v348 = vsel %vm280, %v344, 0
      %v351 = vsel %vm280, %v345, 0
      %353 = vmatprep.subr.bf16.mxu0 0
      %354 = vmatpush1.bf16.msra.mxu0 %v276
      %355 = vmatprep.subr.bf16.mxu0 0
      %356 = vmatpush1.bf16.msra.mxu0 0
      %357 = vmatprep.subr.bf16.mxu0 0
      %358 = vmatpush1.bf16.msra.mxu0 0
      %359 = vmatprep.subr.bf16.mxu0 0
      %360 = vmatpush1.bf16.msra.mxu0 0
      %361 = vmatprep.subr.bf16.mxu0 0
      %362 = vmatpush1.bf16.msra.mxu0 0
      %363 = vmatprep.subr.bf16.mxu0 0
      %364 = vmatpush1.bf16.msra.mxu0 0
      %365 = vmatprep.subr.bf16.mxu0 0
      %366 = vmatpush1.bf16.msra.mxu0 0
      %367 = vmatprep.subr.bf16.mxu0 0
      %368 = vmatpush1.bf16.msra.mxu0 0
      %369 = vmatprep.subr.bf16.mxu0 0
      %370 = vmatpush1.bf16.msra.mxu0 0
      %371 = vmatprep.subr.bf16.mxu0 0
      %372 = vmatpush1.bf16.msra.mxu0 0
      %373 = vmatprep.subr.bf16.mxu0 0
      %374 = vmatpush1.bf16.msra.mxu0 0
      %375 = vmatprep.subr.bf16.mxu0 0
      %376 = vmatpush1.bf16.msra.mxu0 0
      %377 = vmatprep.subr.bf16.mxu0 0
      %378 = vmatpush1.bf16.msra.mxu0 0
      %379 = vmatprep.subr.bf16.mxu0 0
      %380 = vmatpush1.bf16.msra.mxu0 0
      %381 = vmatprep.subr.bf16.mxu0 0
      %382 = vmatpush1.bf16.msra.mxu0 0
      %383 = vmatprep.subr.bf16.mxu0 0
      %384 = vmatpush1.bf16.msra.mxu0 0
      %385 = vmatprep.mubr.bf16.mxu0 0
      %386 = vmatmul.mubr.bf16.gmra.mrb[0].mxu0 %v348
      %v387 = vpop.f32.mrb[0].mxu0
      %v388 = vadd.f32 %v322, %v387
      %v389 = vpop.f32.mrb[0].mxu0
      %v390 = vpop.f32.mrb[0].mxu0
      %v391 = vadd.f32 %v325, %v390
      %v392 = vpop.f32.mrb[0].mxu0
      %393 = vmatprep.mubr.bf16.mxu0 0
      %394 = vmatmul.mubr.bf16.gmra.mrb[0].mxu0 %v351
      %v395 = vpop.f32.mrb[0].mxu0
      %v396 = vadd.f32 %v330, %v395
      %v397 = vpop.f32.mrb[0].mxu0
      %v398 = vpop.f32.mrb[0].mxu0
      %v399 = vadd.f32 %v333, %v398
      %v400 = vpop.f32.mrb[0].mxu0
      %401 = vdwg.mxu0
      %s402 = scalar_lea.vmem %s1, 32
      %v403 = vld [vmem:[%s402] sm:$0xf]
      %v404 = vld [vmem:[%s402 + $0x4] sm:$0xf]
      %v405 = vld [vmem:[%s402 + $0x8] sm:$0xf]
      %v406 = vld [vmem:[%s402 + $0xc] sm:$0xf]
      %v411 = vunpack.c.l.b16 %v403
      %v412 = vunpack.c.l.b16 %v404
      %v413 = vunpack.c.l.b16 %v405
      %v414 = vunpack.c.l.b16 %v406
      %v415 = vpack.c.b16 %v412, %v411
      %v416 = vpack.c.b16 %v414, %v413
      %417 = vrot.lane.b32.xlu0 %v276, 126
      %v418 = vpop.permute.xlu0 %417
      %v421 = vsel %vm280, %v415, 0
      %v424 = vsel %vm280, %v416, 0
      %426 = vmatprep.subr.bf16.mxu0 0
      %427 = vmatpush1.bf16.msra.mxu0 %v418
      %428 = vmatprep.subr.bf16.mxu0 0
      %429 = vmatpush1.bf16.msra.mxu0 0
      %430 = vmatprep.subr.bf16.mxu0 0
      %431 = vmatpush1.bf16.msra.mxu0 0
      %432 = vmatprep.subr.bf16.mxu0 0
      %433 = vmatpush1.bf16.msra.mxu0 0
      %434 = vmatprep.subr.bf16.mxu0 0
      %435 = vmatpush1.bf16.msra.mxu0 0
      %436 = vmatprep.subr.bf16.mxu0 0
      %437 = vmatpush1.bf16.msra.mxu0 0
      %438 = vmatprep.subr.bf16.mxu0 0
      %439 = vmatpush1.bf16.msra.mxu0 0
      %440 = vmatprep.subr.bf16.mxu0 0
      %441 = vmatpush1.bf16.msra.mxu0 0
      %442 = vmatprep.subr.bf16.mxu0 0
      %443 = vmatpush1.bf16.msra.mxu0 0
      %444 = vmatprep.subr.bf16.mxu0 0
      %445 = vmatpush1.bf16.msra.mxu0 0
      %446 = vmatprep.subr.bf16.mxu0 0
      %447 = vmatpush1.bf16.msra.mxu0 0
      %448 = vmatprep.subr.bf16.mxu0 0
      %449 = vmatpush1.bf16.msra.mxu0 0
      %450 = vmatprep.subr.bf16.mxu0 0
      %451 = vmatpush1.bf16.msra.mxu0 0
      %452 = vmatprep.subr.bf16.mxu0 0
      %453 = vmatpush1.bf16.msra.mxu0 0
      %454 = vmatprep.subr.bf16.mxu0 0
      %455 = vmatpush1.bf16.msra.mxu0 0
      %456 = vmatprep.subr.bf16.mxu0 0
      %457 = vmatpush1.bf16.msra.mxu0 0
      %458 = vmatprep.mubr.bf16.mxu0 0
      %459 = vmatmul.mubr.bf16.gmra.mrb[0].mxu0 %v421
      %v460 = vpop.f32.mrb[0].mxu0
      %v461 = vadd.f32 0.0, %v460
      %v462 = vpop.f32.mrb[0].mxu0
      %v463 = vpop.f32.mrb[0].mxu0
      %v464 = vadd.f32 0.0, %v463
      %v465 = vpop.f32.mrb[0].mxu0
      %466 = vmatprep.mubr.bf16.mxu0 0
      %467 = vmatmul.mubr.bf16.gmra.mrb[0].mxu0 %v424
      %v468 = vpop.f32.mrb[0].mxu0
      %v469 = vadd.f32 0.0, %v468
      %v470 = vpop.f32.mrb[0].mxu0
      %v471 = vpop.f32.mrb[0].mxu0
      %v472 = vadd.f32 0.0, %v471
      %v473 = vpop.f32.mrb[0].mxu0
      %474 = vdwg.mxu0
      %v475 = vadd.f32 %v388, %v461
      %v476 = vadd.f32 %v391, %v464
      %v477 = vadd.f32 %v396, %v469
      %v478 = vadd.f32 %v399, %v472
      %s479 = scalar_lea.vmem %s1, 48
      %v480 = vld [vmem:[%s479] sm:$0xf]
      %v481 = vld [vmem:[%s479 + $0x4] sm:$0xf]
      %v482 = vld [vmem:[%s479 + $0x8] sm:$0xf]
      %v483 = vld [vmem:[%s479 + $0xc] sm:$0xf]
      %v488 = vunpack.c.l.b16 %v480
      %v489 = vunpack.c.l.b16 %v481
      %v490 = vunpack.c.l.b16 %v482
      %v491 = vunpack.c.l.b16 %v483
      %v492 = vpack.c.b16 %v489, %v488
      %v493 = vpack.c.b16 %v491, %v490
      %494 = vrot.lane.b32.xlu0 %v276, 121
      %v495 = vpop.permute.xlu0 %494
      %v498 = vsel %vm280, %v492, 0
      %v501 = vsel %vm280, %v493, 0
      %503 = vmatprep.subr.bf16.mxu0 0
      %504 = vmatpush1.bf16.msra.mxu0 %v495
      %505 = vmatprep.subr.bf16.mxu0 0
      %506 = vmatpush1.bf16.msra.mxu0 0
      %507 = vmatprep.subr.bf16.mxu0 0
      %508 = vmatpush1.bf16.msra.mxu0 0
      %509 = vmatprep.subr.bf16.mxu0 0
      %510 = vmatpush1.bf16.msra.mxu0 0
      %511 = vmatprep.subr.bf16.mxu0 0
      %512 = vmatpush1.bf16.msra.mxu0 0
      %513 = vmatprep.subr.bf16.mxu0 0
      %514 = vmatpush1.bf16.msra.mxu0 0
      %515 = vmatprep.subr.bf16.mxu0 0
      %516 = vmatpush1.bf16.msra.mxu0 0
      %517 = vmatprep.subr.bf16.mxu0 0
      %518 = vmatpush1.bf16.msra.mxu0 0
      %519 = vmatprep.subr.bf16.mxu0 0
      %520 = vmatpush1.bf16.msra.mxu0 0
      %521 = vmatprep.subr.bf16.mxu0 0
      %522 = vmatpush1.bf16.msra.mxu0 0
      %523 = vmatprep.subr.bf16.mxu0 0
      %524 = vmatpush1.bf16.msra.mxu0 0
      %525 = vmatprep.subr.bf16.mxu0 0
      %526 = vmatpush1.bf16.msra.mxu0 0
      %527 = vmatprep.subr.bf16.mxu0 0
      %528 = vmatpush1.bf16.msra.mxu0 0
      %529 = vmatprep.subr.bf16.mxu0 0
      %530 = vmatpush1.bf16.msra.mxu0 0
      %531 = vmatprep.subr.bf16.mxu0 0
      %532 = vmatpush1.bf16.msra.mxu0 0
      %533 = vmatprep.subr.bf16.mxu0 0
      %534 = vmatpush1.bf16.msra.mxu0 0
      %535 = vmatprep.mubr.bf16.mxu0 0
      %536 = vmatmul.mubr.bf16.gmra.mrb[0].mxu0 %v498
      %v537 = vpop.f32.mrb[0].mxu0
      %v538 = vadd.f32 0.0, %v537
      %v539 = vpop.f32.mrb[0].mxu0
      %v540 = vpop.f32.mrb[0].mxu0
      %v541 = vadd.f32 0.0, %v540
      %v542 = vpop.f32.mrb[0].mxu0
      %543 = vmatprep.mubr.bf16.mxu0 0
      %544 = vmatmul.mubr.bf16.gmra.mrb[0].mxu0 %v501
      %v545 = vpop.f32.mrb[0].mxu0
      %v546 = vadd.f32 0.0, %v545
      %v547 = vpop.f32.mrb[0].mxu0
      %v548 = vpop.f32.mrb[0].mxu0
      %v549 = vadd.f32 0.0, %v548
      %v550 = vpop.f32.mrb[0].mxu0
      %551 = vdwg.mxu0
      %v552 = vadd.f32 %v475, %v538
      %v553 = vadd.f32 %v476, %v541
      %v554 = vadd.f32 %v477, %v546
      %v555 = vadd.f32 %v478, %v549
      %s556 = scalar_lea.vmem %s1, 64
      %v557 = vld [vmem:[%s556] sm:$0xf]
      %v558 = vld [vmem:[%s556 + $0x4] sm:$0xf]
      %v559 = vld [vmem:[%s556 + $0x8] sm:$0xf]
      %v560 = vld [vmem:[%s556 + $0xc] sm:$0xf]
      %v565 = vunpack.c.l.b16 %v557
      %v566 = vunpack.c.l.b16 %v558
      %v567 = vunpack.c.l.b16 %v559
      %v568 = vunpack.c.l.b16 %v560
      %v569 = vpack.c.b16 %v566, %v565
      %v570 = vpack.c.b16 %v568, %v567
      %571 = vrot.lane.b32.xlu0 %v276, 120
      %v572 = vpop.permute.xlu0 %571
      %v575 = vsel %vm280, %v569, 0
      %v578 = vsel %vm280, %v570, 0
      %580 = vmatprep.subr.bf16.mxu0 0
      %581 = vmatpush1.bf16.msra.mxu0 %v572
      %582 = vmatprep.subr.bf16.mxu0 0
      %583 = vmatpush1.bf16.msra.mxu0 0
      %584 = vmatprep.subr.bf16.mxu0 0
      %585 = vmatpush1.bf16.msra.mxu0 0
      %586 = vmatprep.subr.bf16.mxu0 0
      %587 = vmatpush1.bf16.msra.mxu0 0
      %588 = vmatprep.subr.bf16.mxu0 0
      %589 = vmatpush1.bf16.msra.mxu0 0
      %590 = vmatprep.subr.bf16.mxu0 0
      %591 = vmatpush1.bf16.msra.mxu0 0
      %592 = vmatprep.subr.bf16.mxu0 0
      %593 = vmatpush1.bf16.msra.mxu0 0
      %594 = vmatprep.subr.bf16.mxu0 0
      %595 = vmatpush1.bf16.msra.mxu0 0
      %596 = vmatprep.subr.bf16.mxu0 0
      %597 = vmatpush1.bf16.msra.mxu0 0
      %598 = vmatprep.subr.bf16.mxu0 0
      %599 = vmatpush1.bf16.msra.mxu0 0
      %600 = vmatprep.subr.bf16.mxu0 0
      %601 = vmatpush1.bf16.msra.mxu0 0
      %602 = vmatprep.subr.bf16.mxu0 0
      %603 = vmatpush1.bf16.msra.mxu0 0
      %604 = vmatprep.subr.bf16.mxu0 0
      %605 = vmatpush1.bf16.msra.mxu0 0
      %606 = vmatprep.subr.bf16.mxu0 0
      %607 = vmatpush1.bf16.msra.mxu0 0
      %608 = vmatprep.subr.bf16.mxu0 0
      %609 = vmatpush1.bf16.msra.mxu0 0
      %610 = vmatprep.subr.bf16.mxu0 0
      %611 = vmatpush1.bf16.msra.mxu0 0
      %612 = vmatprep.mubr.bf16.mxu0 0
      %613 = vmatmul.mubr.bf16.gmra.mrb[0].mxu0 %v575
      %v614 = vpop.f32.mrb[0].mxu0
      %v615 = vadd.f32 0.0, %v614
      %v616 = vpop.f32.mrb[0].mxu0
      %v617 = vpop.f32.mrb[0].mxu0
      %v618 = vadd.f32 0.0, %v617
      %v619 = vpop.f32.mrb[0].mxu0
      %620 = vmatprep.mubr.bf16.mxu0 0
      %621 = vmatmul.mubr.bf16.gmra.mrb[0].mxu0 %v578
      %v622 = vpop.f32.mrb[0].mxu0
      %v623 = vadd.f32 0.0, %v622
      %v624 = vpop.f32.mrb[0].mxu0
      %v625 = vpop.f32.mrb[0].mxu0
      %v626 = vadd.f32 0.0, %v625
      %v627 = vpop.f32.mrb[0].mxu0
      %628 = vdwg.mxu0
      %v629 = vadd.f32 %v552, %v615
      %v630 = vadd.f32 %v553, %v618
      %v631 = vadd.f32 %v554, %v623
      %v632 = vadd.f32 %v555, %v626
      %s633 = scalar_lea.vmem %s1, 80
      %v634 = vld [vmem:[%s633] sm:$0xf]
      %v635 = vld [vmem:[%s633 + $0x4] sm:$0xf]
      %v636 = vld [vmem:[%s633 + $0x8] sm:$0xf]
      %v637 = vld [vmem:[%s633 + $0xc] sm:$0xf]
      %v642 = vunpack.c.l.b16 %v634
      %v643 = vunpack.c.l.b16 %v635
      %v644 = vunpack.c.l.b16 %v636
      %v645 = vunpack.c.l.b16 %v637
      %v646 = vpack.c.b16 %v643, %v642
      %v647 = vpack.c.b16 %v645, %v644
      %648 = vrot.lane.b32.xlu0 %v276, 119
      %v649 = vpop.permute.xlu0 %648
      %v652 = vsel %vm280, %v646, 0
      %v655 = vsel %vm280, %v647, 0
      %657 = vmatprep.subr.bf16.mxu0 0
      %658 = vmatpush1.bf16.msra.mxu0 %v649
      %659 = vmatprep.subr.bf16.mxu0 0
      %660 = vmatpush1.bf16.msra.mxu0 0
      %661 = vmatprep.subr.bf16.mxu0 0
      %662 = vmatpush1.bf16.msra.mxu0 0
      %663 = vmatprep.subr.bf16.mxu0 0
      %664 = vmatpush1.bf16.msra.mxu0 0
      %665 = vmatprep.subr.bf16.mxu0 0
      %666 = vmatpush1.bf16.msra.mxu0 0
      %667 = vmatprep.subr.bf16.mxu0 0
      %668 = vmatpush1.bf16.msra.mxu0 0
      %669 = vmatprep.subr.bf16.mxu0 0
      %670 = vmatpush1.bf16.msra.mxu0 0
      %671 = vmatprep.subr.bf16.mxu0 0
      %672 = vmatpush1.bf16.msra.mxu0 0
      %673 = vmatprep.subr.bf16.mxu0 0
      %674 = vmatpush1.bf16.msra.mxu0 0
      %675 = vmatprep.subr.bf16.mxu0 0
      %676 = vmatpush1.bf16.msra.mxu0 0
      %677 = vmatprep.subr.bf16.mxu0 0
      %678 = vmatpush1.bf16.msra.mxu0 0
      %679 = vmatprep.subr.bf16.mxu0 0
      %680 = vmatpush1.bf16.msra.mxu0 0
      %681 = vmatprep.subr.bf16.mxu0 0
      %682 = vmatpush1.bf16.msra.mxu0 0
      %683 = vmatprep.subr.bf16.mxu0 0
      %684 = vmatpush1.bf16.msra.mxu0 0
      %685 = vmatprep.subr.bf16.mxu0 0
      %686 = vmatpush1.bf16.msra.mxu0 0
      %687 = vmatprep.subr.bf16.mxu0 0
      %688 = vmatpush1.bf16.msra.mxu0 0
      %689 = vmatprep.mubr.bf16.mxu0 0
      %690 = vmatmul.mubr.bf16.gmra.mrb[0].mxu0 %v652
      %v691 = vpop.f32.mrb[0].mxu0
      %v692 = vadd.f32 0.0, %v691
      %v693 = vpop.f32.mrb[0].mxu0
      %v694 = vpop.f32.mrb[0].mxu0
      %v695 = vadd.f32 0.0, %v694
      %v696 = vpop.f32.mrb[0].mxu0
      %697 = vmatprep.mubr.bf16.mxu0 0
      %698 = vmatmul.mubr.bf16.gmra.mrb[0].mxu0 %v655
      %v699 = vpop.f32.mrb[0].mxu0
      %v700 = vadd.f32 0.0, %v699
      %v701 = vpop.f32.mrb[0].mxu0
      %v702 = vpop.f32.mrb[0].mxu0
      %v703 = vadd.f32 0.0, %v702
      %v704 = vpop.f32.mrb[0].mxu0
      %705 = vdwg.mxu0
      %v706 = vadd.f32 %v629, %v692
      %v707 = vadd.f32 %v630, %v695
      %v708 = vadd.f32 %v631, %v700
      %v709 = vadd.f32 %v632, %v703
      %s710 = scalar_lea.vmem %s1, 96
      %v711 = vld [vmem:[%s710] sm:$0xf]
      %v712 = vld [vmem:[%s710 + $0x4] sm:$0xf]
      %v713 = vld [vmem:[%s710 + $0x8] sm:$0xf]
      %v714 = vld [vmem:[%s710 + $0xc] sm:$0xf]
      %v719 = vunpack.c.l.b16 %v711
      %v720 = vunpack.c.l.b16 %v712
      %v721 = vunpack.c.l.b16 %v713
      %v722 = vunpack.c.l.b16 %v714
      %v723 = vpack.c.b16 %v720, %v719
      %v724 = vpack.c.b16 %v722, %v721
      %725 = vrot.lane.b32.xlu0 %v276, 114
      %v726 = vpop.permute.xlu0 %725
      %v729 = vsel %vm280, %v723, 0
      %v732 = vsel %vm280, %v724, 0
      %734 = vmatprep.subr.bf16.mxu0 0
      %735 = vmatpush1.bf16.msra.mxu0 %v726
      %736 = vmatprep.subr.bf16.mxu0 0
      %737 = vmatpush1.bf16.msra.mxu0 0
      %738 = vmatprep.subr.bf16.mxu0 0
      %739 = vmatpush1.bf16.msra.mxu0 0
      %740 = vmatprep.subr.bf16.mxu0 0
      %741 = vmatpush1.bf16.msra.mxu0 0
      %742 = vmatprep.subr.bf16.mxu0 0
      %743 = vmatpush1.bf16.msra.mxu0 0
      %744 = vmatprep.subr.bf16.mxu0 0
      %745 = vmatpush1.bf16.msra.mxu0 0
      %746 = vmatprep.subr.bf16.mxu0 0
      %747 = vmatpush1.bf16.msra.mxu0 0
      %748 = vmatprep.subr.bf16.mxu0 0
      %749 = vmatpush1.bf16.msra.mxu0 0
      %750 = vmatprep.subr.bf16.mxu0 0
      %751 = vmatpush1.bf16.msra.mxu0 0
      %752 = vmatprep.subr.bf16.mxu0 0
      %753 = vmatpush1.bf16.msra.mxu0 0
      %754 = vmatprep.subr.bf16.mxu0 0
      %755 = vmatpush1.bf16.msra.mxu0 0
      %756 = vmatprep.subr.bf16.mxu0 0
      %757 = vmatpush1.bf16.msra.mxu0 0
      %758 = vmatprep.subr.bf16.mxu0 0
      %759 = vmatpush1.bf16.msra.mxu0 0
      %760 = vmatprep.subr.bf16.mxu0 0
      %761 = vmatpush1.bf16.msra.mxu0 0
      %762 = vmatprep.subr.bf16.mxu0 0
      %763 = vmatpush1.bf16.msra.mxu0 0
      %764 = vmatprep.subr.bf16.mxu0 0
      %765 = vmatpush1.bf16.msra.mxu0 0
      %766 = vmatprep.mubr.bf16.mxu0 0
      %767 = vmatmul.mubr.bf16.gmra.mrb[0].mxu0 %v729
      %v768 = vpop.f32.mrb[0].mxu0
      %v769 = vadd.f32 0.0, %v768
      %v770 = vpop.f32.mrb[0].mxu0
      %v771 = vpop.f32.mrb[0].mxu0
      %v772 = vadd.f32 0.0, %v771
      %v773 = vpop.f32.mrb[0].mxu0
      %774 = vmatprep.mubr.bf16.mxu0 0
      %775 = vmatmul.mubr.bf16.gmra.mrb[0].mxu0 %v732
      %v776 = vpop.f32.mrb[0].mxu0
      %v777 = vadd.f32 0.0, %v776
      %v778 = vpop.f32.mrb[0].mxu0
      %v779 = vpop.f32.mrb[0].mxu0
      %v780 = vadd.f32 0.0, %v779
      %v781 = vpop.f32.mrb[0].mxu0
      %782 = vdwg.mxu0
      %v783 = vadd.f32 %v706, %v769
      %v784 = vadd.f32 %v707, %v772
      %v785 = vadd.f32 %v708, %v777
      %v786 = vadd.f32 %v709, %v780
      %s787 = scalar_lea.vmem %s1, 112
      %v788 = vld [vmem:[%s787] sm:$0xf]
      %v789 = vld [vmem:[%s787 + $0x4] sm:$0xf]
      %v790 = vld [vmem:[%s787 + $0x8] sm:$0xf]
      %v791 = vld [vmem:[%s787 + $0xc] sm:$0xf]
      %v796 = vunpack.c.l.b16 %v788
      %v797 = vunpack.c.l.b16 %v789
      %v798 = vunpack.c.l.b16 %v790
      %v799 = vunpack.c.l.b16 %v791
      %v800 = vpack.c.b16 %v797, %v796
      %v801 = vpack.c.b16 %v799, %v798
      %802 = vrot.lane.b32.xlu0 %v276, 113
      %v803 = vpop.permute.xlu0 %802
      %v806 = vsel %vm280, %v800, 0
      %v809 = vsel %vm280, %v801, 0
      %811 = vmatprep.subr.bf16.mxu0 0
      %812 = vmatpush1.bf16.msra.mxu0 %v803
      %813 = vmatprep.subr.bf16.mxu0 0
      %814 = vmatpush1.bf16.msra.mxu0 0
      %815 = vmatprep.subr.bf16.mxu0 0
      %816 = vmatpush1.bf16.msra.mxu0 0
      %817 = vmatprep.subr.bf16.mxu0 0
      %818 = vmatpush1.bf16.msra.mxu0 0
      %819 = vmatprep.subr.bf16.mxu0 0
      %820 = vmatpush1.bf16.msra.mxu0 0
      %821 = vmatprep.subr.bf16.mxu0 0
      %822 = vmatpush1.bf16.msra.mxu0 0
      %823 = vmatprep.subr.bf16.mxu0 0
      %824 = vmatpush1.bf16.msra.mxu0 0
      %825 = vmatprep.subr.bf16.mxu0 0
      %826 = vmatpush1.bf16.msra.mxu0 0
      %827 = vmatprep.subr.bf16.mxu0 0
      %828 = vmatpush1.bf16.msra.mxu0 0
      %829 = vmatprep.subr.bf16.mxu0 0
      %830 = vmatpush1.bf16.msra.mxu0 0
      %831 = vmatprep.subr.bf16.mxu0 0
      %832 = vmatpush1.bf16.msra.mxu0 0
      %833 = vmatprep.subr.bf16.mxu0 0
      %834 = vmatpush1.bf16.msra.mxu0 0
      %835 = vmatprep.subr.bf16.mxu0 0
      %836 = vmatpush1.bf16.msra.mxu0 0
      %837 = vmatprep.subr.bf16.mxu0 0
      %838 = vmatpush1.bf16.msra.mxu0 0
      %839 = vmatprep.subr.bf16.mxu0 0
      %840 = vmatpush1.bf16.msra.mxu0 0
      %841 = vmatprep.subr.bf16.mxu0 0
      %842 = vmatpush1.bf16.msra.mxu0 0
      %843 = vmatprep.mubr.bf16.mxu0 0
      %844 = vmatmul.mubr.bf16.gmra.mrb[0].mxu0 %v806
      %v845 = vpop.f32.mrb[0].mxu0
      %v846 = vadd.f32 0.0, %v845
      %v847 = vpop.f32.mrb[0].mxu0
      %v848 = vpop.f32.mrb[0].mxu0
      %v849 = vadd.f32 0.0, %v848
      %v850 = vpop.f32.mrb[0].mxu0
      %851 = vmatprep.mubr.bf16.mxu0 0
      %852 = vmatmul.mubr.bf16.gmra.mrb[0].mxu0 %v809
      %v853 = vpop.f32.mrb[0].mxu0
      %v854 = vadd.f32 0.0, %v853
      %v855 = vpop.f32.mrb[0].mxu0
      %v856 = vpop.f32.mrb[0].mxu0
      %v857 = vadd.f32 0.0, %v856
      %v858 = vpop.f32.mrb[0].mxu0
      %859 = vdwg.mxu0
      %v860 = vadd.f32 %v783, %v846
      %v861 = vadd.f32 %v784, %v849
      %v862 = vadd.f32 %v785, %v854
      %v863 = vadd.f32 %v786, %v857
      %s864 = scalar_lea.vmem %s1, 128
      %v865 = vld [vmem:[%s864] sm:$0xf]
      %v866 = vld [vmem:[%s864 + $0x4] sm:$0xf]
      %v867 = vld [vmem:[%s864 + $0x8] sm:$0xf]
      %v868 = vld [vmem:[%s864 + $0xc] sm:$0xf]
      %v873 = vunpack.c.l.b16 %v865
      %v874 = vunpack.c.l.b16 %v866
      %v875 = vunpack.c.l.b16 %v867
      %v876 = vunpack.c.l.b16 %v868
      %v877 = vpack.c.b16 %v874, %v873
      %v878 = vpack.c.b16 %v876, %v875
      %879 = vrot.lane.b32.xlu0 %v276, 112
      %v880 = vpop.permute.xlu0 %879
      %v883 = vsel %vm280, %v877, 0
      %v886 = vsel %vm280, %v878, 0
      %888 = vmatprep.subr.bf16.mxu0 0
      %889 = vmatpush1.bf16.msra.mxu0 %v880
      %890 = vmatprep.subr.bf16.mxu0 0
      %891 = vmatpush1.bf16.msra.mxu0 0
      %892 = vmatprep.subr.bf16.mxu0 0
      %893 = vmatpush1.bf16.msra.mxu0 0
      %894 = vmatprep.subr.bf16.mxu0 0
      %895 = vmatpush1.bf16.msra.mxu0 0
      %896 = vmatprep.subr.bf16.mxu0 0
      %897 = vmatpush1.bf16.msra.mxu0 0
      %898 = vmatprep.subr.bf16.mxu0 0
      %899 = vmatpush1.bf16.msra.mxu0 0
      %900 = vmatprep.subr.bf16.mxu0 0
      %901 = vmatpush1.bf16.msra.mxu0 0
      %902 = vmatprep.subr.bf16.mxu0 0
      %903 = vmatpush1.bf16.msra.mxu0 0
      %904 = vmatprep.subr.bf16.mxu0 0
      %905 = vmatpush1.bf16.msra.mxu0 0
      %906 = vmatprep.subr.bf16.mxu0 0
      %907 = vmatpush1.bf16.msra.mxu0 0
      %908 = vmatprep.subr.bf16.mxu0 0
      %909 = vmatpush1.bf16.msra.mxu0 0
      %910 = vmatprep.subr.bf16.mxu0 0
      %911 = vmatpush1.bf16.msra.mxu0 0
      %912 = vmatprep.subr.bf16.mxu0 0
      %913 = vmatpush1.bf16.msra.mxu0 0
      %914 = vmatprep.subr.bf16.mxu0 0
      %915 = vmatpush1.bf16.msra.mxu0 0
      %916 = vmatprep.subr.bf16.mxu0 0
      %917 = vmatpush1.bf16.msra.mxu0 0
      %918 = vmatprep.subr.bf16.mxu0 0
      %919 = vmatpush1.bf16.msra.mxu0 0
      %920 = vmatprep.mubr.bf16.mxu0 0
      %921 = vmatmul.mubr.bf16.gmra.mrb[0].mxu0 %v883
      %v922 = vpop.f32.mrb[0].mxu0
      %v923 = vadd.f32 0.0, %v922
      %v924 = vpop.f32.mrb[0].mxu0
      %v925 = vpop.f32.mrb[0].mxu0
      %v926 = vadd.f32 0.0, %v925
      %v927 = vpop.f32.mrb[0].mxu0
      %928 = vmatprep.mubr.bf16.mxu0 0
      %929 = vmatmul.mubr.bf16.gmra.mrb[0].mxu0 %v886
      %v930 = vpop.f32.mrb[0].mxu0
      %v931 = vadd.f32 0.0, %v930
      %v932 = vpop.f32.mrb[0].mxu0
      %v933 = vpop.f32.mrb[0].mxu0
      %v934 = vadd.f32 0.0, %v933
      %v935 = vpop.f32.mrb[0].mxu0
      %936 = vdwg.mxu0
      %v937 = vadd.f32 %v860, %v923
      %v938 = vadd.f32 %v861, %v926
      %v939 = vadd.f32 %v862, %v931
      %v940 = vadd.f32 %v863, %v934
      %v941 = vld [vmem:[%s2] sm:$0xff]
      %v942 = vld [vmem:[%s2 + $0x8] sm:$0xff]
      %v943 = vld [vmem:[%s2 + $0x10] sm:$0xff]
      %v944 = vld [vmem:[%s2 + $0x18] sm:$0xff]
      %946 = vset.pattern.permute.xlu0 0
      %947 = vperm.xlu0 %946, %v941
      %v948 = vpop.permute.xlu0 %947
      %951 = vset.pattern.permute.xlu0 0
      %952 = vperm.xlu0 %951, %v942
      %v953 = vpop.permute.xlu0 %952
      %956 = vset.pattern.permute.xlu0 0
      %957 = vperm.xlu0 %956, %v943
      %v958 = vpop.permute.xlu0 %957
      %961 = vset.pattern.permute.xlu0 0
      %962 = vperm.xlu0 %961, %v944
      %v963 = vpop.permute.xlu0 %962
      %v965 = vadd.f32 %v937, %v948
      %v966 = vadd.f32 %v938, %v953
      %v967 = vadd.f32 %v939, %v958
      %v968 = vadd.f32 %v940, %v963
      %v969 = vld [vmem:[%s3] sm:$0xff]
      %v970 = vld [vmem:[%s3 + $0x8] sm:$0xff]
      %v971 = vld [vmem:[%s3 + $0x10] sm:$0xff]
      %v972 = vld [vmem:[%s3 + $0x18] sm:$0xff]
      %vm973 = vcmp.gt.f32.partialorder %v965, 0.0
      %vm974 = vcmp.gt.f32.partialorder %v966, 0.0
      %vm975 = vcmp.gt.f32.partialorder %v967, 0.0
      %vm976 = vcmp.gt.f32.partialorder %v968, 0.0
      %978 = vset.pattern.permute.xlu0 0
      %979 = vperm.xlu0 %978, %v969
      %v980 = vpop.permute.xlu0 %979
      %983 = vset.pattern.permute.xlu0 0
      %984 = vperm.xlu0 %983, %v970
      %v985 = vpop.permute.xlu0 %984
      %988 = vset.pattern.permute.xlu0 0
      %989 = vperm.xlu0 %988, %v971
      %v990 = vpop.permute.xlu0 %989
      %993 = vset.pattern.permute.xlu0 0
      %994 = vperm.xlu0 %993, %v972
      %v995 = vpop.permute.xlu0 %994
      %v997 = vmul.f32 %v965, %v980
      %v998 = vmul.f32 %v966, %v985
      %v999 = vmul.f32 %v967, %v990
      %v1000 = vmul.f32 %v968, %v995
      %v1001 = vsel %vm973, %v965, %v997
      %v1002 = vsel %vm974, %v966, %v998
      %v1003 = vsel %vm975, %v967, %v999
      %v1004 = vsel %vm976, %v968, %v1000
      %v1005 = vld [vmem:[%s4] sm:$0x7]
      %v1006 = vpack.c.bf16 %v1002, %v1001
      %v1007 = vpack.c.bf16 %v1004, %v1003
      %v1008 = vld [vmem:[%s5] sm:$0x3f]
      %1010 = vset.pattern.permute.xlu0 0
      %1011 = vperm.xlu0 %1010, %v1008
      %v1012 = vpop.permute.xlu0 %1011
      %vm1014 = vcmask 261120
      %v1016 = vsel %vm1014, %v1005, 0
      %1018 = vmatprep.subr.bf16.mxu0 0
      %1019 = vmatpush1.bf16.msra.mxu0 %v1006
      %1020 = vmatprep.subr.bf16.mxu0 0
      %1021 = vmatpush1.bf16.msra.mxu0 %v1007
      %1022 = vmatprep.subr.bf16.mxu0 0
      %1023 = vmatpush1.bf16.msra.mxu0 0
      %1024 = vmatprep.subr.bf16.mxu0 0
      %1025 = vmatpush1.bf16.msra.mxu0 0
      %1026 = vmatprep.subr.bf16.mxu0 0
      %1027 = vmatpush1.bf16.msra.mxu0 0
      %1028 = vmatprep.subr.bf16.mxu0 0
      %1029 = vmatpush1.bf16.msra.mxu0 0
      %1030 = vmatprep.subr.bf16.mxu0 0
      %1031 = vmatpush1.bf16.msra.mxu0 0
      %1032 = vmatprep.subr.bf16.mxu0 0
      %1033 = vmatpush1.bf16.msra.mxu0 0
      %1034 = vmatprep.subr.bf16.mxu0 0
      %1035 = vmatpush1.bf16.msra.mxu0 0
      %1036 = vmatprep.subr.bf16.mxu0 0
      %1037 = vmatpush1.bf16.msra.mxu0 0
      %1038 = vmatprep.subr.bf16.mxu0 0
      %1039 = vmatpush1.bf16.msra.mxu0 0
      %1040 = vmatprep.subr.bf16.mxu0 0
      %1041 = vmatpush1.bf16.msra.mxu0 0
      %1042 = vmatprep.subr.bf16.mxu0 0
      %1043 = vmatpush1.bf16.msra.mxu0 0
      %1044 = vmatprep.subr.bf16.mxu0 0
      %1045 = vmatpush1.bf16.msra.mxu0 0
      %1046 = vmatprep.subr.bf16.mxu0 0
      %1047 = vmatpush1.bf16.msra.mxu0 0
      %1048 = vmatprep.subr.bf16.mxu0 0
      %1049 = vmatpush1.bf16.msra.mxu0 0
      %1050 = vmatprep.mubr.bf16.mxu0 0
      %1051 = vmatmul.mubr.bf16.gmra.mrb[0].mxu0 %v1016
      %v1052 = vpop.f32.mrb[0].mxu0
      %v1053 = vadd.f32 %v1012, %v1052
      %v1054 = vpop.f32.mrb[0].mxu0
      %v1055 = vpop.f32.mrb[0].mxu0
      %v1056 = vpop.f32.mrb[0].mxu0
      %1057 = vdwg.mxu0
      %v1059 = vrot.slane %v1053, 1
      %v1061 = vmax.f32 %v1053, %v1059
      %v1062 = vsub.f32 %v1053, %v1061
      %v1063 = vmul.f32 %v1062, 1.442695
      %v1064 = vpow.pop %v1063
      %v1066 = vrot.slane %v1061, 7
      %v1068 = vsub.f32 %v1053, %v1066
      %v1069 = vmul.f32 %v1068, 1.442695
      %v1070 = vpow.pop %v1069
      %v1072 = vrot.slane %v1070, 1
      %v1074 = vadd.f32 %v1064, %v1072
      %v1075 = vrcp.pop %v1074
      %v1076 = vmul.f32 1.0, %v1075
      %v1077 = vmul.f32 %v1064, %v1076
      %v1079 = vrot.slane %v1076, 7
      %v1081 = vmul.f32 %v1070, %v1079
      %vm1082 = vcmask 1040384
      %v1083 = vsel %vm1082, %v1077, %v1081
      %vm1084 = vcmask 1041408
      %v1085 = vsel %vm1084, %v1083, %v1053
      %vm1086 = vcmask 398336
      %1087 = vst.msk [vmem:[%s249] sm:$0x3f] %vm1086, %v1085
      %p1088 = scmp.lt.s32.totalorder %s17, 1
      %s1089 = scalar_select %p1088, %s17, 1
      %s1090 = smul.addr %s1089, 8
      %s1091 = scalar_lea.vmem %s6, %s1090
      // Predicated region
      $region45: #{pnet_forward.5} parent=43 // pred_check
        %p1092 = pneg %p166
      $region46: #{pnet_forward.5} parent=43 // pred_check_branch
        %1094 = sbr.rel (%p1092) target = $region48
      $region47: #{pnet_forward.5} parent=43 // pred_region
        _
      $region48: #{pnet_forward.5} parent=43 // pred_fallthru
        _
    $region44: #{pnet_forward.5} parent=5 // pred_fallthru
      _
    %p1095 = scmp.le.s32.totalorder 2, %s12
    // Predicated region
    $region49: #{pnet_forward.5} parent=5 // pred_check
      %p1096 = pneg %p1095
    $region50: #{pnet_forward.5} parent=5 // pred_check_branch
      %1098 = sbr.rel (%p1096) target = $region52
    $region51: #{pnet_forward.5} parent=5 // pred_region
      %s1099 = ssub.s32 %s12, 2
      // Predicated region
      $region53: #{pnet_forward.5} parent=51 // pred_check
        %p1100 = pneg %p172
      $region54: #{pnet_forward.5} parent=51 // pred_check_branch
        %1102 = sbr.rel (%p1100) target = $region56
      $region55: #{pnet_forward.5} parent=51 // pred_region
        %p1103 = scmp.lt.s32.totalorder %s18, 1
        %s1104 = scalar_select %p1103, %s18, 1
        %s1105 = smul.addr %s1104, 8
        %s1106 = scalar_lea.vmem %s6, %s1105
      $region56: #{pnet_forward.5} parent=51 // pred_fallthru
        _
    $region52: #{pnet_forward.5} parent=5 // pred_fallthru
      _
  $region6: #{pnet_forward.5} parent=0 // loop_footer
    %s16 = sadd.s32 1, %s12
  $region7: #{pnet_forward.5} parent=0 // loop_footer_branch
    %11 = sbr.rel target = $region3
  $region8: #{pnet_forward.5} parent=0 // loop_exit
    _

</llo_original>
